<compile_context>
chip_gen: v7x
topology: tpu7x:2x2x1
jax: 0.10.0
libtpu: 0.0.40
codegen_flags: <defaults>
</compile_context>

<pallas_src>
import functools
import math

import jax
import jax.numpy as jnp
from jax.experimental import pallas as pl
from jax.experimental.pallas import tpu as pltpu


CFG = dict(
    vocab=100, max_pos=16, type_vocab=2,
    hidden=32, heads=2, intermediate=64, layers=2,
    num_labels_task1=3, num_labels_task2=5,
)

LANE = 128  # lane-dense padded width for the fused classifier output


def _gelu(x):
    # TODO(synk): HuggingFace BERT's default 'gelu' is the exact erf form; we use
    # the tanh approximation (difference ~1e-3).
    c = math.sqrt(2.0 / math.pi)
    return 0.5 * x * (1.0 + jnp.tanh(c * (x + 0.044715 * x * x * x)))


# --------------------------------------------------------------------------
# Fused Pallas kernel: embeddings -> LN -> encoder layers -> pooler -> heads
# --------------------------------------------------------------------------

def _fused_bert_kernel(
    ids_ref, mask_ref,
    word_emb_ref, pos_emb_ref, type_emb_ref,
    emb_ln_g_ref, emb_ln_b_ref,
    wqkv_ref, bqkv_ref, wo_ref, bo_ref,
    ln1_g_ref, ln1_b_ref,
    w1_ref, b1_ref, w2_ref, b2_ref,
    ln2_g_ref, ln2_b_ref,
    pool_w_ref, pool_b_ref,
    cls_w_ref, cls_b_ref,
    logits_ref,
    *, num_layers, num_heads, eps):
    B, S = mask_ref.shape
    V, H = word_emb_ref.shape
    nh = num_heads
    dh = H // nh
    M = B * S
    scale = 1.0 / math.sqrt(dh)

    def layer_norm(x, g, b):
        mu = jnp.mean(x, axis=-1, keepdims=True)
        var = jnp.mean(jnp.square(x - mu), axis=-1, keepdims=True)
        return (x - mu) * jax.lax.rsqrt(var + eps) * g + b

    # ---- embeddings: one-hot MXU gather (keeps the whole hot path in-kernel) ----
    # TODO(synk): token_type_ids are assumed to be all zeros (only type_emb[0]).
    ids = ids_ref[...]                                               # (M, 1) int32
    col = jax.lax.broadcasted_iota(jnp.int32, (M, V), 1)
    onehot = (col == ids).astype(jnp.float32)                        # (M, V)
    word = jnp.dot(onehot, word_emb_ref[...],
                   preferred_element_type=jnp.float32)               # (M, H)
    pos = pos_emb_ref[0:S, :] + type_emb_ref[0:1, :]                 # (S, H)
    emb = word.reshape(B, S, H) + pos[None, :, :]
    x = layer_norm(emb.reshape(M, H), emb_ln_g_ref[...], emb_ln_b_ref[...])

    # ---- additive attention bias, built & broadcast ONCE (hoisted) ----
    bias = (1.0 - mask_ref[...].astype(jnp.float32)) * jnp.float32(-1e9)   # (B, S)
    bias_hb = jnp.concatenate([bias[:, None, :]] * nh, axis=0)       # (nh*B, 1, S)

    for l in range(num_layers):                                      # static unroll
        # fused QKV projection: single lane-dense (H -> 3H) MXU pass
        qkv = jnp.dot(x, wqkv_ref[l],
                      preferred_element_type=jnp.float32) + bqkv_ref[l]   # (M, 3H)

        def heads_to_batch(base):
            # lane slice per head -> (nh*B, S, dh), batch index = h*B + b.
            # Only major-dim reshapes + a leading-dim concat (no transposes).
            return jnp.concatenate(
                [qkv[:, base + h * dh: base + (h + 1) * dh].reshape(B, S, dh)
                 for h in range(nh)], axis=0)

        q = heads_to_batch(0)
        k = heads_to_batch(H)
        v = heads_to_batch(2 * H)

        # single batched score / context einsum pair across all heads
        s = jnp.einsum("bqd,bkd->bqk", q, k,
                       preferred_element_type=jnp.float32) * scale   # (nh*B, S, S)
        s = s + bias_hb
        m = jnp.max(s, axis=-1, keepdims=True)
        p = jnp.exp(s - m)
        p = p * pl.reciprocal(jnp.sum(p, axis=-1, keepdims=True), approx=True)
        ctx = jnp.einsum("bqk,bkd->bqd", p, v,
                         preferred_element_type=jnp.float32)          # (nh*B, S, dh)

        # merge heads along lanes -> ONE (M,H)@(H,H) output projection
        ctx_all = jnp.concatenate(
            [ctx[h * B:(h + 1) * B].reshape(M, dh) for h in range(nh)], axis=-1)
        attn_out = jnp.dot(ctx_all, wo_ref[l],
                           preferred_element_type=jnp.float32) + bo_ref[l]

        # residual add fused into LayerNorm
        x = layer_norm(x + attn_out, ln1_g_ref[l], ln1_b_ref[l])

        ffn = jnp.dot(x, w1_ref[l], preferred_element_type=jnp.float32) + b1_ref[l]
        ffn = _gelu(ffn)
        ffn = jnp.dot(ffn, w2_ref[l], preferred_element_type=jnp.float32) + b2_ref[l]
        x = layer_norm(x + ffn, ln2_g_ref[l], ln2_b_ref[l])

    # ---- BERT pooler on the [CLS] token: static slice (no one-hot matmul) ----
    cls = x.reshape(B, S, H)[:, 0:1, :].reshape(B, H)
    pooled = jnp.tanh(
        jnp.dot(cls, pool_w_ref[...], preferred_element_type=jnp.float32)
        + pool_b_ref[...])

    # ---- fused classification heads, lane-dense (H -> 128, zero-padded) ----
    logits_ref[...] = (
        jnp.dot(pooled, cls_w_ref[...], preferred_element_type=jnp.float32)
        + cls_b_ref[...])


# --------------------------------------------------------------------------
# Synthetic BERT parameters
# --------------------------------------------------------------------------

def init_params(key, cfg):
    def nrm(k, shape, scale=0.02):
        return (scale * jax.random.normal(k, shape)).astype(jnp.float32)

    H, I = cfg["hidden"], cfg["intermediate"]
    keys = iter(jax.random.split(key, 256))
    params = dict(
        word_emb=nrm(next(keys), (cfg["vocab"], H)),
        pos_emb=nrm(next(keys), (cfg["max_pos"], H)),
        type_emb=nrm(next(keys), (cfg["type_vocab"], H)),
        emb_ln_g=jnp.ones((H,), jnp.float32),
        emb_ln_b=jnp.zeros((H,), jnp.float32),
        layers=[],
        pool_w=nrm(next(keys), (H, H)),
        pool_b=jnp.zeros((H,), jnp.float32),
        cls1_w=nrm(next(keys), (H, cfg["num_labels_task1"])),
        cls1_b=jnp.zeros((cfg["num_labels_task1"],), jnp.float32),
        cls2_w=nrm(next(keys), (H, cfg["num_labels_task2"])),
        cls2_b=jnp.zeros((cfg["num_labels_task2"],), jnp.float32),
    )
    for _ in range(cfg["layers"]):
        params["layers"].append(dict(
            wq=nrm(next(keys), (H, H)), bq=jnp.zeros((H,), jnp.float32),
            wk=nrm(next(keys), (H, H)), bk=jnp.zeros((H,), jnp.float32),
            wv=nrm(next(keys), (H, H)), bv=jnp.zeros((H,), jnp.float32),
            wo=nrm(next(keys), (H, H)), bo=jnp.zeros((H,), jnp.float32),
            ln1_g=jnp.ones((H,), jnp.float32), ln1_b=jnp.zeros((H,), jnp.float32),
            w1=nrm(next(keys), (H, I)), b1=jnp.zeros((I,), jnp.float32),
            w2=nrm(next(keys), (I, H)), b2=jnp.zeros((H,), jnp.float32),
            ln2_g=jnp.ones((H,), jnp.float32), ln2_b=jnp.zeros((H,), jnp.float32),
        ))
    return params


def pack_params(params, cfg):
    """Stack layer weights, fuse QKV, fuse + lane-pad the classifier heads."""
    def stack(fn):
        return jnp.stack([fn(lp) for lp in params["layers"]])

    n1, n2 = cfg["num_labels_task1"], cfg["num_labels_task2"]
    pad = LANE - (n1 + n2)
    cls_w = jnp.concatenate([params["cls1_w"], params["cls2_w"]], axis=1)
    cls_b = jnp.concatenate([params["cls1_b"], params["cls2_b"]])
    cls_w = jnp.pad(cls_w, ((0, 0), (0, pad)))                       # (H, 128) lane-dense
    cls_b = jnp.pad(cls_b, ((0, pad),))[None, :]                     # (1, 128)

    return dict(
        word_emb=params["word_emb"],
        pos_emb=params["pos_emb"],
        type_emb=params["type_emb"],
        emb_ln_g=params["emb_ln_g"].reshape(1, -1),
        emb_ln_b=params["emb_ln_b"].reshape(1, -1),
        wqkv=stack(lambda lp: jnp.concatenate([lp["wq"], lp["wk"], lp["wv"]], axis=1)),
        bqkv=stack(lambda lp: jnp.concatenate([lp["bq"], lp["bk"], lp["bv"]])[None, :]),
        wo=stack(lambda lp: lp["wo"]),
        bo=stack(lambda lp: lp["bo"][None, :]),
        ln1_g=stack(lambda lp: lp["ln1_g"][None, :]),
        ln1_b=stack(lambda lp: lp["ln1_b"][None, :]),
        w1=stack(lambda lp: lp["w1"]),
        b1=stack(lambda lp: lp["b1"][None, :]),
        w2=stack(lambda lp: lp["w2"]),
        b2=stack(lambda lp: lp["b2"][None, :]),
        ln2_g=stack(lambda lp: lp["ln2_g"][None, :]),
        ln2_b=stack(lambda lp: lp["ln2_b"][None, :]),
        pool_w=params["pool_w"],
        pool_b=params["pool_b"][None, :],
        cls_w=cls_w,
        cls_b=cls_b,
    )


# --------------------------------------------------------------------------
# Forward pass wrapper
# --------------------------------------------------------------------------

def multi_output_bert(packed, input_ids, attention_mask, cfg=CFG):
    B, S = input_ids.shape
    H, I, L = cfg["hidden"], cfg["intermediate"], cfg["layers"]
    nh = cfg["heads"]
    V = cfg["vocab"]
    n1, n2 = cfg["num_labels_task1"], cfg["num_labels_task2"]
    M = B * S
    dh = H // nh

    ids = input_ids.reshape(M, 1).astype(jnp.int32)
    mask = attention_mask.astype(jnp.int32)

    vmem = pl.BlockSpec(memory_space=pltpu.MemorySpace.VMEM)
    operands = (ids, mask,
                packed["word_emb"], packed["pos_emb"], packed["type_emb"],
                packed["emb_ln_g"], packed["emb_ln_b"],
                packed["wqkv"], packed["bqkv"], packed["wo"], packed["bo"],
                packed["ln1_g"], packed["ln1_b"],
                packed["w1"], packed["b1"], packed["w2"], packed["b2"],
                packed["ln2_g"], packed["ln2_b"],
                packed["pool_w"], packed["pool_b"],
                packed["cls_w"], packed["cls_b"])

    # Advisory cost estimate (helps XLA schedule the single custom call sanely).
    flops = (2 * M * V * H
             + L * (2 * M * H * 3 * H          # fused QKV
                    + 2 * (nh * B) * S * S * dh * 2   # scores + context
                    + 2 * M * H * H            # output projection
                    + 2 * M * H * I * 2)       # FFN
             + 2 * B * H * H + 2 * B * H * LANE)
    transcendentals = L * (nh * B * S * S + M * I) + B * H
    bytes_accessed = (sum(int(op.size) * op.dtype.itemsize for op in operands)
                      + B * LANE * 4)
    cost = pl.CostEstimate(flops=int(flops),
                           transcendentals=int(transcendentals),
                           bytes_accessed=int(bytes_accessed))

    logits = pl.pallas_call(
        functools.partial(_fused_bert_kernel,
                          num_layers=L, num_heads=nh, eps=1e-12),
        out_shape=jax.ShapeDtypeStruct((B, LANE), jnp.float32),
        in_specs=[vmem] * len(operands),
        out_specs=vmem,
        cost_estimate=cost,
    )(*operands)

    return logits[:, :n1], logits[:, n1:n1 + n2]


# --------------------------------------------------------------------------
# Main
# --------------------------------------------------------------------------

if __name__ == "__main__":
    key = jax.random.PRNGKey(0)
    k_param, k_ids = jax.random.split(key)

    B, S = 2, 8
    params = init_params(k_param, CFG)
    packed = pack_params(params, CFG)
    input_ids = jax.random.randint(k_ids, (B, S), 0, CFG["vocab"], dtype=jnp.int32)
    attention_mask = jnp.ones((B, S), dtype=jnp.int32)

    fwd = jax.jit(multi_output_bert)
    logits1, logits2 = fwd(packed, input_ids, attention_mask)
    jax.block_until_ready((logits1, logits2))

    assert logits1.shape == (B, CFG["num_labels_task1"])
    assert logits2.shape == (B, CFG["num_labels_task2"])
    assert bool(jnp.all(jnp.isfinite(logits1))) and bool(jnp.all(jnp.isfinite(logits2)))
    print("KERNEL_OK")
</pallas_src>

<mosaic_0001>
module attributes {stable_mosaic.version = 11 : i64} {
  func.func @_fused_bert_kernel(%arg0: memref<16x1xi32, #tpu.memory_space<vmem>>, %arg1: memref<2x8xi32, #tpu.memory_space<vmem>>, %arg2: memref<100x32xf32, #tpu.memory_space<vmem>>, %arg3: memref<16x32xf32, #tpu.memory_space<vmem>>, %arg4: memref<2x32xf32, #tpu.memory_space<vmem>>, %arg5: memref<1x32xf32, #tpu.memory_space<vmem>>, %arg6: memref<1x32xf32, #tpu.memory_space<vmem>>, %arg7: memref<2x32x96xf32, #tpu.memory_space<vmem>>, %arg8: memref<2x1x96xf32, #tpu.memory_space<vmem>>, %arg9: memref<2x32x32xf32, #tpu.memory_space<vmem>>, %arg10: memref<2x1x32xf32, #tpu.memory_space<vmem>>, %arg11: memref<2x1x32xf32, #tpu.memory_space<vmem>>, %arg12: memref<2x1x32xf32, #tpu.memory_space<vmem>>, %arg13: memref<2x32x64xf32, #tpu.memory_space<vmem>>, %arg14: memref<2x1x64xf32, #tpu.memory_space<vmem>>, %arg15: memref<2x64x32xf32, #tpu.memory_space<vmem>>, %arg16: memref<2x1x32xf32, #tpu.memory_space<vmem>>, %arg17: memref<2x1x32xf32, #tpu.memory_space<vmem>>, %arg18: memref<2x1x32xf32, #tpu.memory_space<vmem>>, %arg19: memref<32x32xf32, #tpu.memory_space<vmem>>, %arg20: memref<1x32xf32, #tpu.memory_space<vmem>>, %arg21: memref<32x128xf32, #tpu.memory_space<vmem>>, %arg22: memref<1x128xf32, #tpu.memory_space<vmem>>, %arg23: memref<2x128xf32, #tpu.memory_space<vmem>>) attributes {dimension_semantics = [], scalar_prefetch = 0 : i64, scratch_operands = 0 : i64, tpu.core_type = #tpu.core_type<tc>} {
    %c0 = arith.constant 0 : index
    %c0_0 = arith.constant 0 : index
    %0 = vector.load %arg0[%c0, %c0_0] : memref<16x1xi32, #tpu.memory_space<vmem>>, vector<16x1xi32>
    %1 = tpu.iota {dimensions = array<i32: 1>} : vector<16x100xi32>
    %2 = vector.broadcast %0 : vector<16x1xi32> to vector<16x100xi32>
    %3 = arith.cmpi eq, %1, %2 : vector<16x100xi32>
    %4 = arith.extui %3 : vector<16x100xi1> to vector<16x100xi32>
    %5 = arith.sitofp %4 : vector<16x100xi32> to vector<16x100xf32>
    %c0_1 = arith.constant 0 : index
    %c0_2 = arith.constant 0 : index
    %6 = vector.load %arg2[%c0_1, %c0_2] : memref<100x32xf32, #tpu.memory_space<vmem>>, vector<100x32xf32>
    %cst = arith.constant dense<0.000000e+00> : vector<16x32xf32>
    %7 = tpu.matmul %5, %6, %cst {dimension_numbers = #tpu.dot_dimension_numbers<[1], [0], [0], [1], [0, 0, 1, 1], [], []>} : vector<16x100xf32>, vector<100x32xf32>, vector<16x32xf32> -> vector<16x32xf32>
    %c0_3 = arith.constant 0 : index
    %c0_4 = arith.constant 0 : index
    %8 = vector.load %arg3[%c0_3, %c0_4] : memref<16x32xf32, #tpu.memory_space<vmem>>, vector<8x32xf32>
    %c0_5 = arith.constant 0 : index
    %c0_6 = arith.constant 0 : index
    %9 = vector.load %arg4[%c0_5, %c0_6] : memref<2x32xf32, #tpu.memory_space<vmem>>, vector<1x32xf32>
    %10 = vector.broadcast %9 : vector<1x32xf32> to vector<8x32xf32>
    %11 = arith.addf %8, %10 : vector<8x32xf32>
    %12 = vector.shape_cast %7 : vector<16x32xf32> to vector<2x8x32xf32>
    %13 = vector.shape_cast %11 : vector<8x32xf32> to vector<1x8x32xf32>
    %14 = vector.broadcast %13 : vector<1x8x32xf32> to vector<2x8x32xf32>
    %15 = arith.addf %12, %14 : vector<2x8x32xf32>
    %16 = vector.shape_cast %15 : vector<2x8x32xf32> to vector<16x32xf32>
    %c0_7 = arith.constant 0 : index
    %c0_8 = arith.constant 0 : index
    %17 = vector.load %arg5[%c0_7, %c0_8] : memref<1x32xf32, #tpu.memory_space<vmem>>, vector<1x32xf32>
    %c0_9 = arith.constant 0 : index
    %c0_10 = arith.constant 0 : index
    %18 = vector.load %arg6[%c0_9, %c0_10] : memref<1x32xf32, #tpu.memory_space<vmem>>, vector<1x32xf32>
    %cst_11 = arith.constant dense<0.000000e+00> : vector<16xf32>
    %19 = vector.multi_reduction <add>, %16, %cst_11 [1] : vector<16x32xf32> to vector<16xf32>
    %20 = vector.shape_cast %19 : vector<16xf32> to vector<16x1xf32>
    %cst_12 = arith.constant 3.200000e+01 : f32
    %21 = vector.broadcast %cst_12 : f32 to vector<16x1xf32>
    %22 = arith.divf %20, %21 : vector<16x1xf32>
    %23 = vector.broadcast %22 : vector<16x1xf32> to vector<16x32xf32>
    %24 = arith.subf %16, %23 : vector<16x32xf32>
    %25 = arith.mulf %24, %24 : vector<16x32xf32>
    %cst_13 = arith.constant dense<0.000000e+00> : vector<16xf32>
    %26 = vector.multi_reduction <add>, %25, %cst_13 [1] : vector<16x32xf32> to vector<16xf32>
    %27 = vector.shape_cast %26 : vector<16xf32> to vector<16x1xf32>
    %cst_14 = arith.constant 3.200000e+01 : f32
    %28 = vector.broadcast %cst_14 : f32 to vector<16x1xf32>
    %29 = arith.divf %27, %28 : vector<16x1xf32>
    %30 = vector.broadcast %22 : vector<16x1xf32> to vector<16x32xf32>
    %31 = arith.subf %16, %30 : vector<16x32xf32>
    %cst_15 = arith.constant 9.99999996E-13 : f32
    %32 = vector.broadcast %cst_15 : f32 to vector<16x1xf32>
    %33 = arith.addf %29, %32 : vector<16x1xf32>
    %34 = math.rsqrt %33 : vector<16x1xf32>
    %35 = vector.broadcast %34 : vector<16x1xf32> to vector<16x32xf32>
    %36 = arith.mulf %31, %35 : vector<16x32xf32>
    %37 = vector.broadcast %17 : vector<1x32xf32> to vector<16x32xf32>
    %38 = arith.mulf %36, %37 : vector<16x32xf32>
    %39 = vector.broadcast %18 : vector<1x32xf32> to vector<16x32xf32>
    %40 = arith.addf %38, %39 : vector<16x32xf32>
    %c0_16 = arith.constant 0 : index
    %c0_17 = arith.constant 0 : index
    %41 = vector.load %arg1[%c0_16, %c0_17] : memref<2x8xi32, #tpu.memory_space<vmem>>, vector<2x8xi32>
    %42 = arith.sitofp %41 : vector<2x8xi32> to vector<2x8xf32>
    %cst_18 = arith.constant 1.000000e+00 : f32
    %43 = vector.broadcast %cst_18 : f32 to vector<2x8xf32>
    %44 = arith.subf %43, %42 : vector<2x8xf32>
    %cst_19 = arith.constant -1.000000e+09 : f32
    %45 = vector.broadcast %cst_19 : f32 to vector<2x8xf32>
    %46 = arith.mulf %44, %45 : vector<2x8xf32>
    %47 = vector.shape_cast %46 : vector<2x8xf32> to vector<2x1x8xf32>
    %48 = tpu.concatenate %47, %47 in 0 : vector<2x1x8xf32>, vector<2x1x8xf32> -> vector<4x1x8xf32>
    %c0_20 = arith.constant 0 : index
    %c0_21 = arith.constant 0 : index
    %c0_22 = arith.constant 0 : index
    %49 = vector.load %arg7[%c0_20, %c0_21, %c0_22] : memref<2x32x96xf32, #tpu.memory_space<vmem>>, vector<1x32x96xf32>
    %50 = vector.shape_cast %49 : vector<1x32x96xf32> to vector<32x96xf32>
    %cst_23 = arith.constant dense<0.000000e+00> : vector<16x96xf32>
    %51 = tpu.matmul %40, %50, %cst_23 {dimension_numbers = #tpu.dot_dimension_numbers<[1], [0], [0], [1], [0, 0, 1, 1], [], []>} : vector<16x32xf32>, vector<32x96xf32>, vector<16x96xf32> -> vector<16x96xf32>
    %c0_24 = arith.constant 0 : index
    %c0_25 = arith.constant 0 : index
    %c0_26 = arith.constant 0 : index
    %52 = vector.load %arg8[%c0_24, %c0_25, %c0_26] : memref<2x1x96xf32, #tpu.memory_space<vmem>>, vector<1x1x96xf32>
    %53 = vector.shape_cast %52 : vector<1x1x96xf32> to vector<1x96xf32>
    %54 = vector.broadcast %53 : vector<1x96xf32> to vector<16x96xf32>
    %55 = arith.addf %51, %54 : vector<16x96xf32>
    %56 = vector.extract_strided_slice %55 {offsets = [0, 0], sizes = [16, 16], strides = [1, 1]} : vector<16x96xf32> to vector<16x16xf32>
    %57 = vector.shape_cast %56 : vector<16x16xf32> to vector<2x8x16xf32>
    %58 = vector.extract_strided_slice %55 {offsets = [0, 16], sizes = [16, 16], strides = [1, 1]} : vector<16x96xf32> to vector<16x16xf32>
    %59 = vector.shape_cast %58 : vector<16x16xf32> to vector<2x8x16xf32>
    %60 = tpu.concatenate %57, %59 in 0 : vector<2x8x16xf32>, vector<2x8x16xf32> -> vector<4x8x16xf32>
    %61 = vector.extract_strided_slice %55 {offsets = [0, 32], sizes = [16, 16], strides = [1, 1]} : vector<16x96xf32> to vector<16x16xf32>
    %62 = vector.shape_cast %61 : vector<16x16xf32> to vector<2x8x16xf32>
    %63 = vector.extract_strided_slice %55 {offsets = [0, 48], sizes = [16, 16], strides = [1, 1]} : vector<16x96xf32> to vector<16x16xf32>
    %64 = vector.shape_cast %63 : vector<16x16xf32> to vector<2x8x16xf32>
    %65 = tpu.concatenate %62, %64 in 0 : vector<2x8x16xf32>, vector<2x8x16xf32> -> vector<4x8x16xf32>
    %66 = vector.extract_strided_slice %55 {offsets = [0, 64], sizes = [16, 16], strides = [1, 1]} : vector<16x96xf32> to vector<16x16xf32>
    %67 = vector.shape_cast %66 : vector<16x16xf32> to vector<2x8x16xf32>
    %68 = vector.extract_strided_slice %55 {offsets = [0, 80], sizes = [16, 16], strides = [1, 1]} : vector<16x96xf32> to vector<16x16xf32>
    %69 = vector.shape_cast %68 : vector<16x16xf32> to vector<2x8x16xf32>
    %70 = tpu.concatenate %67, %69 in 0 : vector<2x8x16xf32>, vector<2x8x16xf32> -> vector<4x8x16xf32>
    "tpu.trace_start"() <{level = 10 : i32, message = "bqd,bkd->bqk"}> : () -> ()
    %cst_27 = arith.constant dense<0.000000e+00> : vector<4x8x8xf32>
    %71 = tpu.matmul %60, %65, %cst_27 {dimension_numbers = #tpu.dot_dimension_numbers<[2], [2], [1], [1], [0, 0, 0, 1, 1, 1], [0], [0]>} : vector<4x8x16xf32>, vector<4x8x16xf32>, vector<4x8x8xf32> -> vector<4x8x8xf32>
    "tpu.trace_stop"() : () -> ()
    %cst_28 = arith.constant 2.500000e-01 : f32
    %72 = vector.broadcast %cst_28 : f32 to vector<4x8x8xf32>
    %73 = arith.mulf %71, %72 : vector<4x8x8xf32>
    %74 = vector.broadcast %48 : vector<4x1x8xf32> to vector<4x8x8xf32>
    %75 = arith.addf %73, %74 : vector<4x8x8xf32>
    %cst_29 = arith.constant dense<0xFF800000> : vector<4x8xf32>
    %76 = vector.multi_reduction <maximumf>, %75, %cst_29 [2] : vector<4x8x8xf32> to vector<4x8xf32>
    %77 = vector.shape_cast %76 : vector<4x8xf32> to vector<4x8x1xf32>
    %78 = vector.broadcast %77 : vector<4x8x1xf32> to vector<4x8x8xf32>
    %79 = arith.subf %75, %78 : vector<4x8x8xf32>
    %80 = math.exp %79 : vector<4x8x8xf32>
    %cst_30 = arith.constant dense<0.000000e+00> : vector<4x8xf32>
    %81 = vector.multi_reduction <add>, %80, %cst_30 [2] : vector<4x8x8xf32> to vector<4x8xf32>
    %82 = vector.shape_cast %81 : vector<4x8xf32> to vector<4x8x1xf32>
    %83 = tpu.reciprocal %82 {approx = true} : vector<4x8x1xf32> -> vector<4x8x1xf32>
    %84 = vector.broadcast %83 : vector<4x8x1xf32> to vector<4x8x8xf32>
    %85 = arith.mulf %80, %84 : vector<4x8x8xf32>
    "tpu.trace_start"() <{level = 10 : i32, message = "bqk,bkd->bqd"}> : () -> ()
    %cst_31 = arith.constant dense<0.000000e+00> : vector<4x8x16xf32>
    %86 = tpu.matmul %85, %70, %cst_31 {dimension_numbers = #tpu.dot_dimension_numbers<[2], [1], [1], [2], [0, 0, 0, 1, 1, 2], [0], [0]>} : vector<4x8x8xf32>, vector<4x8x16xf32>, vector<4x8x16xf32> -> vector<4x8x16xf32>
    "tpu.trace_stop"() : () -> ()
    %87 = vector.extract_strided_slice %86 {offsets = [0, 0, 0], sizes = [2, 8, 16], strides = [1, 1, 1]} : vector<4x8x16xf32> to vector<2x8x16xf32>
    %88 = vector.shape_cast %87 : vector<2x8x16xf32> to vector<16x16xf32>
    %89 = vector.extract_strided_slice %86 {offsets = [2, 0, 0], sizes = [2, 8, 16], strides = [1, 1, 1]} : vector<4x8x16xf32> to vector<2x8x16xf32>
    %90 = vector.shape_cast %89 : vector<2x8x16xf32> to vector<16x16xf32>
    %91 = tpu.concatenate %88, %90 in 1 : vector<16x16xf32>, vector<16x16xf32> -> vector<16x32xf32>
    %c0_32 = arith.constant 0 : index
    %c0_33 = arith.constant 0 : index
    %c0_34 = arith.constant 0 : index
    %92 = vector.load %arg9[%c0_32, %c0_33, %c0_34] : memref<2x32x32xf32, #tpu.memory_space<vmem>>, vector<1x32x32xf32>
    %93 = vector.shape_cast %92 : vector<1x32x32xf32> to vector<32x32xf32>
    %cst_35 = arith.constant dense<0.000000e+00> : vector<16x32xf32>
    %94 = tpu.matmul %91, %93, %cst_35 {dimension_numbers = #tpu.dot_dimension_numbers<[1], [0], [0], [1], [0, 0, 1, 1], [], []>} : vector<16x32xf32>, vector<32x32xf32>, vector<16x32xf32> -> vector<16x32xf32>
    %c0_36 = arith.constant 0 : index
    %c0_37 = arith.constant 0 : index
    %c0_38 = arith.constant 0 : index
    %95 = vector.load %arg10[%c0_36, %c0_37, %c0_38] : memref<2x1x32xf32, #tpu.memory_space<vmem>>, vector<1x1x32xf32>
    %96 = vector.shape_cast %95 : vector<1x1x32xf32> to vector<1x32xf32>
    %97 = vector.broadcast %96 : vector<1x32xf32> to vector<16x32xf32>
    %98 = arith.addf %94, %97 : vector<16x32xf32>
    %99 = arith.addf %40, %98 : vector<16x32xf32>
    %c0_39 = arith.constant 0 : index
    %c0_40 = arith.constant 0 : index
    %c0_41 = arith.constant 0 : index
    %100 = vector.load %arg11[%c0_39, %c0_40, %c0_41] : memref<2x1x32xf32, #tpu.memory_space<vmem>>, vector<1x1x32xf32>
    %101 = vector.shape_cast %100 : vector<1x1x32xf32> to vector<1x32xf32>
    %c0_42 = arith.constant 0 : index
    %c0_43 = arith.constant 0 : index
    %c0_44 = arith.constant 0 : index
    %102 = vector.load %arg12[%c0_42, %c0_43, %c0_44] : memref<2x1x32xf32, #tpu.memory_space<vmem>>, vector<1x1x32xf32>
    %103 = vector.shape_cast %102 : vector<1x1x32xf32> to vector<1x32xf32>
    %cst_45 = arith.constant dense<0.000000e+00> : vector<16xf32>
    %104 = vector.multi_reduction <add>, %99, %cst_45 [1] : vector<16x32xf32> to vector<16xf32>
    %105 = vector.shape_cast %104 : vector<16xf32> to vector<16x1xf32>
    %cst_46 = arith.constant 3.200000e+01 : f32
    %106 = vector.broadcast %cst_46 : f32 to vector<16x1xf32>
    %107 = arith.divf %105, %106 : vector<16x1xf32>
    %108 = vector.broadcast %107 : vector<16x1xf32> to vector<16x32xf32>
    %109 = arith.subf %99, %108 : vector<16x32xf32>
    %110 = arith.mulf %109, %109 : vector<16x32xf32>
    %cst_47 = arith.constant dense<0.000000e+00> : vector<16xf32>
    %111 = vector.multi_reduction <add>, %110, %cst_47 [1] : vector<16x32xf32> to vector<16xf32>
    %112 = vector.shape_cast %111 : vector<16xf32> to vector<16x1xf32>
    %cst_48 = arith.constant 3.200000e+01 : f32
    %113 = vector.broadcast %cst_48 : f32 to vector<16x1xf32>
    %114 = arith.divf %112, %113 : vector<16x1xf32>
    %115 = vector.broadcast %107 : vector<16x1xf32> to vector<16x32xf32>
    %116 = arith.subf %99, %115 : vector<16x32xf32>
    %cst_49 = arith.constant 9.99999996E-13 : f32
    %117 = vector.broadcast %cst_49 : f32 to vector<16x1xf32>
    %118 = arith.addf %114, %117 : vector<16x1xf32>
    %119 = math.rsqrt %118 : vector<16x1xf32>
    %120 = vector.broadcast %119 : vector<16x1xf32> to vector<16x32xf32>
    %121 = arith.mulf %116, %120 : vector<16x32xf32>
    %122 = vector.broadcast %101 : vector<1x32xf32> to vector<16x32xf32>
    %123 = arith.mulf %121, %122 : vector<16x32xf32>
    %124 = vector.broadcast %103 : vector<1x32xf32> to vector<16x32xf32>
    %125 = arith.addf %123, %124 : vector<16x32xf32>
    %c0_50 = arith.constant 0 : index
    %c0_51 = arith.constant 0 : index
    %c0_52 = arith.constant 0 : index
    %126 = vector.load %arg13[%c0_50, %c0_51, %c0_52] : memref<2x32x64xf32, #tpu.memory_space<vmem>>, vector<1x32x64xf32>
    %127 = vector.shape_cast %126 : vector<1x32x64xf32> to vector<32x64xf32>
    %cst_53 = arith.constant dense<0.000000e+00> : vector<16x64xf32>
    %128 = tpu.matmul %125, %127, %cst_53 {dimension_numbers = #tpu.dot_dimension_numbers<[1], [0], [0], [1], [0, 0, 1, 1], [], []>} : vector<16x32xf32>, vector<32x64xf32>, vector<16x64xf32> -> vector<16x64xf32>
    %c0_54 = arith.constant 0 : index
    %c0_55 = arith.constant 0 : index
    %c0_56 = arith.constant 0 : index
    %129 = vector.load %arg14[%c0_54, %c0_55, %c0_56] : memref<2x1x64xf32, #tpu.memory_space<vmem>>, vector<1x1x64xf32>
    %130 = vector.shape_cast %129 : vector<1x1x64xf32> to vector<1x64xf32>
    %131 = vector.broadcast %130 : vector<1x64xf32> to vector<16x64xf32>
    %132 = arith.addf %128, %131 : vector<16x64xf32>
    %cst_57 = arith.constant 5.000000e-01 : f32
    %133 = vector.broadcast %cst_57 : f32 to vector<16x64xf32>
    %134 = arith.mulf %133, %132 : vector<16x64xf32>
    %cst_58 = arith.constant 4.471500e-02 : f32
    %135 = vector.broadcast %cst_58 : f32 to vector<16x64xf32>
    %136 = arith.mulf %135, %132 : vector<16x64xf32>
    %137 = arith.mulf %136, %132 : vector<16x64xf32>
    %138 = arith.mulf %137, %132 : vector<16x64xf32>
    %139 = arith.addf %132, %138 : vector<16x64xf32>
    %cst_59 = arith.constant 0.797884583 : f32
    %140 = vector.broadcast %cst_59 : f32 to vector<16x64xf32>
    %141 = arith.mulf %140, %139 : vector<16x64xf32>
    %142 = math.tanh %141 : vector<16x64xf32>
    %cst_60 = arith.constant 1.000000e+00 : f32
    %143 = vector.broadcast %cst_60 : f32 to vector<16x64xf32>
    %144 = arith.addf %143, %142 : vector<16x64xf32>
    %145 = arith.mulf %134, %144 : vector<16x64xf32>
    %c0_61 = arith.constant 0 : index
    %c0_62 = arith.constant 0 : index
    %c0_63 = arith.constant 0 : index
    %146 = vector.load %arg15[%c0_61, %c0_62, %c0_63] : memref<2x64x32xf32, #tpu.memory_space<vmem>>, vector<1x64x32xf32>
    %147 = vector.shape_cast %146 : vector<1x64x32xf32> to vector<64x32xf32>
    %cst_64 = arith.constant dense<0.000000e+00> : vector<16x32xf32>
    %148 = tpu.matmul %145, %147, %cst_64 {dimension_numbers = #tpu.dot_dimension_numbers<[1], [0], [0], [1], [0, 0, 1, 1], [], []>} : vector<16x64xf32>, vector<64x32xf32>, vector<16x32xf32> -> vector<16x32xf32>
    %c0_65 = arith.constant 0 : index
    %c0_66 = arith.constant 0 : index
    %c0_67 = arith.constant 0 : index
    %149 = vector.load %arg16[%c0_65, %c0_66, %c0_67] : memref<2x1x32xf32, #tpu.memory_space<vmem>>, vector<1x1x32xf32>
    %150 = vector.shape_cast %149 : vector<1x1x32xf32> to vector<1x32xf32>
    %151 = vector.broadcast %150 : vector<1x32xf32> to vector<16x32xf32>
    %152 = arith.addf %148, %151 : vector<16x32xf32>
    %153 = arith.addf %125, %152 : vector<16x32xf32>
    %c0_68 = arith.constant 0 : index
    %c0_69 = arith.constant 0 : index
    %c0_70 = arith.constant 0 : index
    %154 = vector.load %arg17[%c0_68, %c0_69, %c0_70] : memref<2x1x32xf32, #tpu.memory_space<vmem>>, vector<1x1x32xf32>
    %155 = vector.shape_cast %154 : vector<1x1x32xf32> to vector<1x32xf32>
    %c0_71 = arith.constant 0 : index
    %c0_72 = arith.constant 0 : index
    %c0_73 = arith.constant 0 : index
    %156 = vector.load %arg18[%c0_71, %c0_72, %c0_73] : memref<2x1x32xf32, #tpu.memory_space<vmem>>, vector<1x1x32xf32>
    %157 = vector.shape_cast %156 : vector<1x1x32xf32> to vector<1x32xf32>
    %cst_74 = arith.constant dense<0.000000e+00> : vector<16xf32>
    %158 = vector.multi_reduction <add>, %153, %cst_74 [1] : vector<16x32xf32> to vector<16xf32>
    %159 = vector.shape_cast %158 : vector<16xf32> to vector<16x1xf32>
    %cst_75 = arith.constant 3.200000e+01 : f32
    %160 = vector.broadcast %cst_75 : f32 to vector<16x1xf32>
    %161 = arith.divf %159, %160 : vector<16x1xf32>
    %162 = vector.broadcast %161 : vector<16x1xf32> to vector<16x32xf32>
    %163 = arith.subf %153, %162 : vector<16x32xf32>
    %164 = arith.mulf %163, %163 : vector<16x32xf32>
    %cst_76 = arith.constant dense<0.000000e+00> : vector<16xf32>
    %165 = vector.multi_reduction <add>, %164, %cst_76 [1] : vector<16x32xf32> to vector<16xf32>
    %166 = vector.shape_cast %165 : vector<16xf32> to vector<16x1xf32>
    %cst_77 = arith.constant 3.200000e+01 : f32
    %167 = vector.broadcast %cst_77 : f32 to vector<16x1xf32>
    %168 = arith.divf %166, %167 : vector<16x1xf32>
    %169 = vector.broadcast %161 : vector<16x1xf32> to vector<16x32xf32>
    %170 = arith.subf %153, %169 : vector<16x32xf32>
    %cst_78 = arith.constant 9.99999996E-13 : f32
    %171 = vector.broadcast %cst_78 : f32 to vector<16x1xf32>
    %172 = arith.addf %168, %171 : vector<16x1xf32>
    %173 = math.rsqrt %172 : vector<16x1xf32>
    %174 = vector.broadcast %173 : vector<16x1xf32> to vector<16x32xf32>
    %175 = arith.mulf %170, %174 : vector<16x32xf32>
    %176 = vector.broadcast %155 : vector<1x32xf32> to vector<16x32xf32>
    %177 = arith.mulf %175, %176 : vector<16x32xf32>
    %178 = vector.broadcast %157 : vector<1x32xf32> to vector<16x32xf32>
    %179 = arith.addf %177, %178 : vector<16x32xf32>
    %c1 = arith.constant 1 : index
    %c0_79 = arith.constant 0 : index
    %c0_80 = arith.constant 0 : index
    %180 = vector.load %arg7[%c1, %c0_79, %c0_80] : memref<2x32x96xf32, #tpu.memory_space<vmem>>, vector<1x32x96xf32>
    %181 = vector.shape_cast %180 : vector<1x32x96xf32> to vector<32x96xf32>
    %cst_81 = arith.constant dense<0.000000e+00> : vector<16x96xf32>
    %182 = tpu.matmul %179, %181, %cst_81 {dimension_numbers = #tpu.dot_dimension_numbers<[1], [0], [0], [1], [0, 0, 1, 1], [], []>} : vector<16x32xf32>, vector<32x96xf32>, vector<16x96xf32> -> vector<16x96xf32>
    %c1_82 = arith.constant 1 : index
    %c0_83 = arith.constant 0 : index
    %c0_84 = arith.constant 0 : index
    %183 = vector.load %arg8[%c1_82, %c0_83, %c0_84] : memref<2x1x96xf32, #tpu.memory_space<vmem>>, vector<1x1x96xf32>
    %184 = vector.shape_cast %183 : vector<1x1x96xf32> to vector<1x96xf32>
    %185 = vector.broadcast %184 : vector<1x96xf32> to vector<16x96xf32>
    %186 = arith.addf %182, %185 : vector<16x96xf32>
    %187 = vector.extract_strided_slice %186 {offsets = [0, 0], sizes = [16, 16], strides = [1, 1]} : vector<16x96xf32> to vector<16x16xf32>
    %188 = vector.shape_cast %187 : vector<16x16xf32> to vector<2x8x16xf32>
    %189 = vector.extract_strided_slice %186 {offsets = [0, 16], sizes = [16, 16], strides = [1, 1]} : vector<16x96xf32> to vector<16x16xf32>
    %190 = vector.shape_cast %189 : vector<16x16xf32> to vector<2x8x16xf32>
    %191 = tpu.concatenate %188, %190 in 0 : vector<2x8x16xf32>, vector<2x8x16xf32> -> vector<4x8x16xf32>
    %192 = vector.extract_strided_slice %186 {offsets = [0, 32], sizes = [16, 16], strides = [1, 1]} : vector<16x96xf32> to vector<16x16xf32>
    %193 = vector.shape_cast %192 : vector<16x16xf32> to vector<2x8x16xf32>
    %194 = vector.extract_strided_slice %186 {offsets = [0, 48], sizes = [16, 16], strides = [1, 1]} : vector<16x96xf32> to vector<16x16xf32>
    %195 = vector.shape_cast %194 : vector<16x16xf32> to vector<2x8x16xf32>
    %196 = tpu.concatenate %193, %195 in 0 : vector<2x8x16xf32>, vector<2x8x16xf32> -> vector<4x8x16xf32>
    %197 = vector.extract_strided_slice %186 {offsets = [0, 64], sizes = [16, 16], strides = [1, 1]} : vector<16x96xf32> to vector<16x16xf32>
    %198 = vector.shape_cast %197 : vector<16x16xf32> to vector<2x8x16xf32>
    %199 = vector.extract_strided_slice %186 {offsets = [0, 80], sizes = [16, 16], strides = [1, 1]} : vector<16x96xf32> to vector<16x16xf32>
    %200 = vector.shape_cast %199 : vector<16x16xf32> to vector<2x8x16xf32>
    %201 = tpu.concatenate %198, %200 in 0 : vector<2x8x16xf32>, vector<2x8x16xf32> -> vector<4x8x16xf32>
    "tpu.trace_start"() <{level = 10 : i32, message = "bqd,bkd->bqk"}> : () -> ()
    %cst_85 = arith.constant dense<0.000000e+00> : vector<4x8x8xf32>
    %202 = tpu.matmul %191, %196, %cst_85 {dimension_numbers = #tpu.dot_dimension_numbers<[2], [2], [1], [1], [0, 0, 0, 1, 1, 1], [0], [0]>} : vector<4x8x16xf32>, vector<4x8x16xf32>, vector<4x8x8xf32> -> vector<4x8x8xf32>
    "tpu.trace_stop"() : () -> ()
    %cst_86 = arith.constant 2.500000e-01 : f32
    %203 = vector.broadcast %cst_86 : f32 to vector<4x8x8xf32>
    %204 = arith.mulf %202, %203 : vector<4x8x8xf32>
    %205 = vector.broadcast %48 : vector<4x1x8xf32> to vector<4x8x8xf32>
    %206 = arith.addf %204, %205 : vector<4x8x8xf32>
    %cst_87 = arith.constant dense<0xFF800000> : vector<4x8xf32>
    %207 = vector.multi_reduction <maximumf>, %206, %cst_87 [2] : vector<4x8x8xf32> to vector<4x8xf32>
    %208 = vector.shape_cast %207 : vector<4x8xf32> to vector<4x8x1xf32>
    %209 = vector.broadcast %208 : vector<4x8x1xf32> to vector<4x8x8xf32>
    %210 = arith.subf %206, %209 : vector<4x8x8xf32>
    %211 = math.exp %210 : vector<4x8x8xf32>
    %cst_88 = arith.constant dense<0.000000e+00> : vector<4x8xf32>
    %212 = vector.multi_reduction <add>, %211, %cst_88 [2] : vector<4x8x8xf32> to vector<4x8xf32>
    %213 = vector.shape_cast %212 : vector<4x8xf32> to vector<4x8x1xf32>
    %214 = tpu.reciprocal %213 {approx = true} : vector<4x8x1xf32> -> vector<4x8x1xf32>
    %215 = vector.broadcast %214 : vector<4x8x1xf32> to vector<4x8x8xf32>
    %216 = arith.mulf %211, %215 : vector<4x8x8xf32>
    "tpu.trace_start"() <{level = 10 : i32, message = "bqk,bkd->bqd"}> : () -> ()
    %cst_89 = arith.constant dense<0.000000e+00> : vector<4x8x16xf32>
    %217 = tpu.matmul %216, %201, %cst_89 {dimension_numbers = #tpu.dot_dimension_numbers<[2], [1], [1], [2], [0, 0, 0, 1, 1, 2], [0], [0]>} : vector<4x8x8xf32>, vector<4x8x16xf32>, vector<4x8x16xf32> -> vector<4x8x16xf32>
    "tpu.trace_stop"() : () -> ()
    %218 = vector.extract_strided_slice %217 {offsets = [0, 0, 0], sizes = [2, 8, 16], strides = [1, 1, 1]} : vector<4x8x16xf32> to vector<2x8x16xf32>
    %219 = vector.shape_cast %218 : vector<2x8x16xf32> to vector<16x16xf32>
    %220 = vector.extract_strided_slice %217 {offsets = [2, 0, 0], sizes = [2, 8, 16], strides = [1, 1, 1]} : vector<4x8x16xf32> to vector<2x8x16xf32>
    %221 = vector.shape_cast %220 : vector<2x8x16xf32> to vector<16x16xf32>
    %222 = tpu.concatenate %219, %221 in 1 : vector<16x16xf32>, vector<16x16xf32> -> vector<16x32xf32>
    %c1_90 = arith.constant 1 : index
    %c0_91 = arith.constant 0 : index
    %c0_92 = arith.constant 0 : index
    %223 = vector.load %arg9[%c1_90, %c0_91, %c0_92] : memref<2x32x32xf32, #tpu.memory_space<vmem>>, vector<1x32x32xf32>
    %224 = vector.shape_cast %223 : vector<1x32x32xf32> to vector<32x32xf32>
    %cst_93 = arith.constant dense<0.000000e+00> : vector<16x32xf32>
    %225 = tpu.matmul %222, %224, %cst_93 {dimension_numbers = #tpu.dot_dimension_numbers<[1], [0], [0], [1], [0, 0, 1, 1], [], []>} : vector<16x32xf32>, vector<32x32xf32>, vector<16x32xf32> -> vector<16x32xf32>
    %c1_94 = arith.constant 1 : index
    %c0_95 = arith.constant 0 : index
    %c0_96 = arith.constant 0 : index
    %226 = vector.load %arg10[%c1_94, %c0_95, %c0_96] : memref<2x1x32xf32, #tpu.memory_space<vmem>>, vector<1x1x32xf32>
    %227 = vector.shape_cast %226 : vector<1x1x32xf32> to vector<1x32xf32>
    %228 = vector.broadcast %227 : vector<1x32xf32> to vector<16x32xf32>
    %229 = arith.addf %225, %228 : vector<16x32xf32>
    %230 = arith.addf %179, %229 : vector<16x32xf32>
    %c1_97 = arith.constant 1 : index
    %c0_98 = arith.constant 0 : index
    %c0_99 = arith.constant 0 : index
    %231 = vector.load %arg11[%c1_97, %c0_98, %c0_99] : memref<2x1x32xf32, #tpu.memory_space<vmem>>, vector<1x1x32xf32>
    %232 = vector.shape_cast %231 : vector<1x1x32xf32> to vector<1x32xf32>
    %c1_100 = arith.constant 1 : index
    %c0_101 = arith.constant 0 : index
    %c0_102 = arith.constant 0 : index
    %233 = vector.load %arg12[%c1_100, %c0_101, %c0_102] : memref<2x1x32xf32, #tpu.memory_space<vmem>>, vector<1x1x32xf32>
    %234 = vector.shape_cast %233 : vector<1x1x32xf32> to vector<1x32xf32>
    %cst_103 = arith.constant dense<0.000000e+00> : vector<16xf32>
    %235 = vector.multi_reduction <add>, %230, %cst_103 [1] : vector<16x32xf32> to vector<16xf32>
    %236 = vector.shape_cast %235 : vector<16xf32> to vector<16x1xf32>
    %cst_104 = arith.constant 3.200000e+01 : f32
    %237 = vector.broadcast %cst_104 : f32 to vector<16x1xf32>
    %238 = arith.divf %236, %237 : vector<16x1xf32>
    %239 = vector.broadcast %238 : vector<16x1xf32> to vector<16x32xf32>
    %240 = arith.subf %230, %239 : vector<16x32xf32>
    %241 = arith.mulf %240, %240 : vector<16x32xf32>
    %cst_105 = arith.constant dense<0.000000e+00> : vector<16xf32>
    %242 = vector.multi_reduction <add>, %241, %cst_105 [1] : vector<16x32xf32> to vector<16xf32>
    %243 = vector.shape_cast %242 : vector<16xf32> to vector<16x1xf32>
    %cst_106 = arith.constant 3.200000e+01 : f32
    %244 = vector.broadcast %cst_106 : f32 to vector<16x1xf32>
    %245 = arith.divf %243, %244 : vector<16x1xf32>
    %246 = vector.broadcast %238 : vector<16x1xf32> to vector<16x32xf32>
    %247 = arith.subf %230, %246 : vector<16x32xf32>
    %cst_107 = arith.constant 9.99999996E-13 : f32
    %248 = vector.broadcast %cst_107 : f32 to vector<16x1xf32>
    %249 = arith.addf %245, %248 : vector<16x1xf32>
    %250 = math.rsqrt %249 : vector<16x1xf32>
    %251 = vector.broadcast %250 : vector<16x1xf32> to vector<16x32xf32>
    %252 = arith.mulf %247, %251 : vector<16x32xf32>
    %253 = vector.broadcast %232 : vector<1x32xf32> to vector<16x32xf32>
    %254 = arith.mulf %252, %253 : vector<16x32xf32>
    %255 = vector.broadcast %234 : vector<1x32xf32> to vector<16x32xf32>
    %256 = arith.addf %254, %255 : vector<16x32xf32>
    %c1_108 = arith.constant 1 : index
    %c0_109 = arith.constant 0 : index
    %c0_110 = arith.constant 0 : index
    %257 = vector.load %arg13[%c1_108, %c0_109, %c0_110] : memref<2x32x64xf32, #tpu.memory_space<vmem>>, vector<1x32x64xf32>
    %258 = vector.shape_cast %257 : vector<1x32x64xf32> to vector<32x64xf32>
    %cst_111 = arith.constant dense<0.000000e+00> : vector<16x64xf32>
    %259 = tpu.matmul %256, %258, %cst_111 {dimension_numbers = #tpu.dot_dimension_numbers<[1], [0], [0], [1], [0, 0, 1, 1], [], []>} : vector<16x32xf32>, vector<32x64xf32>, vector<16x64xf32> -> vector<16x64xf32>
    %c1_112 = arith.constant 1 : index
    %c0_113 = arith.constant 0 : index
    %c0_114 = arith.constant 0 : index
    %260 = vector.load %arg14[%c1_112, %c0_113, %c0_114] : memref<2x1x64xf32, #tpu.memory_space<vmem>>, vector<1x1x64xf32>
    %261 = vector.shape_cast %260 : vector<1x1x64xf32> to vector<1x64xf32>
    %262 = vector.broadcast %261 : vector<1x64xf32> to vector<16x64xf32>
    %263 = arith.addf %259, %262 : vector<16x64xf32>
    %cst_115 = arith.constant 5.000000e-01 : f32
    %264 = vector.broadcast %cst_115 : f32 to vector<16x64xf32>
    %265 = arith.mulf %264, %263 : vector<16x64xf32>
    %cst_116 = arith.constant 4.471500e-02 : f32
    %266 = vector.broadcast %cst_116 : f32 to vector<16x64xf32>
    %267 = arith.mulf %266, %263 : vector<16x64xf32>
    %268 = arith.mulf %267, %263 : vector<16x64xf32>
    %269 = arith.mulf %268, %263 : vector<16x64xf32>
    %270 = arith.addf %263, %269 : vector<16x64xf32>
    %cst_117 = arith.constant 0.797884583 : f32
    %271 = vector.broadcast %cst_117 : f32 to vector<16x64xf32>
    %272 = arith.mulf %271, %270 : vector<16x64xf32>
    %273 = math.tanh %272 : vector<16x64xf32>
    %cst_118 = arith.constant 1.000000e+00 : f32
    %274 = vector.broadcast %cst_118 : f32 to vector<16x64xf32>
    %275 = arith.addf %274, %273 : vector<16x64xf32>
    %276 = arith.mulf %265, %275 : vector<16x64xf32>
    %c1_119 = arith.constant 1 : index
    %c0_120 = arith.constant 0 : index
    %c0_121 = arith.constant 0 : index
    %277 = vector.load %arg15[%c1_119, %c0_120, %c0_121] : memref<2x64x32xf32, #tpu.memory_space<vmem>>, vector<1x64x32xf32>
    %278 = vector.shape_cast %277 : vector<1x64x32xf32> to vector<64x32xf32>
    %cst_122 = arith.constant dense<0.000000e+00> : vector<16x32xf32>
    %279 = tpu.matmul %276, %278, %cst_122 {dimension_numbers = #tpu.dot_dimension_numbers<[1], [0], [0], [1], [0, 0, 1, 1], [], []>} : vector<16x64xf32>, vector<64x32xf32>, vector<16x32xf32> -> vector<16x32xf32>
    %c1_123 = arith.constant 1 : index
    %c0_124 = arith.constant 0 : index
    %c0_125 = arith.constant 0 : index
    %280 = vector.load %arg16[%c1_123, %c0_124, %c0_125] : memref<2x1x32xf32, #tpu.memory_space<vmem>>, vector<1x1x32xf32>
    %281 = vector.shape_cast %280 : vector<1x1x32xf32> to vector<1x32xf32>
    %282 = vector.broadcast %281 : vector<1x32xf32> to vector<16x32xf32>
    %283 = arith.addf %279, %282 : vector<16x32xf32>
    %284 = arith.addf %256, %283 : vector<16x32xf32>
    %c1_126 = arith.constant 1 : index
    %c0_127 = arith.constant 0 : index
    %c0_128 = arith.constant 0 : index
    %285 = vector.load %arg17[%c1_126, %c0_127, %c0_128] : memref<2x1x32xf32, #tpu.memory_space<vmem>>, vector<1x1x32xf32>
    %286 = vector.shape_cast %285 : vector<1x1x32xf32> to vector<1x32xf32>
    %c1_129 = arith.constant 1 : index
    %c0_130 = arith.constant 0 : index
    %c0_131 = arith.constant 0 : index
    %287 = vector.load %arg18[%c1_129, %c0_130, %c0_131] : memref<2x1x32xf32, #tpu.memory_space<vmem>>, vector<1x1x32xf32>
    %288 = vector.shape_cast %287 : vector<1x1x32xf32> to vector<1x32xf32>
    %cst_132 = arith.constant dense<0.000000e+00> : vector<16xf32>
    %289 = vector.multi_reduction <add>, %284, %cst_132 [1] : vector<16x32xf32> to vector<16xf32>
    %290 = vector.shape_cast %289 : vector<16xf32> to vector<16x1xf32>
    %cst_133 = arith.constant 3.200000e+01 : f32
    %291 = vector.broadcast %cst_133 : f32 to vector<16x1xf32>
    %292 = arith.divf %290, %291 : vector<16x1xf32>
    %293 = vector.broadcast %292 : vector<16x1xf32> to vector<16x32xf32>
    %294 = arith.subf %284, %293 : vector<16x32xf32>
    %295 = arith.mulf %294, %294 : vector<16x32xf32>
    %cst_134 = arith.constant dense<0.000000e+00> : vector<16xf32>
    %296 = vector.multi_reduction <add>, %295, %cst_134 [1] : vector<16x32xf32> to vector<16xf32>
    %297 = vector.shape_cast %296 : vector<16xf32> to vector<16x1xf32>
    %cst_135 = arith.constant 3.200000e+01 : f32
    %298 = vector.broadcast %cst_135 : f32 to vector<16x1xf32>
    %299 = arith.divf %297, %298 : vector<16x1xf32>
    %300 = vector.broadcast %292 : vector<16x1xf32> to vector<16x32xf32>
    %301 = arith.subf %284, %300 : vector<16x32xf32>
    %cst_136 = arith.constant 9.99999996E-13 : f32
    %302 = vector.broadcast %cst_136 : f32 to vector<16x1xf32>
    %303 = arith.addf %299, %302 : vector<16x1xf32>
    %304 = math.rsqrt %303 : vector<16x1xf32>
    %305 = vector.broadcast %304 : vector<16x1xf32> to vector<16x32xf32>
    %306 = arith.mulf %301, %305 : vector<16x32xf32>
    %307 = vector.broadcast %286 : vector<1x32xf32> to vector<16x32xf32>
    %308 = arith.mulf %306, %307 : vector<16x32xf32>
    %309 = vector.broadcast %288 : vector<1x32xf32> to vector<16x32xf32>
    %310 = arith.addf %308, %309 : vector<16x32xf32>
    %311 = vector.shape_cast %310 : vector<16x32xf32> to vector<2x8x32xf32>
    %312 = vector.extract_strided_slice %311 {offsets = [0, 0, 0], sizes = [2, 1, 32], strides = [1, 1, 1]} : vector<2x8x32xf32> to vector<2x1x32xf32>
    %313 = vector.shape_cast %312 : vector<2x1x32xf32> to vector<2x32xf32>
    %c0_137 = arith.constant 0 : index
    %c0_138 = arith.constant 0 : index
    %314 = vector.load %arg19[%c0_137, %c0_138] : memref<32x32xf32, #tpu.memory_space<vmem>>, vector<32x32xf32>
    %cst_139 = arith.constant dense<0.000000e+00> : vector<2x32xf32>
    %315 = tpu.matmul %313, %314, %cst_139 {dimension_numbers = #tpu.dot_dimension_numbers<[1], [0], [0], [1], [0, 0, 1, 1], [], []>} : vector<2x32xf32>, vector<32x32xf32>, vector<2x32xf32> -> vector<2x32xf32>
    %c0_140 = arith.constant 0 : index
    %c0_141 = arith.constant 0 : index
    %316 = vector.load %arg20[%c0_140, %c0_141] : memref<1x32xf32, #tpu.memory_space<vmem>>, vector<1x32xf32>
    %317 = vector.broadcast %316 : vector<1x32xf32> to vector<2x32xf32>
    %318 = arith.addf %315, %317 : vector<2x32xf32>
    %319 = math.tanh %318 : vector<2x32xf32>
    %c0_142 = arith.constant 0 : index
    %c0_143 = arith.constant 0 : index
    %320 = vector.load %arg21[%c0_142, %c0_143] : memref<32x128xf32, #tpu.memory_space<vmem>>, vector<32x128xf32>
    %cst_144 = arith.constant dense<0.000000e+00> : vector<2x128xf32>
    %321 = tpu.matmul %319, %320, %cst_144 {dimension_numbers = #tpu.dot_dimension_numbers<[1], [0], [0], [1], [0, 0, 1, 1], [], []>} : vector<2x32xf32>, vector<32x128xf32>, vector<2x128xf32> -> vector<2x128xf32>
    %c0_145 = arith.constant 0 : index
    %c0_146 = arith.constant 0 : index
    %322 = vector.load %arg22[%c0_145, %c0_146] : memref<1x128xf32, #tpu.memory_space<vmem>>, vector<1x128xf32>
    %323 = vector.broadcast %322 : vector<1x128xf32> to vector<2x128xf32>
    %324 = arith.addf %321, %323 : vector<2x128xf32>
    %c0_147 = arith.constant 0 : index
    %c0_148 = arith.constant 0 : index
    %325 = vector.load %arg23[%c0_147, %c0_148] : memref<2x128xf32, #tpu.memory_space<vmem>>, vector<2x128xf32>
    tpu.vector_store %arg23[%c0_147, %c0_148], %324 {strides = array<i32>} : memref<2x128xf32, #tpu.memory_space<vmem>>, vector<2x128xf32>,
    return
  }
}

</mosaic_0001>

<llo_original>
// kernel: multi_output_bert.1
$region0: #{multi_output_bert.1}
  #allocation0 [shape = 'u32[]', space=smem, size = 0x4, offset = 0x4, fixed_abs, tag = 'smem constant byte address 0x4 - core index']
  #allocation1 [shape = 'u32[144,128]{1,0:T(1,128)}', space=vmem, size = 0x12000, scoped, tag = 'internal scratch']
  %s0 = inlined_call_operand.vmem [shape: s32[16,1], index: 0, kind: input, shape index: {}]
  %s1 = inlined_call_operand.vmem [shape: s32[2,8], index: 1, kind: input, shape index: {}]
  %s2 = inlined_call_operand.vmem [shape: f32[100,32], index: 2, kind: input, shape index: {}]
  %s3 = inlined_call_operand.vmem [shape: f32[16,32], index: 3, kind: input, shape index: {}]
  %s4 = inlined_call_operand.vmem [shape: f32[2,32], index: 4, kind: input, shape index: {}]
  %s5 = inlined_call_operand.vmem [shape: f32[1,32], index: 5, kind: input, shape index: {}]
  %s6 = inlined_call_operand.vmem [shape: f32[1,32], index: 6, kind: input, shape index: {}]
  %s7 = inlined_call_operand.vmem [shape: f32[2,32,96], index: 7, kind: input, shape index: {}]
  %s8 = inlined_call_operand.vmem [shape: f32[2,1,96], index: 8, kind: input, shape index: {}]
  %s9 = inlined_call_operand.vmem [shape: f32[2,32,32], index: 9, kind: input, shape index: {}]
  %s10 = inlined_call_operand.vmem [shape: f32[2,1,32], index: 10, kind: input, shape index: {}]
  %s11 = inlined_call_operand.vmem [shape: f32[2,1,32], index: 11, kind: input, shape index: {}]
  %s12 = inlined_call_operand.vmem [shape: f32[2,1,32], index: 12, kind: input, shape index: {}]
  %s13 = inlined_call_operand.vmem [shape: f32[2,32,64], index: 13, kind: input, shape index: {}]
  %s14 = inlined_call_operand.hbm [shape: f32[2,1,64], index: 14, kind: input, shape index: {}]
  %s15 = inlined_call_operand.vmem [shape: f32[2,64,32], index: 15, kind: input, shape index: {}]
  %s16 = inlined_call_operand.hbm [shape: f32[2,1,32], index: 16, kind: input, shape index: {}]
  %s17 = inlined_call_operand.vmem [shape: f32[2,1,32], index: 17, kind: input, shape index: {}]
  %s18 = inlined_call_operand.vmem [shape: f32[2,1,32], index: 18, kind: input, shape index: {}]
  %s19 = inlined_call_operand.vmem [shape: f32[32,32], index: 19, kind: input, shape index: {}]
  %s20 = inlined_call_operand.vmem [shape: f32[1,32], index: 20, kind: input, shape index: {}]
  %s21 = inlined_call_operand.vmem [shape: f32[32,128], index: 21, kind: input, shape index: {}]
  %s22 = inlined_call_operand.vmem [shape: f32[1,128], index: 22, kind: input, shape index: {}]
  %s23 = inlined_call_operand.vmem [shape: f32[2,128], index: 23, kind: output, shape index: {}]
  %s24 = sld [smem:[#allocation0]]
  $region110: #{multi_output_bert.1} parent=0
    _
  %s26 = ssub.s32 1, %s24
  %s27 = scalar_select 0, %s26, %s24
  $region1: #{multi_output_bert.1} parent=0
    #allocation2 [shape = 'u8[1024]{0}', space=vmem, size = 0x400, scoped, tag = 'input window, operand 14, single buffered']
    #allocation3 [shape = 's32[1]{0}', space=sflag, size = 0x4, scoped, tag = 'scoped memory for multi_output_bert.1']
    #allocation4 [shape = 'u8[1024]{0}', space=vmem, size = 0x400, scoped, tag = 'input window, operand 16, single buffered']
    #allocation5 [shape = 's32[1]{0}', space=sflag, size = 0x4, scoped, tag = 'scoped memory for multi_output_bert.1']
    %28 = vsyncpa [#allocation3], 0
    %29 = vsyncpa [#allocation5], 0
    // Predicated region
    $region2: #{multi_output_bert.1} parent=1 // pred_check
      _
    $region3: #{multi_output_bert.1} parent=1 // pred_check_branch
      %31 = sbr.rel (0) target = $region5
    $region4: #{multi_output_bert.1} parent=1 // pred_region
      _
    $region5: #{multi_output_bert.1} parent=1 // pred_fallthru
      _
    // Predicated region
    $region6: #{multi_output_bert.1} parent=1 // pred_check
      _
    $region7: #{multi_output_bert.1} parent=1 // pred_check_branch
      %33 = sbr.rel (0) target = $region9
    $region8: #{multi_output_bert.1} parent=1 // pred_region
      _
    $region9: #{multi_output_bert.1} parent=1 // pred_fallthru
      _
    // Predicated region
    $region10: #{multi_output_bert.1} parent=1 // pred_check
      _
    $region11: #{multi_output_bert.1} parent=1 // pred_check_branch
      %35 = sbr.rel (0) target = $region13
    $region12: #{multi_output_bert.1} parent=1 // pred_region
      _
    $region13: #{multi_output_bert.1} parent=1 // pred_fallthru
      _
    // Predicated region
    $region14: #{multi_output_bert.1} parent=1 // pred_check
      _
    $region15: #{multi_output_bert.1} parent=1 // pred_check_branch
      %37 = sbr.rel (0) target = $region17
    $region16: #{multi_output_bert.1} parent=1 // pred_region
      _
    $region17: #{multi_output_bert.1} parent=1 // pred_fallthru
      _
    // Predicated region
    $region18: #{multi_output_bert.1} parent=1 // pred_check
      _
    $region19: #{multi_output_bert.1} parent=1 // pred_check_branch
      %39 = sbr.rel (0) target = $region21
    $region20: #{multi_output_bert.1} parent=1 // pred_region
      _
    $region21: #{multi_output_bert.1} parent=1 // pred_fallthru
      _
    // Predicated region
    $region22: #{multi_output_bert.1} parent=1 // pred_check
      _
    $region23: #{multi_output_bert.1} parent=1 // pred_check_branch
      %41 = sbr.rel (0) target = $region25
    $region24: #{multi_output_bert.1} parent=1 // pred_region
      _
    $region25: #{multi_output_bert.1} parent=1 // pred_fallthru
      _
    // Predicated region
    $region26: #{multi_output_bert.1} parent=1 // pred_check
      _
    $region27: #{multi_output_bert.1} parent=1 // pred_check_branch
      %43 = sbr.rel (0) target = $region29
    $region28: #{multi_output_bert.1} parent=1 // pred_region
      _
    $region29: #{multi_output_bert.1} parent=1 // pred_fallthru
      _
    // Predicated region
    $region30: #{multi_output_bert.1} parent=1 // pred_check
      _
    $region31: #{multi_output_bert.1} parent=1 // pred_check_branch
      %45 = sbr.rel (0) target = $region33
    $region32: #{multi_output_bert.1} parent=1 // pred_region
      _
    $region33: #{multi_output_bert.1} parent=1 // pred_fallthru
      _
    // Predicated region
    $region34: #{multi_output_bert.1} parent=1 // pred_check
      _
    $region35: #{multi_output_bert.1} parent=1 // pred_check_branch
      %47 = sbr.rel (0) target = $region37
    $region36: #{multi_output_bert.1} parent=1 // pred_region
      _
    $region37: #{multi_output_bert.1} parent=1 // pred_fallthru
      _
    // Predicated region
    $region38: #{multi_output_bert.1} parent=1 // pred_check
      _
    $region39: #{multi_output_bert.1} parent=1 // pred_check_branch
      %49 = sbr.rel (0) target = $region41
    $region40: #{multi_output_bert.1} parent=1 // pred_region
      _
    $region41: #{multi_output_bert.1} parent=1 // pred_fallthru
      _
    // Predicated region
    $region42: #{multi_output_bert.1} parent=1 // pred_check
      _
    $region43: #{multi_output_bert.1} parent=1 // pred_check_branch
      %51 = sbr.rel (0) target = $region45
    $region44: #{multi_output_bert.1} parent=1 // pred_region
      _
    $region45: #{multi_output_bert.1} parent=1 // pred_fallthru
      _
    // Predicated region
    $region46: #{multi_output_bert.1} parent=1 // pred_check
      _
    $region47: #{multi_output_bert.1} parent=1 // pred_check_branch
      %53 = sbr.rel (0) target = $region49
    $region48: #{multi_output_bert.1} parent=1 // pred_region
      _
    $region49: #{multi_output_bert.1} parent=1 // pred_fallthru
      _
    // Predicated region
    $region50: #{multi_output_bert.1} parent=1 // pred_check
      _
    $region51: #{multi_output_bert.1} parent=1 // pred_check_branch
      %55 = sbr.rel (0) target = $region53
    $region52: #{multi_output_bert.1} parent=1 // pred_region
      _
    $region53: #{multi_output_bert.1} parent=1 // pred_fallthru
      _
    // Predicated region
    $region54: #{multi_output_bert.1} parent=1 // pred_check
      _
    $region55: #{multi_output_bert.1} parent=1 // pred_check_branch
      %57 = sbr.rel (0) target = $region57
    $region56: #{multi_output_bert.1} parent=1 // pred_region
      _
    $region57: #{multi_output_bert.1} parent=1 // pred_fallthru
      _
    // Predicated region
    $region58: #{multi_output_bert.1} parent=1 // pred_check
      _
    $region59: #{multi_output_bert.1} parent=1 // pred_check_branch
      %59 = sbr.rel (0) target = $region61
    $region60: #{multi_output_bert.1} parent=1 // pred_region
      %s61 = ssub.s32 32, 32
      %62 = vsyncadd [#allocation3], %s61
      %s63 = sshll.u32 [#allocation2], 4
      %s64 = int_to_ptr.vmem [resolvable:$true] %s63
      %69 = dma.hbm_to_vmem [thread:$0]  %s14, 32, %s64, [#allocation3], 16, 16, 1
    $region61: #{multi_output_bert.1} parent=1 // pred_fallthru
      _
    // Predicated region
    $region62: #{multi_output_bert.1} parent=1 // pred_check
      _
    $region63: #{multi_output_bert.1} parent=1 // pred_check_branch
      %71 = sbr.rel (0) target = $region65
    $region64: #{multi_output_bert.1} parent=1 // pred_region
      _
    $region65: #{multi_output_bert.1} parent=1 // pred_fallthru
      _
    // Predicated region
    $region66: #{multi_output_bert.1} parent=1 // pred_check
      _
    $region67: #{multi_output_bert.1} parent=1 // pred_check_branch
      %73 = sbr.rel (0) target = $region69
    $region68: #{multi_output_bert.1} parent=1 // pred_region
      %s75 = ssub.s32 32, 32
      %76 = vsyncadd [#allocation5], %s75
      %s77 = sshll.u32 [#allocation4], 4
      %s78 = int_to_ptr.vmem [resolvable:$true] %s77
      %83 = dma.hbm_to_vmem [thread:$0]  %s16, 32, %s78, [#allocation5], 16, 16, 1
    $region69: #{multi_output_bert.1} parent=1 // pred_fallthru
      _
    // Predicated region
    $region70: #{multi_output_bert.1} parent=1 // pred_check
      _
    $region71: #{multi_output_bert.1} parent=1 // pred_check_branch
      %85 = sbr.rel (0) target = $region73
    $region72: #{multi_output_bert.1} parent=1 // pred_region
      _
    $region73: #{multi_output_bert.1} parent=1 // pred_fallthru
      _
    // Predicated region
    $region74: #{multi_output_bert.1} parent=1 // pred_check
      _
    $region75: #{multi_output_bert.1} parent=1 // pred_check_branch
      %87 = sbr.rel (0) target = $region77
    $region76: #{multi_output_bert.1} parent=1 // pred_region
      _
    $region77: #{multi_output_bert.1} parent=1 // pred_fallthru
      _
    // Predicated region
    $region78: #{multi_output_bert.1} parent=1 // pred_check
      _
    $region79: #{multi_output_bert.1} parent=1 // pred_check_branch
      %89 = sbr.rel (0) target = $region81
    $region80: #{multi_output_bert.1} parent=1 // pred_region
      _
    $region81: #{multi_output_bert.1} parent=1 // pred_fallthru
      _
    // Predicated region
    $region82: #{multi_output_bert.1} parent=1 // pred_check
      _
    $region83: #{multi_output_bert.1} parent=1 // pred_check_branch
      %91 = sbr.rel (0) target = $region85
    $region84: #{multi_output_bert.1} parent=1 // pred_region
      _
    $region85: #{multi_output_bert.1} parent=1 // pred_fallthru
      _
    // Predicated region
    $region86: #{multi_output_bert.1} parent=1 // pred_check
      _
    $region87: #{multi_output_bert.1} parent=1 // pred_check_branch
      %93 = sbr.rel (0) target = $region89
    $region88: #{multi_output_bert.1} parent=1 // pred_region
      _
    $region89: #{multi_output_bert.1} parent=1 // pred_fallthru
      _
    // Predicated region
    $region90: #{multi_output_bert.1} parent=1 // pred_check
      _
    $region91: #{multi_output_bert.1} parent=1 // pred_check_branch
      %95 = sbr.rel (0) target = $region93
    $region92: #{multi_output_bert.1} parent=1 // pred_region
      _
    $region93: #{multi_output_bert.1} parent=1 // pred_fallthru
      _
    // Predicated region
    $region94: #{multi_output_bert.1} parent=1 // pred_check
      _
    $region95: #{multi_output_bert.1} parent=1 // pred_check_branch
      %97 = sbr.rel (0) target = $region97
    $region96: #{multi_output_bert.1} parent=1 // pred_region
      %98 = dma.done [#allocation3], 32
    $region97: #{multi_output_bert.1} parent=1 // pred_fallthru
      _
    // Predicated region
    $region98: #{multi_output_bert.1} parent=1 // pred_check
      _
    $region99: #{multi_output_bert.1} parent=1 // pred_check_branch
      %100 = sbr.rel (0) target = $region101
    $region100: #{multi_output_bert.1} parent=1 // pred_region
      %101 = dma.done [#allocation5], 32
    $region101: #{multi_output_bert.1} parent=1 // pred_fallthru
      _
    %v102 = vld [vmem:[%s0] sm:$0xff]
    %v103 = vld [vmem:[%s0 + $0x8] sm:$0xff]
    %v104 = vlaneseq
    %v105 = vand.u32 %v104, 127
    %106 = vset.pattern.permute.xlu0 0
    %107 = vperm.xlu0 %106, %v102
    %v108 = vpop.permute.xlu0 %107
    %109 = vset.pattern.permute.xlu0 0
    %110 = vperm.xlu0 %109, %v103
    %v111 = vpop.permute.xlu0 %110
    %vm112 = vcmp.eq.s32.totalorder %v105, %v108
    %vm113 = vcmp.eq.s32.totalorder %v105, %v111
    %v114 = vsel %vm112, 1, 0
    %v115 = vsel %vm113, 1, 0
    %v116 = vcvt.s32.f32 %v114
    %v117 = vcvt.s32.f32 %v115
    %v118 = vld [vmem:[%s2] sm:$0xff]
    %v119 = vld [vmem:[%s2 + $0x8] sm:$0xff]
    %v120 = vld [vmem:[%s2 + $0x10] sm:$0xff]
    %v121 = vld [vmem:[%s2 + $0x18] sm:$0xff]
    %v122 = vld [vmem:[%s2 + $0x20] sm:$0xff]
    %v123 = vld [vmem:[%s2 + $0x28] sm:$0xff]
    %v124 = vld [vmem:[%s2 + $0x30] sm:$0xff]
    %v125 = vld [vmem:[%s2 + $0x38] sm:$0xff]
    %v126 = vld [vmem:[%s2 + $0x40] sm:$0xff]
    %v127 = vld [vmem:[%s2 + $0x48] sm:$0xff]
    %v128 = vld [vmem:[%s2 + $0x50] sm:$0xff]
    %v129 = vld [vmem:[%s2 + $0x58] sm:$0xff]
    %v130 = vld [vmem:[%s2 + $0x60] sm:$0xf]
    %vm131 = vcmask 818176
    %v133 = vsel %vm131, %v116, 0
    %v136 = vsel %vm131, %v117, 0
    %vm138 = vcmask 1043456
    %v140 = vsel %vm138, %v130, 0
    %142 = vmatprep.subr.mxu0 0.0
    %143 = vmatpush1.msra.mxu0 %v118
    %144 = vmatprep.subr.mxu0 0.0
    %145 = vmatpush1.msra.mxu0 %v119
    %146 = vmatprep.subr.mxu0 0.0
    %147 = vmatpush1.msra.mxu0 %v120
    %148 = vmatprep.subr.mxu0 0.0
    %149 = vmatpush1.msra.mxu0 %v121
    %150 = vmatprep.subr.mxu0 0.0
    %151 = vmatpush1.msra.mxu0 %v122
    %152 = vmatprep.subr.mxu0 0.0
    %153 = vmatpush1.msra.mxu0 %v123
    %154 = vmatprep.subr.mxu0 0.0
    %155 = vmatpush1.msra.mxu0 %v124
    %156 = vmatprep.subr.mxu0 0.0
    %157 = vmatpush1.msra.mxu0 %v125
    %158 = vmatprep.subr.mxu0 0.0
    %159 = vmatpush1.msra.mxu0 %v126
    %160 = vmatprep.subr.mxu0 0.0
    %161 = vmatpush1.msra.mxu0 %v127
    %162 = vmatprep.subr.mxu0 0.0
    %163 = vmatpush1.msra.mxu0 %v128
    %164 = vmatprep.subr.mxu0 0.0
    %165 = vmatpush1.msra.mxu0 %v129
    %166 = vmatprep.subr.mxu0 0.0
    %167 = vmatpush1.msra.mxu0 %v140
    %168 = vmatprep.subr.mxu0 0.0
    %169 = vmatpush1.msra.mxu0 0.0
    %170 = vmatprep.subr.mxu0 0.0
    %171 = vmatpush1.msra.mxu0 0.0
    %172 = vmatprep.subr.mxu0 0.0
    %173 = vmatpush1.msra.mxu0 0.0
    %174 = vmatprep.subr.mxu0 0.0
    %175 = vmatpush1.msra.mxu0 0.0
    %176 = vmatprep.subr.mxu0 0.0
    %177 = vmatpush1.msra.mxu0 0.0
    %178 = vmatprep.subr.mxu0 0.0
    %179 = vmatpush1.msra.mxu0 0.0
    %180 = vmatprep.subr.mxu0 0.0
    %181 = vmatpush1.msra.mxu0 0.0
    %182 = vmatprep.subr.mxu0 0.0
    %183 = vmatpush1.msra.mxu0 0.0
    %184 = vmatprep.subr.mxu0 0.0
    %185 = vmatpush1.msra.mxu0 0.0
    %186 = vmatprep.subr.mxu0 0.0
    %187 = vmatpush1.msra.mxu0 0.0
    %188 = vmatprep.subr.mxu0 0.0
    %189 = vmatpush1.msra.mxu0 0.0
    %190 = vmatprep.subr.mxu0 0.0
    %191 = vmatpush1.msra.mxu0 0.0
    %192 = vmatprep.subr.mxu0 0.0
    %193 = vmatpush1.msra.mxu0 0.0
    %194 = vmatprep.subr.mxu0 0.0
    %195 = vmatpush1.msra.mxu0 0.0
    %196 = vmatprep.subr.mxu0 0.0
    %197 = vmatpush1.msra.mxu0 0.0
    %198 = vmatprep.subr.mxu0 0.0
    %199 = vmatpush1.msra.mxu0 0.0
    %200 = vmatprep.subr.mxu0 0.0
    %201 = vmatpush1.msra.mxu0 0.0
    %202 = vmatprep.subr.mxu0 0.0
    %203 = vmatpush1.msra.mxu0 0.0
    %204 = vmatprep.subr.mxu0 0.0
    %205 = vmatpush1.msra.mxu0 0.0
    %206 = vmatprep.mubr.f32.mxu0 0.0
    %207 = vmatmul.mubr.f32.gmra.mrb[0].mxu0 %v133
    %v208 = vpop.f32.mrb[0].mxu0
    %v209 = vadd.f32 0.0, %v208
    %v210 = vpop.f32.mrb[0].mxu0
    %211 = vmatprep.mubr.f32.mxu0 0.0
    %212 = vmatmul.mubr.f32.gmra.mrb[0].mxu0 %v136
    %v213 = vpop.f32.mrb[0].mxu0
    %v214 = vadd.f32 0.0, %v213
    %v215 = vpop.f32.mrb[0].mxu0
    %216 = vdwg.mxu0
    %v217 = vld [vmem:[%s3] sm:$0xff]
    %v218 = vld [vmem:[%s4] sm:$0x1]
    %v219 = vlaneseq
    %v220 = vshrl.u32 %v219, 7
    %v221 = vsub.s32 0, %v220
    %v222 = vrot.slane %v218, %v221
    %v223 = vadd.f32 %v217, %v222
    %v224 = vadd.f32 %v209, %v223
    %v225 = vadd.f32 %v214, %v223
    %v226 = vld [vmem:[%s5] sm:$0x1]
    %v227 = vld [vmem:[%s6] sm:$0x1]
    %vm228 = vcmask 261120
    %v229 = vsel %vm228, %v224, 0.0
    %230 = vadd.xlane.f32.xlu0 %v229
    %v231 = vpop.xlane.xlu0 %230
    %v232 = vsel %vm228, %v225, 0.0
    %233 = vadd.xlane.f32.xlu0 %v232
    %v234 = vpop.xlane.xlu0 %233
    %v235 = vrcp.pop 32.0
    %v236 = vmul.f32 %v231, %v235
    %v237 = vmul.f32 %v234, %v235
    %v238 = vsub.f32 %v224, %v236
    %v239 = vsub.f32 %v225, %v237
    %v240 = vmul.f32 %v238, %v238
    %v241 = vmul.f32 %v239, %v239
    %v242 = vsel %vm228, %v240, 0.0
    %243 = vadd.xlane.f32.xlu0 %v242
    %v244 = vpop.xlane.xlu0 %243
    %v245 = vsel %vm228, %v241, 0.0
    %246 = vadd.xlane.f32.xlu0 %v245
    %v247 = vpop.xlane.xlu0 %246
    %v248 = vmul.f32 %v244, %v235
    %v249 = vmul.f32 %v247, %v235
    %v250 = vadd.f32 %v248, 1e-12
    %v251 = vadd.f32 %v249, 1e-12
    %v252 = vrsqrt.pop %v250
    %v253 = vrsqrt.pop %v251
    %v254 = vmul.f32 %v238, %v252
    %v255 = vmul.f32 %v239, %v253
    %v257 = vlaneseq
    %v258 = vshrl.u32 %v257, 7
    %v259 = vsub.s32 0, %v258
    %v260 = vrot.slane %v226, %v259
    %v262 = vmul.f32 %v254, %v260
    %v263 = vmul.f32 %v255, %v260
    %v265 = vlaneseq
    %v266 = vshrl.u32 %v265, 7
    %v267 = vsub.s32 0, %v266
    %v268 = vrot.slane %v227, %v267
    %v270 = vadd.f32 %v262, %v268
    %v271 = vadd.f32 %v263, %v268
    %v272 = vld [vmem:[%s1] sm:$0x3]
    %v273 = vcvt.s32.f32 %v272
    %v274 = vsub.f32 1.0, %v273
    %v275 = vmul.f32 %v274, -1e+09
    %v278 = vunpack.c.l.s4 1966171168
    %v279 = vunpack.c.0.s8 %v278
    %v280 = vlaneseq
    %v281 = vshrl.u32 %v280, 7
    %v282 = vsub.s32 %v279, %v281
    %v283 = vrot.slane %v275, %v282
    %v284 = vcombine.high %v283, %v283
    %v286 = vunpack.c.l.s4 1966171168
    %v287 = vunpack.c.0.s8 %v286
    %v288 = vlaneseq
    %v289 = vshrl.u32 %v288, 7
    %v290 = vsub.s32 %v287, %v289
    %v291 = vrot.slane %v283, %v290
    %v293 = vunpack.c.l.s4 1966171168
    %v294 = vunpack.c.0.s8 %v293
    %v295 = vlaneseq
    %v296 = vshrl.u32 %v295, 7
    %v297 = vsub.s32 %v294, %v296
    %v298 = vrot.slane %v284, %v297
    %v299 = vld [vmem:[%s7] sm:$0xff]
    %v300 = vld [vmem:[%s7 + $0x8] sm:$0xff]
    %v301 = vld [vmem:[%s7 + $0x10] sm:$0xff]
    %v302 = vld [vmem:[%s7 + $0x18] sm:$0xff]
    %v303 = vld [vmem:[%s8] sm:$0x1]
    %v305 = vlaneseq
    %v306 = vshrl.u32 %v305, 7
    %v307 = vsub.s32 0, %v306
    %v308 = vrot.slane %v303, %v307
    %v311 = vsel %vm228, %v270, 0
    %v314 = vsel %vm228, %v271, 0
    %316 = vmatprep.subr.mxu0 0.0
    %317 = vmatpush1.msra.mxu0 %v299
    %318 = vmatprep.subr.mxu0 0.0
    %319 = vmatpush1.msra.mxu0 %v300
    %320 = vmatprep.subr.mxu0 0.0
    %321 = vmatpush1.msra.mxu0 %v301
    %322 = vmatprep.subr.mxu0 0.0
    %323 = vmatpush1.msra.mxu0 %v302
    %324 = vmatprep.subr.mxu0 0.0
    %325 = vmatpush1.msra.mxu0 0.0
    %326 = vmatprep.subr.mxu0 0.0
    %327 = vmatpush1.msra.mxu0 0.0
    %328 = vmatprep.subr.mxu0 0.0
    %329 = vmatpush1.msra.mxu0 0.0
    %330 = vmatprep.subr.mxu0 0.0
    %331 = vmatpush1.msra.mxu0 0.0
    %332 = vmatprep.subr.mxu0 0.0
    %333 = vmatpush1.msra.mxu0 0.0
    %334 = vmatprep.subr.mxu0 0.0
    %335 = vmatpush1.msra.mxu0 0.0
    %336 = vmatprep.subr.mxu0 0.0
    %337 = vmatpush1.msra.mxu0 0.0
    %338 = vmatprep.subr.mxu0 0.0
    %339 = vmatpush1.msra.mxu0 0.0
    %340 = vmatprep.subr.mxu0 0.0
    %341 = vmatpush1.msra.mxu0 0.0
    %342 = vmatprep.subr.mxu0 0.0
    %343 = vmatpush1.msra.mxu0 0.0
    %344 = vmatprep.subr.mxu0 0.0
    %345 = vmatpush1.msra.mxu0 0.0
    %346 = vmatprep.subr.mxu0 0.0
    %347 = vmatpush1.msra.mxu0 0.0
    %348 = vmatprep.subr.mxu0 0.0
    %349 = vmatpush1.msra.mxu0 0.0
    %350 = vmatprep.subr.mxu0 0.0
    %351 = vmatpush1.msra.mxu0 0.0
    %352 = vmatprep.subr.mxu0 0.0
    %353 = vmatpush1.msra.mxu0 0.0
    %354 = vmatprep.subr.mxu0 0.0
    %355 = vmatpush1.msra.mxu0 0.0
    %356 = vmatprep.subr.mxu0 0.0
    %357 = vmatpush1.msra.mxu0 0.0
    %358 = vmatprep.subr.mxu0 0.0
    %359 = vmatpush1.msra.mxu0 0.0
    %360 = vmatprep.subr.mxu0 0.0
    %361 = vmatpush1.msra.mxu0 0.0
    %362 = vmatprep.subr.mxu0 0.0
    %363 = vmatpush1.msra.mxu0 0.0
    %364 = vmatprep.subr.mxu0 0.0
    %365 = vmatpush1.msra.mxu0 0.0
    %366 = vmatprep.subr.mxu0 0.0
    %367 = vmatpush1.msra.mxu0 0.0
    %368 = vmatprep.subr.mxu0 0.0
    %369 = vmatpush1.msra.mxu0 0.0
    %370 = vmatprep.subr.mxu0 0.0
    %371 = vmatpush1.msra.mxu0 0.0
    %372 = vmatprep.subr.mxu0 0.0
    %373 = vmatpush1.msra.mxu0 0.0
    %374 = vmatprep.subr.mxu0 0.0
    %375 = vmatpush1.msra.mxu0 0.0
    %376 = vmatprep.subr.mxu0 0.0
    %377 = vmatpush1.msra.mxu0 0.0
    %378 = vmatprep.subr.mxu0 0.0
    %379 = vmatpush1.msra.mxu0 0.0
    %380 = vmatprep.mubr.f32.mxu0 0.0
    %381 = vmatmul.mubr.f32.gmra.mrb[0].mxu0 %v311
    %v382 = vpop.f32.mrb[0].mxu0
    %v383 = vadd.f32 %v308, %v382
    %v384 = vpop.f32.mrb[0].mxu0
    %385 = vmatprep.mubr.f32.mxu0 0.0
    %386 = vmatmul.mubr.f32.gmra.mrb[0].mxu0 %v314
    %v387 = vpop.f32.mrb[0].mxu0
    %v388 = vadd.f32 %v308, %v387
    %v389 = vpop.f32.mrb[0].mxu0
    %390 = vdwg.mxu0
    %393 = vrot.lane.b32.xlu0 %v383, 112
    %v394 = vpop.permute.xlu0 %393
    %395 = vrot.lane.b32.xlu0 %v388, 112
    %v396 = vpop.permute.xlu0 %395
    %397 = vrot.lane.b32.xlu0 %v383, 96
    %v398 = vpop.permute.xlu0 %397
    %vm399 = vcmask 130048
    %v400 = vsel %vm399, %v383, 0
    %v402 = vsel %vm399, %v398, 0
    %404 = vmatprep.subr.mxu0 0.0
    %405 = vmatpush1.xpose.msra.mxu0 %v402
    %406 = vmatprep.subr.mxu0 0.0
    %407 = vmatpush1.xpose.msra.mxu0 0.0
    %408 = vmatprep.subr.mxu0 0.0
    %409 = vmatpush1.xpose.msra.mxu0 0.0
    %410 = vmatprep.subr.mxu0 0.0
    %411 = vmatpush1.xpose.msra.mxu0 0.0
    %412 = vmatprep.subr.mxu0 0.0
    %413 = vmatpush1.xpose.msra.mxu0 0.0
    %414 = vmatprep.subr.mxu0 0.0
    %415 = vmatpush1.xpose.msra.mxu0 0.0
    %416 = vmatprep.subr.mxu0 0.0
    %417 = vmatpush1.xpose.msra.mxu0 0.0
    %418 = vmatprep.subr.mxu0 0.0
    %419 = vmatpush1.xpose.msra.mxu0 0.0
    %420 = vmatprep.subr.mxu0 0.0
    %421 = vmatpush1.xpose.msra.mxu0 0.0
    %422 = vmatprep.subr.mxu0 0.0
    %423 = vmatpush1.xpose.msra.mxu0 0.0
    %424 = vmatprep.subr.mxu0 0.0
    %425 = vmatpush1.xpose.msra.mxu0 0.0
    %426 = vmatprep.subr.mxu0 0.0
    %427 = vmatpush1.xpose.msra.mxu0 0.0
    %428 = vmatprep.subr.mxu0 0.0
    %429 = vmatpush1.xpose.msra.mxu0 0.0
    %430 = vmatprep.subr.mxu0 0.0
    %431 = vmatpush1.xpose.msra.mxu0 0.0
    %432 = vmatprep.subr.mxu0 0.0
    %433 = vmatpush1.xpose.msra.mxu0 0.0
    %434 = vmatprep.subr.mxu0 0.0
    %435 = vmatpush1.xpose.msra.mxu0 0.0
    %436 = vmatprep.subr.mxu0 0.0
    %437 = vmatpush1.xpose.msra.mxu0 0.0
    %438 = vmatprep.subr.mxu0 0.0
    %439 = vmatpush1.xpose.msra.mxu0 0.0
    %440 = vmatprep.subr.mxu0 0.0
    %441 = vmatpush1.xpose.msra.mxu0 0.0
    %442 = vmatprep.subr.mxu0 0.0
    %443 = vmatpush1.xpose.msra.mxu0 0.0
    %444 = vmatprep.subr.mxu0 0.0
    %445 = vmatpush1.xpose.msra.mxu0 0.0
    %446 = vmatprep.subr.mxu0 0.0
    %447 = vmatpush1.xpose.msra.mxu0 0.0
    %448 = vmatprep.subr.mxu0 0.0
    %449 = vmatpush1.xpose.msra.mxu0 0.0
    %450 = vmatprep.subr.mxu0 0.0
    %451 = vmatpush1.xpose.msra.mxu0 0.0
    %452 = vmatprep.subr.mxu0 0.0
    %453 = vmatpush1.xpose.msra.mxu0 0.0
    %454 = vmatprep.subr.mxu0 0.0
    %455 = vmatpush1.xpose.msra.mxu0 0.0
    %456 = vmatprep.subr.mxu0 0.0
    %457 = vmatpush1.xpose.msra.mxu0 0.0
    %458 = vmatprep.subr.mxu0 0.0
    %459 = vmatpush1.xpose.msra.mxu0 0.0
    %460 = vmatprep.subr.mxu0 0.0
    %461 = vmatpush1.xpose.msra.mxu0 0.0
    %462 = vmatprep.subr.mxu0 0.0
    %463 = vmatpush1.xpose.msra.mxu0 0.0
    %464 = vmatprep.subr.mxu0 0.0
    %465 = vmatpush1.xpose.msra.mxu0 0.0
    %466 = vmatprep.subr.mxu0 0.0
    %467 = vmatpush1.xpose.msra.mxu0 0.0
    %468 = vmatprep.mubr.f32.mxu0 0.0
    %469 = vmatmul.mubr.f32.gmra.mrb[0].mxu0 %v400
    %v470 = vpop.f32.mrb[0].mxu0
    %v471 = vadd.f32 0.0, %v470
    %v472 = vpop.f32.mrb[0].mxu0
    %473 = vdwg.mxu0
    %474 = vrot.lane.b32.xlu0 %v388, 96
    %v475 = vpop.permute.xlu0 %474
    %v476 = vsel %vm399, %v388, 0
    %v478 = vsel %vm399, %v475, 0
    %480 = vmatprep.subr.mxu0 0.0
    %481 = vmatpush1.xpose.msra.mxu0 %v478
    %482 = vmatprep.subr.mxu0 0.0
    %483 = vmatpush1.xpose.msra.mxu0 0.0
    %484 = vmatprep.subr.mxu0 0.0
    %485 = vmatpush1.xpose.msra.mxu0 0.0
    %486 = vmatprep.subr.mxu0 0.0
    %487 = vmatpush1.xpose.msra.mxu0 0.0
    %488 = vmatprep.subr.mxu0 0.0
    %489 = vmatpush1.xpose.msra.mxu0 0.0
    %490 = vmatprep.subr.mxu0 0.0
    %491 = vmatpush1.xpose.msra.mxu0 0.0
    %492 = vmatprep.subr.mxu0 0.0
    %493 = vmatpush1.xpose.msra.mxu0 0.0
    %494 = vmatprep.subr.mxu0 0.0
    %495 = vmatpush1.xpose.msra.mxu0 0.0
    %496 = vmatprep.subr.mxu0 0.0
    %497 = vmatpush1.xpose.msra.mxu0 0.0
    %498 = vmatprep.subr.mxu0 0.0
    %499 = vmatpush1.xpose.msra.mxu0 0.0
    %500 = vmatprep.subr.mxu0 0.0
    %501 = vmatpush1.xpose.msra.mxu0 0.0
    %502 = vmatprep.subr.mxu0 0.0
    %503 = vmatpush1.xpose.msra.mxu0 0.0
    %504 = vmatprep.subr.mxu0 0.0
    %505 = vmatpush1.xpose.msra.mxu0 0.0
    %506 = vmatprep.subr.mxu0 0.0
    %507 = vmatpush1.xpose.msra.mxu0 0.0
    %508 = vmatprep.subr.mxu0 0.0
    %509 = vmatpush1.xpose.msra.mxu0 0.0
    %510 = vmatprep.subr.mxu0 0.0
    %511 = vmatpush1.xpose.msra.mxu0 0.0
    %512 = vmatprep.subr.mxu0 0.0
    %513 = vmatpush1.xpose.msra.mxu0 0.0
    %514 = vmatprep.subr.mxu0 0.0
    %515 = vmatpush1.xpose.msra.mxu0 0.0
    %516 = vmatprep.subr.mxu0 0.0
    %517 = vmatpush1.xpose.msra.mxu0 0.0
    %518 = vmatprep.subr.mxu0 0.0
    %519 = vmatpush1.xpose.msra.mxu0 0.0
    %520 = vmatprep.subr.mxu0 0.0
    %521 = vmatpush1.xpose.msra.mxu0 0.0
    %522 = vmatprep.subr.mxu0 0.0
    %523 = vmatpush1.xpose.msra.mxu0 0.0
    %524 = vmatprep.subr.mxu0 0.0
    %525 = vmatpush1.xpose.msra.mxu0 0.0
    %526 = vmatprep.subr.mxu0 0.0
    %527 = vmatpush1.xpose.msra.mxu0 0.0
    %528 = vmatprep.subr.mxu0 0.0
    %529 = vmatpush1.xpose.msra.mxu0 0.0
    %530 = vmatprep.subr.mxu0 0.0
    %531 = vmatpush1.xpose.msra.mxu0 0.0
    %532 = vmatprep.subr.mxu0 0.0
    %533 = vmatpush1.xpose.msra.mxu0 0.0
    %534 = vmatprep.subr.mxu0 0.0
    %535 = vmatpush1.xpose.msra.mxu0 0.0
    %536 = vmatprep.subr.mxu0 0.0
    %537 = vmatpush1.xpose.msra.mxu0 0.0
    %538 = vmatprep.subr.mxu0 0.0
    %539 = vmatpush1.xpose.msra.mxu0 0.0
    %540 = vmatprep.subr.mxu0 0.0
    %541 = vmatpush1.xpose.msra.mxu0 0.0
    %542 = vmatprep.subr.mxu0 0.0
    %543 = vmatpush1.xpose.msra.mxu0 0.0
    %544 = vmatprep.mubr.f32.mxu0 0.0
    %545 = vmatmul.mubr.f32.gmra.mrb[0].mxu0 %v476
    %v546 = vpop.f32.mrb[0].mxu0
    %v547 = vadd.f32 0.0, %v546
    %v548 = vpop.f32.mrb[0].mxu0
    %549 = vdwg.mxu0
    %550 = vrot.lane.b32.xlu0 %v394, 96
    %v551 = vpop.permute.xlu0 %550
    %v552 = vsel %vm399, %v394, 0
    %v554 = vsel %vm399, %v551, 0
    %556 = vmatprep.subr.mxu0 0.0
    %557 = vmatpush1.xpose.msra.mxu0 %v554
    %558 = vmatprep.subr.mxu0 0.0
    %559 = vmatpush1.xpose.msra.mxu0 0.0
    %560 = vmatprep.subr.mxu0 0.0
    %561 = vmatpush1.xpose.msra.mxu0 0.0
    %562 = vmatprep.subr.mxu0 0.0
    %563 = vmatpush1.xpose.msra.mxu0 0.0
    %564 = vmatprep.subr.mxu0 0.0
    %565 = vmatpush1.xpose.msra.mxu0 0.0
    %566 = vmatprep.subr.mxu0 0.0
    %567 = vmatpush1.xpose.msra.mxu0 0.0
    %568 = vmatprep.subr.mxu0 0.0
    %569 = vmatpush1.xpose.msra.mxu0 0.0
    %570 = vmatprep.subr.mxu0 0.0
    %571 = vmatpush1.xpose.msra.mxu0 0.0
    %572 = vmatprep.subr.mxu0 0.0
    %573 = vmatpush1.xpose.msra.mxu0 0.0
    %574 = vmatprep.subr.mxu0 0.0
    %575 = vmatpush1.xpose.msra.mxu0 0.0
    %576 = vmatprep.subr.mxu0 0.0
    %577 = vmatpush1.xpose.msra.mxu0 0.0
    %578 = vmatprep.subr.mxu0 0.0
    %579 = vmatpush1.xpose.msra.mxu0 0.0
    %580 = vmatprep.subr.mxu0 0.0
    %581 = vmatpush1.xpose.msra.mxu0 0.0
    %582 = vmatprep.subr.mxu0 0.0
    %583 = vmatpush1.xpose.msra.mxu0 0.0
    %584 = vmatprep.subr.mxu0 0.0
    %585 = vmatpush1.xpose.msra.mxu0 0.0
    %586 = vmatprep.subr.mxu0 0.0
    %587 = vmatpush1.xpose.msra.mxu0 0.0
    %588 = vmatprep.subr.mxu0 0.0
    %589 = vmatpush1.xpose.msra.mxu0 0.0
    %590 = vmatprep.subr.mxu0 0.0
    %591 = vmatpush1.xpose.msra.mxu0 0.0
    %592 = vmatprep.subr.mxu0 0.0
    %593 = vmatpush1.xpose.msra.mxu0 0.0
    %594 = vmatprep.subr.mxu0 0.0
    %595 = vmatpush1.xpose.msra.mxu0 0.0
    %596 = vmatprep.subr.mxu0 0.0
    %597 = vmatpush1.xpose.msra.mxu0 0.0
    %598 = vmatprep.subr.mxu0 0.0
    %599 = vmatpush1.xpose.msra.mxu0 0.0
    %600 = vmatprep.subr.mxu0 0.0
    %601 = vmatpush1.xpose.msra.mxu0 0.0
    %602 = vmatprep.subr.mxu0 0.0
    %603 = vmatpush1.xpose.msra.mxu0 0.0
    %604 = vmatprep.subr.mxu0 0.0
    %605 = vmatpush1.xpose.msra.mxu0 0.0
    %606 = vmatprep.subr.mxu0 0.0
    %607 = vmatpush1.xpose.msra.mxu0 0.0
    %608 = vmatprep.subr.mxu0 0.0
    %609 = vmatpush1.xpose.msra.mxu0 0.0
    %610 = vmatprep.subr.mxu0 0.0
    %611 = vmatpush1.xpose.msra.mxu0 0.0
    %612 = vmatprep.subr.mxu0 0.0
    %613 = vmatpush1.xpose.msra.mxu0 0.0
    %614 = vmatprep.subr.mxu0 0.0
    %615 = vmatpush1.xpose.msra.mxu0 0.0
    %616 = vmatprep.subr.mxu0 0.0
    %617 = vmatpush1.xpose.msra.mxu0 0.0
    %618 = vmatprep.subr.mxu0 0.0
    %619 = vmatpush1.xpose.msra.mxu0 0.0
    %620 = vmatprep.mubr.f32.mxu0 0.0
    %621 = vmatmul.mubr.f32.gmra.mrb[0].mxu0 %v552
    %v622 = vpop.f32.mrb[0].mxu0
    %v623 = vadd.f32 0.0, %v622
    %v624 = vpop.f32.mrb[0].mxu0
    %625 = vdwg.mxu0
    %626 = vrot.lane.b32.xlu0 %v396, 96
    %v627 = vpop.permute.xlu0 %626
    %v628 = vsel %vm399, %v396, 0
    %v630 = vsel %vm399, %v627, 0
    %632 = vmatprep.subr.mxu0 0.0
    %633 = vmatpush1.xpose.msra.mxu0 %v630
    %634 = vmatprep.subr.mxu0 0.0
    %635 = vmatpush1.xpose.msra.mxu0 0.0
    %636 = vmatprep.subr.mxu0 0.0
    %637 = vmatpush1.xpose.msra.mxu0 0.0
    %638 = vmatprep.subr.mxu0 0.0
    %639 = vmatpush1.xpose.msra.mxu0 0.0
    %640 = vmatprep.subr.mxu0 0.0
    %641 = vmatpush1.xpose.msra.mxu0 0.0
    %642 = vmatprep.subr.mxu0 0.0
    %643 = vmatpush1.xpose.msra.mxu0 0.0
    %644 = vmatprep.subr.mxu0 0.0
    %645 = vmatpush1.xpose.msra.mxu0 0.0
    %646 = vmatprep.subr.mxu0 0.0
    %647 = vmatpush1.xpose.msra.mxu0 0.0
    %648 = vmatprep.subr.mxu0 0.0
    %649 = vmatpush1.xpose.msra.mxu0 0.0
    %650 = vmatprep.subr.mxu0 0.0
    %651 = vmatpush1.xpose.msra.mxu0 0.0
    %652 = vmatprep.subr.mxu0 0.0
    %653 = vmatpush1.xpose.msra.mxu0 0.0
    %654 = vmatprep.subr.mxu0 0.0
    %655 = vmatpush1.xpose.msra.mxu0 0.0
    %656 = vmatprep.subr.mxu0 0.0
    %657 = vmatpush1.xpose.msra.mxu0 0.0
    %658 = vmatprep.subr.mxu0 0.0
    %659 = vmatpush1.xpose.msra.mxu0 0.0
    %660 = vmatprep.subr.mxu0 0.0
    %661 = vmatpush1.xpose.msra.mxu0 0.0
    %662 = vmatprep.subr.mxu0 0.0
    %663 = vmatpush1.xpose.msra.mxu0 0.0
    %664 = vmatprep.subr.mxu0 0.0
    %665 = vmatpush1.xpose.msra.mxu0 0.0
    %666 = vmatprep.subr.mxu0 0.0
    %667 = vmatpush1.xpose.msra.mxu0 0.0
    %668 = vmatprep.subr.mxu0 0.0
    %669 = vmatpush1.xpose.msra.mxu0 0.0
    %670 = vmatprep.subr.mxu0 0.0
    %671 = vmatpush1.xpose.msra.mxu0 0.0
    %672 = vmatprep.subr.mxu0 0.0
    %673 = vmatpush1.xpose.msra.mxu0 0.0
    %674 = vmatprep.subr.mxu0 0.0
    %675 = vmatpush1.xpose.msra.mxu0 0.0
    %676 = vmatprep.subr.mxu0 0.0
    %677 = vmatpush1.xpose.msra.mxu0 0.0
    %678 = vmatprep.subr.mxu0 0.0
    %679 = vmatpush1.xpose.msra.mxu0 0.0
    %680 = vmatprep.subr.mxu0 0.0
    %681 = vmatpush1.xpose.msra.mxu0 0.0
    %682 = vmatprep.subr.mxu0 0.0
    %683 = vmatpush1.xpose.msra.mxu0 0.0
    %684 = vmatprep.subr.mxu0 0.0
    %685 = vmatpush1.xpose.msra.mxu0 0.0
    %686 = vmatprep.subr.mxu0 0.0
    %687 = vmatpush1.xpose.msra.mxu0 0.0
    %688 = vmatprep.subr.mxu0 0.0
    %689 = vmatpush1.xpose.msra.mxu0 0.0
    %690 = vmatprep.subr.mxu0 0.0
    %691 = vmatpush1.xpose.msra.mxu0 0.0
    %692 = vmatprep.subr.mxu0 0.0
    %693 = vmatpush1.xpose.msra.mxu0 0.0
    %694 = vmatprep.subr.mxu0 0.0
    %695 = vmatpush1.xpose.msra.mxu0 0.0
    %696 = vmatprep.mubr.f32.mxu0 0.0
    %697 = vmatmul.mubr.f32.gmra.mrb[0].mxu0 %v628
    %v698 = vpop.f32.mrb[0].mxu0
    %v699 = vadd.f32 0.0, %v698
    %v700 = vpop.f32.mrb[0].mxu0
    %701 = vdwg.mxu0
    %v702 = vmul.f32 %v471, 0.25
    %v703 = vmul.f32 %v547, 0.25
    %v704 = vmul.f32 %v623, 0.25
    %v705 = vmul.f32 %v699, 0.25
    %v706 = vlaneseq
    %v707 = vshrl.u32 %v706, 7
    %v708 = vsub.s32 0, %v707
    %v709 = vrot.slane %v291, %v708
    %v710 = vlaneseq
    %v711 = vshrl.u32 %v710, 7
    %v712 = vsub.s32 0, %v711
    %v713 = vrot.slane %v298, %v712
    %v716 = vadd.f32 %v702, %v709
    %v717 = vadd.f32 %v703, %v713
    %v718 = vadd.f32 %v704, %v709
    %v719 = vadd.f32 %v705, %v713
    %vm720 = vcmask 64512
    %v721 = vsel %vm720, %v716, -inf
    %722 = vmax.xlane.f32.xlu0 %v721
    %v723 = vpop.xlane.xlu0 %722
    %v724 = vsel %vm720, %v717, -inf
    %725 = vmax.xlane.f32.xlu0 %v724
    %v726 = vpop.xlane.xlu0 %725
    %v727 = vsel %vm720, %v718, -inf
    %728 = vmax.xlane.f32.xlu0 %v727
    %v729 = vpop.xlane.xlu0 %728
    %v730 = vsel %vm720, %v719, -inf
    %731 = vmax.xlane.f32.xlu0 %v730
    %v732 = vpop.xlane.xlu0 %731
    %v733 = vsub.f32 %v716, %v723
    %v734 = vsub.f32 %v717, %v726
    %v735 = vsub.f32 %v718, %v729
    %v736 = vsub.f32 %v719, %v732
    %v737 = vmul.f32 %v733, 1.442695
    %v738 = vpow.pop %v737
    %v739 = vmul.f32 %v734, 1.442695
    %v740 = vpow.pop %v739
    %v741 = vmul.f32 %v735, 1.442695
    %v742 = vpow.pop %v741
    %v743 = vmul.f32 %v736, 1.442695
    %v744 = vpow.pop %v743
    %v745 = vsel %vm720, %v738, 0.0
    %746 = vadd.xlane.f32.xlu0 %v745
    %v747 = vpop.xlane.xlu0 %746
    %v748 = vsel %vm720, %v740, 0.0
    %749 = vadd.xlane.f32.xlu0 %v748
    %v750 = vpop.xlane.xlu0 %749
    %v751 = vsel %vm720, %v742, 0.0
    %752 = vadd.xlane.f32.xlu0 %v751
    %v753 = vpop.xlane.xlu0 %752
    %v754 = vsel %vm720, %v744, 0.0
    %755 = vadd.xlane.f32.xlu0 %v754
    %v756 = vpop.xlane.xlu0 %755
    %v757 = vrcp.pop %v747
    %v758 = vrcp.pop %v750
    %v759 = vrcp.pop %v753
    %v760 = vrcp.pop %v756
    %v761 = vmul.f32 %v738, %v757
    %v762 = vmul.f32 %v740, %v758
    %v763 = vmul.f32 %v742, %v759
    %v764 = vmul.f32 %v744, %v760
    %765 = vrot.lane.b32.xlu0 %v383, 64
    %v766 = vpop.permute.xlu0 %765
    %v769 = vsel %vm720, %v761, 0
    %771 = vmatprep.subr.mxu0 0.0
    %772 = vmatpush1.msra.mxu0 %v766
    %773 = vmatprep.subr.mxu0 0.0
    %774 = vmatpush1.msra.mxu0 0.0
    %775 = vmatprep.subr.mxu0 0.0
    %776 = vmatpush1.msra.mxu0 0.0
    %777 = vmatprep.subr.mxu0 0.0
    %778 = vmatpush1.msra.mxu0 0.0
    %779 = vmatprep.subr.mxu0 0.0
    %780 = vmatpush1.msra.mxu0 0.0
    %781 = vmatprep.subr.mxu0 0.0
    %782 = vmatpush1.msra.mxu0 0.0
    %783 = vmatprep.subr.mxu0 0.0
    %784 = vmatpush1.msra.mxu0 0.0
    %785 = vmatprep.subr.mxu0 0.0
    %786 = vmatpush1.msra.mxu0 0.0
    %787 = vmatprep.subr.mxu0 0.0
    %788 = vmatpush1.msra.mxu0 0.0
    %789 = vmatprep.subr.mxu0 0.0
    %790 = vmatpush1.msra.mxu0 0.0
    %791 = vmatprep.subr.mxu0 0.0
    %792 = vmatpush1.msra.mxu0 0.0
    %793 = vmatprep.subr.mxu0 0.0
    %794 = vmatpush1.msra.mxu0 0.0
    %795 = vmatprep.subr.mxu0 0.0
    %796 = vmatpush1.msra.mxu0 0.0
    %797 = vmatprep.subr.mxu0 0.0
    %798 = vmatpush1.msra.mxu0 0.0
    %799 = vmatprep.subr.mxu0 0.0
    %800 = vmatpush1.msra.mxu0 0.0
    %801 = vmatprep.subr.mxu0 0.0
    %802 = vmatpush1.msra.mxu0 0.0
    %803 = vmatprep.subr.mxu0 0.0
    %804 = vmatpush1.msra.mxu0 0.0
    %805 = vmatprep.subr.mxu0 0.0
    %806 = vmatpush1.msra.mxu0 0.0
    %807 = vmatprep.subr.mxu0 0.0
    %808 = vmatpush1.msra.mxu0 0.0
    %809 = vmatprep.subr.mxu0 0.0
    %810 = vmatpush1.msra.mxu0 0.0
    %811 = vmatprep.subr.mxu0 0.0
    %812 = vmatpush1.msra.mxu0 0.0
    %813 = vmatprep.subr.mxu0 0.0
    %814 = vmatpush1.msra.mxu0 0.0
    %815 = vmatprep.subr.mxu0 0.0
    %816 = vmatpush1.msra.mxu0 0.0
    %817 = vmatprep.subr.mxu0 0.0
    %818 = vmatpush1.msra.mxu0 0.0
    %819 = vmatprep.subr.mxu0 0.0
    %820 = vmatpush1.msra.mxu0 0.0
    %821 = vmatprep.subr.mxu0 0.0
    %822 = vmatpush1.msra.mxu0 0.0
    %823 = vmatprep.subr.mxu0 0.0
    %824 = vmatpush1.msra.mxu0 0.0
    %825 = vmatprep.subr.mxu0 0.0
    %826 = vmatpush1.msra.mxu0 0.0
    %827 = vmatprep.subr.mxu0 0.0
    %828 = vmatpush1.msra.mxu0 0.0
    %829 = vmatprep.subr.mxu0 0.0
    %830 = vmatpush1.msra.mxu0 0.0
    %831 = vmatprep.subr.mxu0 0.0
    %832 = vmatpush1.msra.mxu0 0.0
    %833 = vmatprep.subr.mxu0 0.0
    %834 = vmatpush1.msra.mxu0 0.0
    %835 = vmatprep.mubr.f32.mxu0 0.0
    %836 = vmatmul.mubr.f32.gmra.mrb[0].mxu0 %v769
    %v837 = vpop.f32.mrb[0].mxu0
    %v838 = vadd.f32 0.0, %v837
    %v839 = vpop.f32.mrb[0].mxu0
    %840 = vdwg.mxu0
    %841 = vrot.lane.b32.xlu0 %v388, 64
    %v842 = vpop.permute.xlu0 %841
    %v845 = vsel %vm720, %v762, 0
    %847 = vmatprep.subr.mxu0 0.0
    %848 = vmatpush1.msra.mxu0 %v842
    %849 = vmatprep.subr.mxu0 0.0
    %850 = vmatpush1.msra.mxu0 0.0
    %851 = vmatprep.subr.mxu0 0.0
    %852 = vmatpush1.msra.mxu0 0.0
    %853 = vmatprep.subr.mxu0 0.0
    %854 = vmatpush1.msra.mxu0 0.0
    %855 = vmatprep.subr.mxu0 0.0
    %856 = vmatpush1.msra.mxu0 0.0
    %857 = vmatprep.subr.mxu0 0.0
    %858 = vmatpush1.msra.mxu0 0.0
    %859 = vmatprep.subr.mxu0 0.0
    %860 = vmatpush1.msra.mxu0 0.0
    %861 = vmatprep.subr.mxu0 0.0
    %862 = vmatpush1.msra.mxu0 0.0
    %863 = vmatprep.subr.mxu0 0.0
    %864 = vmatpush1.msra.mxu0 0.0
    %865 = vmatprep.subr.mxu0 0.0
    %866 = vmatpush1.msra.mxu0 0.0
    %867 = vmatprep.subr.mxu0 0.0
    %868 = vmatpush1.msra.mxu0 0.0
    %869 = vmatprep.subr.mxu0 0.0
    %870 = vmatpush1.msra.mxu0 0.0
    %871 = vmatprep.subr.mxu0 0.0
    %872 = vmatpush1.msra.mxu0 0.0
    %873 = vmatprep.subr.mxu0 0.0
    %874 = vmatpush1.msra.mxu0 0.0
    %875 = vmatprep.subr.mxu0 0.0
    %876 = vmatpush1.msra.mxu0 0.0
    %877 = vmatprep.subr.mxu0 0.0
    %878 = vmatpush1.msra.mxu0 0.0
    %879 = vmatprep.subr.mxu0 0.0
    %880 = vmatpush1.msra.mxu0 0.0
    %881 = vmatprep.subr.mxu0 0.0
    %882 = vmatpush1.msra.mxu0 0.0
    %883 = vmatprep.subr.mxu0 0.0
    %884 = vmatpush1.msra.mxu0 0.0
    %885 = vmatprep.subr.mxu0 0.0
    %886 = vmatpush1.msra.mxu0 0.0
    %887 = vmatprep.subr.mxu0 0.0
    %888 = vmatpush1.msra.mxu0 0.0
    %889 = vmatprep.subr.mxu0 0.0
    %890 = vmatpush1.msra.mxu0 0.0
    %891 = vmatprep.subr.mxu0 0.0
    %892 = vmatpush1.msra.mxu0 0.0
    %893 = vmatprep.subr.mxu0 0.0
    %894 = vmatpush1.msra.mxu0 0.0
    %895 = vmatprep.subr.mxu0 0.0
    %896 = vmatpush1.msra.mxu0 0.0
    %897 = vmatprep.subr.mxu0 0.0
    %898 = vmatpush1.msra.mxu0 0.0
    %899 = vmatprep.subr.mxu0 0.0
    %900 = vmatpush1.msra.mxu0 0.0
    %901 = vmatprep.subr.mxu0 0.0
    %902 = vmatpush1.msra.mxu0 0.0
    %903 = vmatprep.subr.mxu0 0.0
    %904 = vmatpush1.msra.mxu0 0.0
    %905 = vmatprep.subr.mxu0 0.0
    %906 = vmatpush1.msra.mxu0 0.0
    %907 = vmatprep.subr.mxu0 0.0
    %908 = vmatpush1.msra.mxu0 0.0
    %909 = vmatprep.subr.mxu0 0.0
    %910 = vmatpush1.msra.mxu0 0.0
    %911 = vmatprep.mubr.f32.mxu0 0.0
    %912 = vmatmul.mubr.f32.gmra.mrb[0].mxu0 %v845
    %v913 = vpop.f32.mrb[0].mxu0
    %v914 = vadd.f32 0.0, %v913
    %v915 = vpop.f32.mrb[0].mxu0
    %916 = vdwg.mxu0
    %917 = vrot.lane.b32.xlu0 %v394, 64
    %v918 = vpop.permute.xlu0 %917
    %v921 = vsel %vm720, %v763, 0
    %923 = vmatprep.subr.mxu0 0.0
    %924 = vmatpush1.msra.mxu0 %v918
    %925 = vmatprep.subr.mxu0 0.0
    %926 = vmatpush1.msra.mxu0 0.0
    %927 = vmatprep.subr.mxu0 0.0
    %928 = vmatpush1.msra.mxu0 0.0
    %929 = vmatprep.subr.mxu0 0.0
    %930 = vmatpush1.msra.mxu0 0.0
    %931 = vmatprep.subr.mxu0 0.0
    %932 = vmatpush1.msra.mxu0 0.0
    %933 = vmatprep.subr.mxu0 0.0
    %934 = vmatpush1.msra.mxu0 0.0
    %935 = vmatprep.subr.mxu0 0.0
    %936 = vmatpush1.msra.mxu0 0.0
    %937 = vmatprep.subr.mxu0 0.0
    %938 = vmatpush1.msra.mxu0 0.0
    %939 = vmatprep.subr.mxu0 0.0
    %940 = vmatpush1.msra.mxu0 0.0
    %941 = vmatprep.subr.mxu0 0.0
    %942 = vmatpush1.msra.mxu0 0.0
    %943 = vmatprep.subr.mxu0 0.0
    %944 = vmatpush1.msra.mxu0 0.0
    %945 = vmatprep.subr.mxu0 0.0
    %946 = vmatpush1.msra.mxu0 0.0
    %947 = vmatprep.subr.mxu0 0.0
    %948 = vmatpush1.msra.mxu0 0.0
    %949 = vmatprep.subr.mxu0 0.0
    %950 = vmatpush1.msra.mxu0 0.0
    %951 = vmatprep.subr.mxu0 0.0
    %952 = vmatpush1.msra.mxu0 0.0
    %953 = vmatprep.subr.mxu0 0.0
    %954 = vmatpush1.msra.mxu0 0.0
    %955 = vmatprep.subr.mxu0 0.0
    %956 = vmatpush1.msra.mxu0 0.0
    %957 = vmatprep.subr.mxu0 0.0
    %958 = vmatpush1.msra.mxu0 0.0
    %959 = vmatprep.subr.mxu0 0.0
    %960 = vmatpush1.msra.mxu0 0.0
    %961 = vmatprep.subr.mxu0 0.0
    %962 = vmatpush1.msra.mxu0 0.0
    %963 = vmatprep.subr.mxu0 0.0
    %964 = vmatpush1.msra.mxu0 0.0
    %965 = vmatprep.subr.mxu0 0.0
    %966 = vmatpush1.msra.mxu0 0.0
    %967 = vmatprep.subr.mxu0 0.0
    %968 = vmatpush1.msra.mxu0 0.0
    %969 = vmatprep.subr.mxu0 0.0
    %970 = vmatpush1.msra.mxu0 0.0
    %971 = vmatprep.subr.mxu0 0.0
    %972 = vmatpush1.msra.mxu0 0.0
    %973 = vmatprep.subr.mxu0 0.0
    %974 = vmatpush1.msra.mxu0 0.0
    %975 = vmatprep.subr.mxu0 0.0
    %976 = vmatpush1.msra.mxu0 0.0
    %977 = vmatprep.subr.mxu0 0.0
    %978 = vmatpush1.msra.mxu0 0.0
    %979 = vmatprep.subr.mxu0 0.0
    %980 = vmatpush1.msra.mxu0 0.0
    %981 = vmatprep.subr.mxu0 0.0
    %982 = vmatpush1.msra.mxu0 0.0
    %983 = vmatprep.subr.mxu0 0.0
    %984 = vmatpush1.msra.mxu0 0.0
    %985 = vmatprep.subr.mxu0 0.0
    %986 = vmatpush1.msra.mxu0 0.0
    %987 = vmatprep.mubr.f32.mxu0 0.0
    %988 = vmatmul.mubr.f32.gmra.mrb[0].mxu0 %v921
    %v989 = vpop.f32.mrb[0].mxu0
    %v990 = vadd.f32 0.0, %v989
    %v991 = vpop.f32.mrb[0].mxu0
    %992 = vdwg.mxu0
    %993 = vrot.lane.b32.xlu0 %v396, 64
    %v994 = vpop.permute.xlu0 %993
    %v997 = vsel %vm720, %v764, 0
    %999 = vmatprep.subr.mxu0 0.0
    %1000 = vmatpush1.msra.mxu0 %v994
    %1001 = vmatprep.subr.mxu0 0.0
    %1002 = vmatpush1.msra.mxu0 0.0
    %1003 = vmatprep.subr.mxu0 0.0
    %1004 = vmatpush1.msra.mxu0 0.0
    %1005 = vmatprep.subr.mxu0 0.0
    %1006 = vmatpush1.msra.mxu0 0.0
    %1007 = vmatprep.subr.mxu0 0.0
    %1008 = vmatpush1.msra.mxu0 0.0
    %1009 = vmatprep.subr.mxu0 0.0
    %1010 = vmatpush1.msra.mxu0 0.0
    %1011 = vmatprep.subr.mxu0 0.0
    %1012 = vmatpush1.msra.mxu0 0.0
    %1013 = vmatprep.subr.mxu0 0.0
    %1014 = vmatpush1.msra.mxu0 0.0
    %1015 = vmatprep.subr.mxu0 0.0
    %1016 = vmatpush1.msra.mxu0 0.0
    %1017 = vmatprep.subr.mxu0 0.0
    %1018 = vmatpush1.msra.mxu0 0.0
    %1019 = vmatprep.subr.mxu0 0.0
    %1020 = vmatpush1.msra.mxu0 0.0
    %1021 = vmatprep.subr.mxu0 0.0
    %1022 = vmatpush1.msra.mxu0 0.0
    %1023 = vmatprep.subr.mxu0 0.0
    %1024 = vmatpush1.msra.mxu0 0.0
    %1025 = vmatprep.subr.mxu0 0.0
    %1026 = vmatpush1.msra.mxu0 0.0
    %1027 = vmatprep.subr.mxu0 0.0
    %1028 = vmatpush1.msra.mxu0 0.0
    %1029 = vmatprep.subr.mxu0 0.0
    %1030 = vmatpush1.msra.mxu0 0.0
    %1031 = vmatprep.subr.mxu0 0.0
    %1032 = vmatpush1.msra.mxu0 0.0
    %1033 = vmatprep.subr.mxu0 0.0
    %1034 = vmatpush1.msra.mxu0 0.0
    %1035 = vmatprep.subr.mxu0 0.0
    %1036 = vmatpush1.msra.mxu0 0.0
    %1037 = vmatprep.subr.mxu0 0.0
    %1038 = vmatpush1.msra.mxu0 0.0
    %1039 = vmatprep.subr.mxu0 0.0
    %1040 = vmatpush1.msra.mxu0 0.0
    %1041 = vmatprep.subr.mxu0 0.0
    %1042 = vmatpush1.msra.mxu0 0.0
    %1043 = vmatprep.subr.mxu0 0.0
    %1044 = vmatpush1.msra.mxu0 0.0
    %1045 = vmatprep.subr.mxu0 0.0
    %1046 = vmatpush1.msra.mxu0 0.0
    %1047 = vmatprep.subr.mxu0 0.0
    %1048 = vmatpush1.msra.mxu0 0.0
    %1049 = vmatprep.subr.mxu0 0.0
    %1050 = vmatpush1.msra.mxu0 0.0
    %1051 = vmatprep.subr.mxu0 0.0
    %1052 = vmatpush1.msra.mxu0 0.0
    %1053 = vmatprep.subr.mxu0 0.0
    %1054 = vmatpush1.msra.mxu0 0.0
    %1055 = vmatprep.subr.mxu0 0.0
    %1056 = vmatpush1.msra.mxu0 0.0
    %1057 = vmatprep.subr.mxu0 0.0
    %1058 = vmatpush1.msra.mxu0 0.0
    %1059 = vmatprep.subr.mxu0 0.0
    %1060 = vmatpush1.msra.mxu0 0.0
    %1061 = vmatprep.subr.mxu0 0.0
    %1062 = vmatpush1.msra.mxu0 0.0
    %1063 = vmatprep.mubr.f32.mxu0 0.0
    %1064 = vmatmul.mubr.f32.gmra.mrb[0].mxu0 %v997
    %v1065 = vpop.f32.mrb[0].mxu0
    %v1066 = vadd.f32 0.0, %v1065
    %v1067 = vpop.f32.mrb[0].mxu0
    %1068 = vdwg.mxu0
    %1071 = vrot.lane.b32.xlu0 %v990, 16
    %v1072 = vpop.permute.xlu0 %1071
    %1073 = vrot.lane.b32.xlu0 %v1066, 16
    %v1074 = vpop.permute.xlu0 %1073
    %v1077 = vsel %vm399, %v838, %v1072
    %v1078 = vsel %vm399, %v914, %v1074
    %v1079 = vld [vmem:[%s9] sm:$0xff]
    %v1080 = vld [vmem:[%s9 + $0x8] sm:$0xff]
    %v1081 = vld [vmem:[%s9 + $0x10] sm:$0xff]
    %v1082 = vld [vmem:[%s9 + $0x18] sm:$0xff]
    %v1083 = vld [vmem:[%s10] sm:$0x1]
    %v1085 = vlaneseq
    %v1086 = vshrl.u32 %v1085, 7
    %v1087 = vsub.s32 0, %v1086
    %v1088 = vrot.slane %v1083, %v1087
    %v1091 = vsel %vm228, %v1077, 0
    %v1094 = vsel %vm228, %v1078, 0
    %1096 = vmatprep.subr.mxu0 0.0
    %1097 = vmatpush1.msra.mxu0 %v1079
    %1098 = vmatprep.subr.mxu0 0.0
    %1099 = vmatpush1.msra.mxu0 %v1080
    %1100 = vmatprep.subr.mxu0 0.0
    %1101 = vmatpush1.msra.mxu0 %v1081
    %1102 = vmatprep.subr.mxu0 0.0
    %1103 = vmatpush1.msra.mxu0 %v1082
    %1104 = vmatprep.subr.mxu0 0.0
    %1105 = vmatpush1.msra.mxu0 0.0
    %1106 = vmatprep.subr.mxu0 0.0
    %1107 = vmatpush1.msra.mxu0 0.0
    %1108 = vmatprep.subr.mxu0 0.0
    %1109 = vmatpush1.msra.mxu0 0.0
    %1110 = vmatprep.subr.mxu0 0.0
    %1111 = vmatpush1.msra.mxu0 0.0
    %1112 = vmatprep.subr.mxu0 0.0
    %1113 = vmatpush1.msra.mxu0 0.0
    %1114 = vmatprep.subr.mxu0 0.0
    %1115 = vmatpush1.msra.mxu0 0.0
    %1116 = vmatprep.subr.mxu0 0.0
    %1117 = vmatpush1.msra.mxu0 0.0
    %1118 = vmatprep.subr.mxu0 0.0
    %1119 = vmatpush1.msra.mxu0 0.0
    %1120 = vmatprep.subr.mxu0 0.0
    %1121 = vmatpush1.msra.mxu0 0.0
    %1122 = vmatprep.subr.mxu0 0.0
    %1123 = vmatpush1.msra.mxu0 0.0
    %1124 = vmatprep.subr.mxu0 0.0
    %1125 = vmatpush1.msra.mxu0 0.0
    %1126 = vmatprep.subr.mxu0 0.0
    %1127 = vmatpush1.msra.mxu0 0.0
    %1128 = vmatprep.subr.mxu0 0.0
    %1129 = vmatpush1.msra.mxu0 0.0
    %1130 = vmatprep.subr.mxu0 0.0
    %1131 = vmatpush1.msra.mxu0 0.0
    %1132 = vmatprep.subr.mxu0 0.0
    %1133 = vmatpush1.msra.mxu0 0.0
    %1134 = vmatprep.subr.mxu0 0.0
    %1135 = vmatpush1.msra.mxu0 0.0
    %1136 = vmatprep.subr.mxu0 0.0
    %1137 = vmatpush1.msra.mxu0 0.0
    %1138 = vmatprep.subr.mxu0 0.0
    %1139 = vmatpush1.msra.mxu0 0.0
    %1140 = vmatprep.subr.mxu0 0.0
    %1141 = vmatpush1.msra.mxu0 0.0
    %1142 = vmatprep.subr.mxu0 0.0
    %1143 = vmatpush1.msra.mxu0 0.0
    %1144 = vmatprep.subr.mxu0 0.0
    %1145 = vmatpush1.msra.mxu0 0.0
    %1146 = vmatprep.subr.mxu0 0.0
    %1147 = vmatpush1.msra.mxu0 0.0
    %1148 = vmatprep.subr.mxu0 0.0
    %1149 = vmatpush1.msra.mxu0 0.0
    %1150 = vmatprep.subr.mxu0 0.0
    %1151 = vmatpush1.msra.mxu0 0.0
    %1152 = vmatprep.subr.mxu0 0.0
    %1153 = vmatpush1.msra.mxu0 0.0
    %1154 = vmatprep.subr.mxu0 0.0
    %1155 = vmatpush1.msra.mxu0 0.0
    %1156 = vmatprep.subr.mxu0 0.0
    %1157 = vmatpush1.msra.mxu0 0.0
    %1158 = vmatprep.subr.mxu0 0.0
    %1159 = vmatpush1.msra.mxu0 0.0
    %1160 = vmatprep.mubr.f32.mxu0 0.0
    %1161 = vmatmul.mubr.f32.gmra.mrb[0].mxu0 %v1091
    %v1162 = vpop.f32.mrb[0].mxu0
    %v1163 = vadd.f32 %v1088, %v1162
    %v1164 = vpop.f32.mrb[0].mxu0
    %1165 = vmatprep.mubr.f32.mxu0 0.0
    %1166 = vmatmul.mubr.f32.gmra.mrb[0].mxu0 %v1094
    %v1167 = vpop.f32.mrb[0].mxu0
    %v1168 = vadd.f32 %v1088, %v1167
    %v1169 = vpop.f32.mrb[0].mxu0
    %1170 = vdwg.mxu0
    %v1171 = vadd.f32 %v270, %v1163
    %v1172 = vadd.f32 %v271, %v1168
    %v1173 = vld [vmem:[%s11] sm:$0x1]
    %v1174 = vld [vmem:[%s12] sm:$0x1]
    %v1175 = vsel %vm228, %v1171, 0.0
    %1176 = vadd.xlane.f32.xlu0 %v1175
    %v1177 = vpop.xlane.xlu0 %1176
    %v1178 = vsel %vm228, %v1172, 0.0
    %1179 = vadd.xlane.f32.xlu0 %v1178
    %v1180 = vpop.xlane.xlu0 %1179
    %v1181 = vmul.f32 %v1177, %v235
    %v1182 = vmul.f32 %v1180, %v235
    %v1183 = vsub.f32 %v1171, %v1181
    %v1184 = vsub.f32 %v1172, %v1182
    %v1185 = vmul.f32 %v1183, %v1183
    %v1186 = vmul.f32 %v1184, %v1184
    %v1187 = vsel %vm228, %v1185, 0.0
    %1188 = vadd.xlane.f32.xlu0 %v1187
    %v1189 = vpop.xlane.xlu0 %1188
    %v1190 = vsel %vm228, %v1186, 0.0
    %1191 = vadd.xlane.f32.xlu0 %v1190
    %v1192 = vpop.xlane.xlu0 %1191
    %v1193 = vmul.f32 %v1189, %v235
    %v1194 = vmul.f32 %v1192, %v235
    %v1195 = vadd.f32 %v1193, 1e-12
    %v1196 = vadd.f32 %v1194, 1e-12
    %v1197 = vrsqrt.pop %v1195
    %v1198 = vrsqrt.pop %v1196
    %v1199 = vmul.f32 %v1183, %v1197
    %v1200 = vmul.f32 %v1184, %v1198
    %v1202 = vlaneseq
    %v1203 = vshrl.u32 %v1202, 7
    %v1204 = vsub.s32 0, %v1203
    %v1205 = vrot.slane %v1173, %v1204
    %v1207 = vmul.f32 %v1199, %v1205
    %v1208 = vmul.f32 %v1200, %v1205
    %v1210 = vlaneseq
    %v1211 = vshrl.u32 %v1210, 7
    %v1212 = vsub.s32 0, %v1211
    %v1213 = vrot.slane %v1174, %v1212
    %v1215 = vadd.f32 %v1207, %v1213
    %v1216 = vadd.f32 %v1208, %v1213
    %v1217 = vld [vmem:[%s13] sm:$0xff]
    %v1218 = vld [vmem:[%s13 + $0x8] sm:$0xff]
    %v1219 = vld [vmem:[%s13 + $0x10] sm:$0xff]
    %v1220 = vld [vmem:[%s13 + $0x18] sm:$0xff]
    %v1221 = vld [vmem:[#allocation2] sm:$0x1]
    %v1223 = vlaneseq
    %v1224 = vshrl.u32 %v1223, 7
    %v1225 = vsub.s32 0, %v1224
    %v1226 = vrot.slane %v1221, %v1225
    %v1229 = vsel %vm228, %v1215, 0
    %v1232 = vsel %vm228, %v1216, 0
    %1234 = vmatprep.subr.mxu0 0.0
    %1235 = vmatpush1.msra.mxu0 %v1217
    %1236 = vmatprep.subr.mxu0 0.0
    %1237 = vmatpush1.msra.mxu0 %v1218
    %1238 = vmatprep.subr.mxu0 0.0
    %1239 = vmatpush1.msra.mxu0 %v1219
    %1240 = vmatprep.subr.mxu0 0.0
    %1241 = vmatpush1.msra.mxu0 %v1220
    %1242 = vmatprep.subr.mxu0 0.0
    %1243 = vmatpush1.msra.mxu0 0.0
    %1244 = vmatprep.subr.mxu0 0.0
    %1245 = vmatpush1.msra.mxu0 0.0
    %1246 = vmatprep.subr.mxu0 0.0
    %1247 = vmatpush1.msra.mxu0 0.0
    %1248 = vmatprep.subr.mxu0 0.0
    %1249 = vmatpush1.msra.mxu0 0.0
    %1250 = vmatprep.subr.mxu0 0.0
    %1251 = vmatpush1.msra.mxu0 0.0
    %1252 = vmatprep.subr.mxu0 0.0
    %1253 = vmatpush1.msra.mxu0 0.0
    %1254 = vmatprep.subr.mxu0 0.0
    %1255 = vmatpush1.msra.mxu0 0.0
    %1256 = vmatprep.subr.mxu0 0.0
    %1257 = vmatpush1.msra.mxu0 0.0
    %1258 = vmatprep.subr.mxu0 0.0
    %1259 = vmatpush1.msra.mxu0 0.0
    %1260 = vmatprep.subr.mxu0 0.0
    %1261 = vmatpush1.msra.mxu0 0.0
    %1262 = vmatprep.subr.mxu0 0.0
    %1263 = vmatpush1.msra.mxu0 0.0
    %1264 = vmatprep.subr.mxu0 0.0
    %1265 = vmatpush1.msra.mxu0 0.0
    %1266 = vmatprep.subr.mxu0 0.0
    %1267 = vmatpush1.msra.mxu0 0.0
    %1268 = vmatprep.subr.mxu0 0.0
    %1269 = vmatpush1.msra.mxu0 0.0
    %1270 = vmatprep.subr.mxu0 0.0
    %1271 = vmatpush1.msra.mxu0 0.0
    %1272 = vmatprep.subr.mxu0 0.0
    %1273 = vmatpush1.msra.mxu0 0.0
    %1274 = vmatprep.subr.mxu0 0.0
    %1275 = vmatpush1.msra.mxu0 0.0
    %1276 = vmatprep.subr.mxu0 0.0
    %1277 = vmatpush1.msra.mxu0 0.0
    %1278 = vmatprep.subr.mxu0 0.0
    %1279 = vmatpush1.msra.mxu0 0.0
    %1280 = vmatprep.subr.mxu0 0.0
    %1281 = vmatpush1.msra.mxu0 0.0
    %1282 = vmatprep.subr.mxu0 0.0
    %1283 = vmatpush1.msra.mxu0 0.0
    %1284 = vmatprep.subr.mxu0 0.0
    %1285 = vmatpush1.msra.mxu0 0.0
    %1286 = vmatprep.subr.mxu0 0.0
    %1287 = vmatpush1.msra.mxu0 0.0
    %1288 = vmatprep.subr.mxu0 0.0
    %1289 = vmatpush1.msra.mxu0 0.0
    %1290 = vmatprep.subr.mxu0 0.0
    %1291 = vmatpush1.msra.mxu0 0.0
    %1292 = vmatprep.subr.mxu0 0.0
    %1293 = vmatpush1.msra.mxu0 0.0
    %1294 = vmatprep.subr.mxu0 0.0
    %1295 = vmatpush1.msra.mxu0 0.0
    %1296 = vmatprep.subr.mxu0 0.0
    %1297 = vmatpush1.msra.mxu0 0.0
    %1298 = vmatprep.mubr.f32.mxu0 0.0
    %1299 = vmatmul.mubr.f32.gmra.mrb[0].mxu0 %v1229
    %v1300 = vpop.f32.mrb[0].mxu0
    %v1301 = vadd.f32 %v1226, %v1300
    %v1302 = vpop.f32.mrb[0].mxu0
    %1303 = vmatprep.mubr.f32.mxu0 0.0
    %1304 = vmatmul.mubr.f32.gmra.mrb[0].mxu0 %v1232
    %v1305 = vpop.f32.mrb[0].mxu0
    %v1306 = vadd.f32 %v1226, %v1305
    %v1307 = vpop.f32.mrb[0].mxu0
    %1308 = vdwg.mxu0
    %v1309 = vmul.f32 %v1301, 0.5
    %v1310 = vmul.f32 %v1306, 0.5
    %v1311 = vmul.f32 %v1301, 0.044715
    %v1312 = vmul.f32 %v1306, 0.044715
    %v1313 = vmul.f32 %v1311, %v1301
    %v1314 = vmul.f32 %v1312, %v1306
    %v1315 = vmul.f32 %v1313, %v1301
    %v1316 = vmul.f32 %v1314, %v1306
    %v1317 = vadd.f32 %v1301, %v1315
    %v1318 = vadd.f32 %v1306, %v1316
    %v1319 = vmul.f32 %v1317, 0.7978846
    %v1320 = vmul.f32 %v1318, 0.7978846
    %v1321 = vtanh.pop %v1319
    %v1322 = vtanh.pop %v1320
    %v1323 = vadd.f32 %v1321, 1.0
    %v1324 = vadd.f32 %v1322, 1.0
    %v1325 = vmul.f32 %v1309, %v1323
    %v1326 = vmul.f32 %v1310, %v1324
    %v1327 = vld [vmem:[%s15] sm:$0xff]
    %v1328 = vld [vmem:[%s15 + $0x8] sm:$0xff]
    %v1329 = vld [vmem:[%s15 + $0x10] sm:$0xff]
    %v1330 = vld [vmem:[%s15 + $0x18] sm:$0xff]
    %v1331 = vld [vmem:[%s15 + $0x20] sm:$0xff]
    %v1332 = vld [vmem:[%s15 + $0x28] sm:$0xff]
    %v1333 = vld [vmem:[%s15 + $0x30] sm:$0xff]
    %v1334 = vld [vmem:[%s15 + $0x38] sm:$0xff]
    %v1335 = vld [vmem:[#allocation4] sm:$0x1]
    %v1337 = vlaneseq
    %v1338 = vshrl.u32 %v1337, 7
    %v1339 = vsub.s32 0, %v1338
    %v1340 = vrot.slane %v1335, %v1339
    %vm1342 = vcmask 523264
    %v1344 = vsel %vm1342, %v1325, 0
    %v1347 = vsel %vm1342, %v1326, 0
    %1349 = vmatprep.subr.mxu0 0.0
    %1350 = vmatpush1.msra.mxu0 %v1327
    %1351 = vmatprep.subr.mxu0 0.0
    %1352 = vmatpush1.msra.mxu0 %v1328
    %1353 = vmatprep.subr.mxu0 0.0
    %1354 = vmatpush1.msra.mxu0 %v1329
    %1355 = vmatprep.subr.mxu0 0.0
    %1356 = vmatpush1.msra.mxu0 %v1330
    %1357 = vmatprep.subr.mxu0 0.0
    %1358 = vmatpush1.msra.mxu0 %v1331
    %1359 = vmatprep.subr.mxu0 0.0
    %1360 = vmatpush1.msra.mxu0 %v1332
    %1361 = vmatprep.subr.mxu0 0.0
    %1362 = vmatpush1.msra.mxu0 %v1333
    %1363 = vmatprep.subr.mxu0 0.0
    %1364 = vmatpush1.msra.mxu0 %v1334
    %1365 = vmatprep.subr.mxu0 0.0
    %1366 = vmatpush1.msra.mxu0 0.0
    %1367 = vmatprep.subr.mxu0 0.0
    %1368 = vmatpush1.msra.mxu0 0.0
    %1369 = vmatprep.subr.mxu0 0.0
    %1370 = vmatpush1.msra.mxu0 0.0
    %1371 = vmatprep.subr.mxu0 0.0
    %1372 = vmatpush1.msra.mxu0 0.0
    %1373 = vmatprep.subr.mxu0 0.0
    %1374 = vmatpush1.msra.mxu0 0.0
    %1375 = vmatprep.subr.mxu0 0.0
    %1376 = vmatpush1.msra.mxu0 0.0
    %1377 = vmatprep.subr.mxu0 0.0
    %1378 = vmatpush1.msra.mxu0 0.0
    %1379 = vmatprep.subr.mxu0 0.0
    %1380 = vmatpush1.msra.mxu0 0.0
    %1381 = vmatprep.subr.mxu0 0.0
    %1382 = vmatpush1.msra.mxu0 0.0
    %1383 = vmatprep.subr.mxu0 0.0
    %1384 = vmatpush1.msra.mxu0 0.0
    %1385 = vmatprep.subr.mxu0 0.0
    %1386 = vmatpush1.msra.mxu0 0.0
    %1387 = vmatprep.subr.mxu0 0.0
    %1388 = vmatpush1.msra.mxu0 0.0
    %1389 = vmatprep.subr.mxu0 0.0
    %1390 = vmatpush1.msra.mxu0 0.0
    %1391 = vmatprep.subr.mxu0 0.0
    %1392 = vmatpush1.msra.mxu0 0.0
    %1393 = vmatprep.subr.mxu0 0.0
    %1394 = vmatpush1.msra.mxu0 0.0
    %1395 = vmatprep.subr.mxu0 0.0
    %1396 = vmatpush1.msra.mxu0 0.0
    %1397 = vmatprep.subr.mxu0 0.0
    %1398 = vmatpush1.msra.mxu0 0.0
    %1399 = vmatprep.subr.mxu0 0.0
    %1400 = vmatpush1.msra.mxu0 0.0
    %1401 = vmatprep.subr.mxu0 0.0
    %1402 = vmatpush1.msra.mxu0 0.0
    %1403 = vmatprep.subr.mxu0 0.0
    %1404 = vmatpush1.msra.mxu0 0.0
    %1405 = vmatprep.subr.mxu0 0.0
    %1406 = vmatpush1.msra.mxu0 0.0
    %1407 = vmatprep.subr.mxu0 0.0
    %1408 = vmatpush1.msra.mxu0 0.0
    %1409 = vmatprep.subr.mxu0 0.0
    %1410 = vmatpush1.msra.mxu0 0.0
    %1411 = vmatprep.subr.mxu0 0.0
    %1412 = vmatpush1.msra.mxu0 0.0
    %1413 = vmatprep.mubr.f32.mxu0 0.0
    %1414 = vmatmul.mubr.f32.gmra.mrb[0].mxu0 %v1344
    %v1415 = vpop.f32.mrb[0].mxu0
    %v1416 = vadd.f32 %v1340, %v1415
    %v1417 = vpop.f32.mrb[0].mxu0
    %1418 = vmatprep.mubr.f32.mxu0 0.0
    %1419 = vmatmul.mubr.f32.gmra.mrb[0].mxu0 %v1347
    %v1420 = vpop.f32.mrb[0].mxu0
    %v1421 = vadd.f32 %v1340, %v1420
    %v1422 = vpop.f32.mrb[0].mxu0
    %1423 = vdwg.mxu0
    %v1424 = vadd.f32 %v1215, %v1416
    %v1425 = vadd.f32 %v1216, %v1421
    %v1426 = vld [vmem:[%s17] sm:$0x1]
    %v1427 = vld [vmem:[%s18] sm:$0x1]
    %v1428 = vsel %vm228, %v1424, 0.0
    %1429 = vadd.xlane.f32.xlu0 %v1428
    %v1430 = vpop.xlane.xlu0 %1429
    %v1431 = vsel %vm228, %v1425, 0.0
    %1432 = vadd.xlane.f32.xlu0 %v1431
    %v1433 = vpop.xlane.xlu0 %1432
    %v1434 = vmul.f32 %v1430, %v235
    %v1435 = vmul.f32 %v1433, %v235
    %v1436 = vsub.f32 %v1424, %v1434
    %v1437 = vsub.f32 %v1425, %v1435
    %v1438 = vmul.f32 %v1436, %v1436
    %v1439 = vmul.f32 %v1437, %v1437
    %v1440 = vsel %vm228, %v1438, 0.0
    %1441 = vadd.xlane.f32.xlu0 %v1440
    %v1442 = vpop.xlane.xlu0 %1441
    %v1443 = vsel %vm228, %v1439, 0.0
    %1444 = vadd.xlane.f32.xlu0 %v1443
    %v1445 = vpop.xlane.xlu0 %1444
    %v1446 = vmul.f32 %v1442, %v235
    %v1447 = vmul.f32 %v1445, %v235
    %v1448 = vadd.f32 %v1446, 1e-12
    %v1449 = vadd.f32 %v1447, 1e-12
    %v1450 = vrsqrt.pop %v1448
    %v1451 = vrsqrt.pop %v1449
    %v1452 = vmul.f32 %v1436, %v1450
    %v1453 = vmul.f32 %v1437, %v1451
    %v1455 = vlaneseq
    %v1456 = vshrl.u32 %v1455, 7
    %v1457 = vsub.s32 0, %v1456
    %v1458 = vrot.slane %v1426, %v1457
    %v1460 = vmul.f32 %v1452, %v1458
    %v1461 = vmul.f32 %v1453, %v1458
    %v1463 = vlaneseq
    %v1464 = vshrl.u32 %v1463, 7
    %v1465 = vsub.s32 0, %v1464
    %v1466 = vrot.slane %v1427, %v1465
    %v1468 = vadd.f32 %v1460, %v1466
    %v1469 = vadd.f32 %v1461, %v1466
    %s1470 = scalar_lea.vmem %s7, 32
    %v1471 = vld [vmem:[%s1470] sm:$0xff]
    %v1472 = vld [vmem:[%s1470 + $0x8] sm:$0xff]
    %v1473 = vld [vmem:[%s1470 + $0x10] sm:$0xff]
    %v1474 = vld [vmem:[%s1470 + $0x18] sm:$0xff]
    %s1475 = scalar_lea.vmem %s8, 1
    %v1476 = vld [vmem:[%s1475] sm:$0x1]
    %v1478 = vlaneseq
    %v1479 = vshrl.u32 %v1478, 7
    %v1480 = vsub.s32 0, %v1479
    %v1481 = vrot.slane %v1476, %v1480
    %v1484 = vsel %vm228, %v1468, 0
    %v1487 = vsel %vm228, %v1469, 0
    %1489 = vmatprep.subr.mxu0 0.0
    %1490 = vmatpush1.msra.mxu0 %v1471
    %1491 = vmatprep.subr.mxu0 0.0
    %1492 = vmatpush1.msra.mxu0 %v1472
    %1493 = vmatprep.subr.mxu0 0.0
    %1494 = vmatpush1.msra.mxu0 %v1473
    %1495 = vmatprep.subr.mxu0 0.0
    %1496 = vmatpush1.msra.mxu0 %v1474
    %1497 = vmatprep.subr.mxu0 0.0
    %1498 = vmatpush1.msra.mxu0 0.0
    %1499 = vmatprep.subr.mxu0 0.0
    %1500 = vmatpush1.msra.mxu0 0.0
    %1501 = vmatprep.subr.mxu0 0.0
    %1502 = vmatpush1.msra.mxu0 0.0
    %1503 = vmatprep.subr.mxu0 0.0
    %1504 = vmatpush1.msra.mxu0 0.0
    %1505 = vmatprep.subr.mxu0 0.0
    %1506 = vmatpush1.msra.mxu0 0.0
    %1507 = vmatprep.subr.mxu0 0.0
    %1508 = vmatpush1.msra.mxu0 0.0
    %1509 = vmatprep.subr.mxu0 0.0
    %1510 = vmatpush1.msra.mxu0 0.0
    %1511 = vmatprep.subr.mxu0 0.0
    %1512 = vmatpush1.msra.mxu0 0.0
    %1513 = vmatprep.subr.mxu0 0.0
    %1514 = vmatpush1.msra.mxu0 0.0
    %1515 = vmatprep.subr.mxu0 0.0
    %1516 = vmatpush1.msra.mxu0 0.0
    %1517 = vmatprep.subr.mxu0 0.0
    %1518 = vmatpush1.msra.mxu0 0.0
    %1519 = vmatprep.subr.mxu0 0.0
    %1520 = vmatpush1.msra.mxu0 0.0
    %1521 = vmatprep.subr.mxu0 0.0
    %1522 = vmatpush1.msra.mxu0 0.0
    %1523 = vmatprep.subr.mxu0 0.0
    %1524 = vmatpush1.msra.mxu0 0.0
    %1525 = vmatprep.subr.mxu0 0.0
    %1526 = vmatpush1.msra.mxu0 0.0
    %1527 = vmatprep.subr.mxu0 0.0
    %1528 = vmatpush1.msra.mxu0 0.0
    %1529 = vmatprep.subr.mxu0 0.0
    %1530 = vmatpush1.msra.mxu0 0.0
    %1531 = vmatprep.subr.mxu0 0.0
    %1532 = vmatpush1.msra.mxu0 0.0
    %1533 = vmatprep.subr.mxu0 0.0
    %1534 = vmatpush1.msra.mxu0 0.0
    %1535 = vmatprep.subr.mxu0 0.0
    %1536 = vmatpush1.msra.mxu0 0.0
    %1537 = vmatprep.subr.mxu0 0.0
    %1538 = vmatpush1.msra.mxu0 0.0
    %1539 = vmatprep.subr.mxu0 0.0
    %1540 = vmatpush1.msra.mxu0 0.0
    %1541 = vmatprep.subr.mxu0 0.0
    %1542 = vmatpush1.msra.mxu0 0.0
    %1543 = vmatprep.subr.mxu0 0.0
    %1544 = vmatpush1.msra.mxu0 0.0
    %1545 = vmatprep.subr.mxu0 0.0
    %1546 = vmatpush1.msra.mxu0 0.0
    %1547 = vmatprep.subr.mxu0 0.0
    %1548 = vmatpush1.msra.mxu0 0.0
    %1549 = vmatprep.subr.mxu0 0.0
    %1550 = vmatpush1.msra.mxu0 0.0
    %1551 = vmatprep.subr.mxu0 0.0
    %1552 = vmatpush1.msra.mxu0 0.0
    %1553 = vmatprep.mubr.f32.mxu0 0.0
    %1554 = vmatmul.mubr.f32.gmra.mrb[0].mxu0 %v1484
    %v1555 = vpop.f32.mrb[0].mxu0
    %v1556 = vadd.f32 %v1481, %v1555
    %v1557 = vpop.f32.mrb[0].mxu0
    %1558 = vmatprep.mubr.f32.mxu0 0.0
    %1559 = vmatmul.mubr.f32.gmra.mrb[0].mxu0 %v1487
    %v1560 = vpop.f32.mrb[0].mxu0
    %v1561 = vadd.f32 %v1481, %v1560
    %v1562 = vpop.f32.mrb[0].mxu0
    %1563 = vdwg.mxu0
    %1566 = vrot.lane.b32.xlu0 %v1556, 112
    %v1567 = vpop.permute.xlu0 %1566
    %1568 = vrot.lane.b32.xlu0 %v1561, 112
    %v1569 = vpop.permute.xlu0 %1568
    %1570 = vrot.lane.b32.xlu0 %v1556, 96
    %v1571 = vpop.permute.xlu0 %1570
    %v1572 = vsel %vm399, %v1556, 0
    %v1574 = vsel %vm399, %v1571, 0
    %1576 = vmatprep.subr.mxu0 0.0
    %1577 = vmatpush1.xpose.msra.mxu0 %v1574
    %1578 = vmatprep.subr.mxu0 0.0
    %1579 = vmatpush1.xpose.msra.mxu0 0.0
    %1580 = vmatprep.subr.mxu0 0.0
    %1581 = vmatpush1.xpose.msra.mxu0 0.0
    %1582 = vmatprep.subr.mxu0 0.0
    %1583 = vmatpush1.xpose.msra.mxu0 0.0
    %1584 = vmatprep.subr.mxu0 0.0
    %1585 = vmatpush1.xpose.msra.mxu0 0.0
    %1586 = vmatprep.subr.mxu0 0.0
    %1587 = vmatpush1.xpose.msra.mxu0 0.0
    %1588 = vmatprep.subr.mxu0 0.0
    %1589 = vmatpush1.xpose.msra.mxu0 0.0
    %1590 = vmatprep.subr.mxu0 0.0
    %1591 = vmatpush1.xpose.msra.mxu0 0.0
    %1592 = vmatprep.subr.mxu0 0.0
    %1593 = vmatpush1.xpose.msra.mxu0 0.0
    %1594 = vmatprep.subr.mxu0 0.0
    %1595 = vmatpush1.xpose.msra.mxu0 0.0
    %1596 = vmatprep.subr.mxu0 0.0
    %1597 = vmatpush1.xpose.msra.mxu0 0.0
    %1598 = vmatprep.subr.mxu0 0.0
    %1599 = vmatpush1.xpose.msra.mxu0 0.0
    %1600 = vmatprep.subr.mxu0 0.0
    %1601 = vmatpush1.xpose.msra.mxu0 0.0
    %1602 = vmatprep.subr.mxu0 0.0
    %1603 = vmatpush1.xpose.msra.mxu0 0.0
    %1604 = vmatprep.subr.mxu0 0.0
    %1605 = vmatpush1.xpose.msra.mxu0 0.0
    %1606 = vmatprep.subr.mxu0 0.0
    %1607 = vmatpush1.xpose.msra.mxu0 0.0
    %1608 = vmatprep.subr.mxu0 0.0
    %1609 = vmatpush1.xpose.msra.mxu0 0.0
    %1610 = vmatprep.subr.mxu0 0.0
    %1611 = vmatpush1.xpose.msra.mxu0 0.0
    %1612 = vmatprep.subr.mxu0 0.0
    %1613 = vmatpush1.xpose.msra.mxu0 0.0
    %1614 = vmatprep.subr.mxu0 0.0
    %1615 = vmatpush1.xpose.msra.mxu0 0.0
    %1616 = vmatprep.subr.mxu0 0.0
    %1617 = vmatpush1.xpose.msra.mxu0 0.0
    %1618 = vmatprep.subr.mxu0 0.0
    %1619 = vmatpush1.xpose.msra.mxu0 0.0
    %1620 = vmatprep.subr.mxu0 0.0
    %1621 = vmatpush1.xpose.msra.mxu0 0.0
    %1622 = vmatprep.subr.mxu0 0.0
    %1623 = vmatpush1.xpose.msra.mxu0 0.0
    %1624 = vmatprep.subr.mxu0 0.0
    %1625 = vmatpush1.xpose.msra.mxu0 0.0
    %1626 = vmatprep.subr.mxu0 0.0
    %1627 = vmatpush1.xpose.msra.mxu0 0.0
    %1628 = vmatprep.subr.mxu0 0.0
    %1629 = vmatpush1.xpose.msra.mxu0 0.0
    %1630 = vmatprep.subr.mxu0 0.0
    %1631 = vmatpush1.xpose.msra.mxu0 0.0
    %1632 = vmatprep.subr.mxu0 0.0
    %1633 = vmatpush1.xpose.msra.mxu0 0.0
    %1634 = vmatprep.subr.mxu0 0.0
    %1635 = vmatpush1.xpose.msra.mxu0 0.0
    %1636 = vmatprep.subr.mxu0 0.0
    %1637 = vmatpush1.xpose.msra.mxu0 0.0
    %1638 = vmatprep.subr.mxu0 0.0
    %1639 = vmatpush1.xpose.msra.mxu0 0.0
    %1640 = vmatprep.mubr.f32.mxu0 0.0
    %1641 = vmatmul.mubr.f32.gmra.mrb[0].mxu0 %v1572
    %v1642 = vpop.f32.mrb[0].mxu0
    %v1643 = vadd.f32 0.0, %v1642
    %v1644 = vpop.f32.mrb[0].mxu0
    %1645 = vdwg.mxu0
    %1646 = vrot.lane.b32.xlu0 %v1561, 96
    %v1647 = vpop.permute.xlu0 %1646
    %v1648 = vsel %vm399, %v1561, 0
    %v1650 = vsel %vm399, %v1647, 0
    %1652 = vmatprep.subr.mxu0 0.0
    %1653 = vmatpush1.xpose.msra.mxu0 %v1650
    %1654 = vmatprep.subr.mxu0 0.0
    %1655 = vmatpush1.xpose.msra.mxu0 0.0
    %1656 = vmatprep.subr.mxu0 0.0
    %1657 = vmatpush1.xpose.msra.mxu0 0.0
    %1658 = vmatprep.subr.mxu0 0.0
    %1659 = vmatpush1.xpose.msra.mxu0 0.0
    %1660 = vmatprep.subr.mxu0 0.0
    %1661 = vmatpush1.xpose.msra.mxu0 0.0
    %1662 = vmatprep.subr.mxu0 0.0
    %1663 = vmatpush1.xpose.msra.mxu0 0.0
    %1664 = vmatprep.subr.mxu0 0.0
    %1665 = vmatpush1.xpose.msra.mxu0 0.0
    %1666 = vmatprep.subr.mxu0 0.0
    %1667 = vmatpush1.xpose.msra.mxu0 0.0
    %1668 = vmatprep.subr.mxu0 0.0
    %1669 = vmatpush1.xpose.msra.mxu0 0.0
    %1670 = vmatprep.subr.mxu0 0.0
    %1671 = vmatpush1.xpose.msra.mxu0 0.0
    %1672 = vmatprep.subr.mxu0 0.0
    %1673 = vmatpush1.xpose.msra.mxu0 0.0
    %1674 = vmatprep.subr.mxu0 0.0
    %1675 = vmatpush1.xpose.msra.mxu0 0.0
    %1676 = vmatprep.subr.mxu0 0.0
    %1677 = vmatpush1.xpose.msra.mxu0 0.0
    %1678 = vmatprep.subr.mxu0 0.0
    %1679 = vmatpush1.xpose.msra.mxu0 0.0
    %1680 = vmatprep.subr.mxu0 0.0
    %1681 = vmatpush1.xpose.msra.mxu0 0.0
    %1682 = vmatprep.subr.mxu0 0.0
    %1683 = vmatpush1.xpose.msra.mxu0 0.0
    %1684 = vmatprep.subr.mxu0 0.0
    %1685 = vmatpush1.xpose.msra.mxu0 0.0
    %1686 = vmatprep.subr.mxu0 0.0
    %1687 = vmatpush1.xpose.msra.mxu0 0.0
    %1688 = vmatprep.subr.mxu0 0.0
    %1689 = vmatpush1.xpose.msra.mxu0 0.0
    %1690 = vmatprep.subr.mxu0 0.0
    %1691 = vmatpush1.xpose.msra.mxu0 0.0
    %1692 = vmatprep.subr.mxu0 0.0
    %1693 = vmatpush1.xpose.msra.mxu0 0.0
    %1694 = vmatprep.subr.mxu0 0.0
    %1695 = vmatpush1.xpose.msra.mxu0 0.0
    %1696 = vmatprep.subr.mxu0 0.0
    %1697 = vmatpush1.xpose.msra.mxu0 0.0
    %1698 = vmatprep.subr.mxu0 0.0
    %1699 = vmatpush1.xpose.msra.mxu0 0.0
    %1700 = vmatprep.subr.mxu0 0.0
    %1701 = vmatpush1.xpose.msra.mxu0 0.0
    %1702 = vmatprep.subr.mxu0 0.0
    %1703 = vmatpush1.xpose.msra.mxu0 0.0
    %1704 = vmatprep.subr.mxu0 0.0
    %1705 = vmatpush1.xpose.msra.mxu0 0.0
    %1706 = vmatprep.subr.mxu0 0.0
    %1707 = vmatpush1.xpose.msra.mxu0 0.0
    %1708 = vmatprep.subr.mxu0 0.0
    %1709 = vmatpush1.xpose.msra.mxu0 0.0
    %1710 = vmatprep.subr.mxu0 0.0
    %1711 = vmatpush1.xpose.msra.mxu0 0.0
    %1712 = vmatprep.subr.mxu0 0.0
    %1713 = vmatpush1.xpose.msra.mxu0 0.0
    %1714 = vmatprep.subr.mxu0 0.0
    %1715 = vmatpush1.xpose.msra.mxu0 0.0
    %1716 = vmatprep.mubr.f32.mxu0 0.0
    %1717 = vmatmul.mubr.f32.gmra.mrb[0].mxu0 %v1648
    %v1718 = vpop.f32.mrb[0].mxu0
    %v1719 = vadd.f32 0.0, %v1718
    %v1720 = vpop.f32.mrb[0].mxu0
    %1721 = vdwg.mxu0
    %1722 = vrot.lane.b32.xlu0 %v1567, 96
    %v1723 = vpop.permute.xlu0 %1722
    %v1724 = vsel %vm399, %v1567, 0
    %v1726 = vsel %vm399, %v1723, 0
    %1728 = vmatprep.subr.mxu0 0.0
    %1729 = vmatpush1.xpose.msra.mxu0 %v1726
    %1730 = vmatprep.subr.mxu0 0.0
    %1731 = vmatpush1.xpose.msra.mxu0 0.0
    %1732 = vmatprep.subr.mxu0 0.0
    %1733 = vmatpush1.xpose.msra.mxu0 0.0
    %1734 = vmatprep.subr.mxu0 0.0
    %1735 = vmatpush1.xpose.msra.mxu0 0.0
    %1736 = vmatprep.subr.mxu0 0.0
    %1737 = vmatpush1.xpose.msra.mxu0 0.0
    %1738 = vmatprep.subr.mxu0 0.0
    %1739 = vmatpush1.xpose.msra.mxu0 0.0
    %1740 = vmatprep.subr.mxu0 0.0
    %1741 = vmatpush1.xpose.msra.mxu0 0.0
    %1742 = vmatprep.subr.mxu0 0.0
    %1743 = vmatpush1.xpose.msra.mxu0 0.0
    %1744 = vmatprep.subr.mxu0 0.0
    %1745 = vmatpush1.xpose.msra.mxu0 0.0
    %1746 = vmatprep.subr.mxu0 0.0
    %1747 = vmatpush1.xpose.msra.mxu0 0.0
    %1748 = vmatprep.subr.mxu0 0.0
    %1749 = vmatpush1.xpose.msra.mxu0 0.0
    %1750 = vmatprep.subr.mxu0 0.0
    %1751 = vmatpush1.xpose.msra.mxu0 0.0
    %1752 = vmatprep.subr.mxu0 0.0
    %1753 = vmatpush1.xpose.msra.mxu0 0.0
    %1754 = vmatprep.subr.mxu0 0.0
    %1755 = vmatpush1.xpose.msra.mxu0 0.0
    %1756 = vmatprep.subr.mxu0 0.0
    %1757 = vmatpush1.xpose.msra.mxu0 0.0
    %1758 = vmatprep.subr.mxu0 0.0
    %1759 = vmatpush1.xpose.msra.mxu0 0.0
    %1760 = vmatprep.subr.mxu0 0.0
    %1761 = vmatpush1.xpose.msra.mxu0 0.0
    %1762 = vmatprep.subr.mxu0 0.0
    %1763 = vmatpush1.xpose.msra.mxu0 0.0
    %1764 = vmatprep.subr.mxu0 0.0
    %1765 = vmatpush1.xpose.msra.mxu0 0.0
    %1766 = vmatprep.subr.mxu0 0.0
    %1767 = vmatpush1.xpose.msra.mxu0 0.0
    %1768 = vmatprep.subr.mxu0 0.0
    %1769 = vmatpush1.xpose.msra.mxu0 0.0
    %1770 = vmatprep.subr.mxu0 0.0
    %1771 = vmatpush1.xpose.msra.mxu0 0.0
    %1772 = vmatprep.subr.mxu0 0.0
    %1773 = vmatpush1.xpose.msra.mxu0 0.0
    %1774 = vmatprep.subr.mxu0 0.0
    %1775 = vmatpush1.xpose.msra.mxu0 0.0
    %1776 = vmatprep.subr.mxu0 0.0
    %1777 = vmatpush1.xpose.msra.mxu0 0.0
    %1778 = vmatprep.subr.mxu0 0.0
    %1779 = vmatpush1.xpose.msra.mxu0 0.0
    %1780 = vmatprep.subr.mxu0 0.0
    %1781 = vmatpush1.xpose.msra.mxu0 0.0
    %1782 = vmatprep.subr.mxu0 0.0
    %1783 = vmatpush1.xpose.msra.mxu0 0.0
    %1784 = vmatprep.subr.mxu0 0.0
    %1785 = vmatpush1.xpose.msra.mxu0 0.0
    %1786 = vmatprep.subr.mxu0 0.0
    %1787 = vmatpush1.xpose.msra.mxu0 0.0
    %1788 = vmatprep.subr.mxu0 0.0
    %1789 = vmatpush1.xpose.msra.mxu0 0.0
    %1790 = vmatprep.subr.mxu0 0.0
    %1791 = vmatpush1.xpose.msra.mxu0 0.0
    %1792 = vmatprep.mubr.f32.mxu0 0.0
    %1793 = vmatmul.mubr.f32.gmra.mrb[0].mxu0 %v1724
    %v1794 = vpop.f32.mrb[0].mxu0
    %v1795 = vadd.f32 0.0, %v1794
    %v1796 = vpop.f32.mrb[0].mxu0
    %1797 = vdwg.mxu0
    %1798 = vrot.lane.b32.xlu0 %v1569, 96
    %v1799 = vpop.permute.xlu0 %1798
    %v1800 = vsel %vm399, %v1569, 0
    %v1802 = vsel %vm399, %v1799, 0
    %1804 = vmatprep.subr.mxu0 0.0
    %1805 = vmatpush1.xpose.msra.mxu0 %v1802
    %1806 = vmatprep.subr.mxu0 0.0
    %1807 = vmatpush1.xpose.msra.mxu0 0.0
    %1808 = vmatprep.subr.mxu0 0.0
    %1809 = vmatpush1.xpose.msra.mxu0 0.0
    %1810 = vmatprep.subr.mxu0 0.0
    %1811 = vmatpush1.xpose.msra.mxu0 0.0
    %1812 = vmatprep.subr.mxu0 0.0
    %1813 = vmatpush1.xpose.msra.mxu0 0.0
    %1814 = vmatprep.subr.mxu0 0.0
    %1815 = vmatpush1.xpose.msra.mxu0 0.0
    %1816 = vmatprep.subr.mxu0 0.0
    %1817 = vmatpush1.xpose.msra.mxu0 0.0
    %1818 = vmatprep.subr.mxu0 0.0
    %1819 = vmatpush1.xpose.msra.mxu0 0.0
    %1820 = vmatprep.subr.mxu0 0.0
    %1821 = vmatpush1.xpose.msra.mxu0 0.0
    %1822 = vmatprep.subr.mxu0 0.0
    %1823 = vmatpush1.xpose.msra.mxu0 0.0
    %1824 = vmatprep.subr.mxu0 0.0
    %1825 = vmatpush1.xpose.msra.mxu0 0.0
    %1826 = vmatprep.subr.mxu0 0.0
    %1827 = vmatpush1.xpose.msra.mxu0 0.0
    %1828 = vmatprep.subr.mxu0 0.0
    %1829 = vmatpush1.xpose.msra.mxu0 0.0
    %1830 = vmatprep.subr.mxu0 0.0
    %1831 = vmatpush1.xpose.msra.mxu0 0.0
    %1832 = vmatprep.subr.mxu0 0.0
    %1833 = vmatpush1.xpose.msra.mxu0 0.0
    %1834 = vmatprep.subr.mxu0 0.0
    %1835 = vmatpush1.xpose.msra.mxu0 0.0
    %1836 = vmatprep.subr.mxu0 0.0
    %1837 = vmatpush1.xpose.msra.mxu0 0.0
    %1838 = vmatprep.subr.mxu0 0.0
    %1839 = vmatpush1.xpose.msra.mxu0 0.0
    %1840 = vmatprep.subr.mxu0 0.0
    %1841 = vmatpush1.xpose.msra.mxu0 0.0
    %1842 = vmatprep.subr.mxu0 0.0
    %1843 = vmatpush1.xpose.msra.mxu0 0.0
    %1844 = vmatprep.subr.mxu0 0.0
    %1845 = vmatpush1.xpose.msra.mxu0 0.0
    %1846 = vmatprep.subr.mxu0 0.0
    %1847 = vmatpush1.xpose.msra.mxu0 0.0
    %1848 = vmatprep.subr.mxu0 0.0
    %1849 = vmatpush1.xpose.msra.mxu0 0.0
    %1850 = vmatprep.subr.mxu0 0.0
    %1851 = vmatpush1.xpose.msra.mxu0 0.0
    %1852 = vmatprep.subr.mxu0 0.0
    %1853 = vmatpush1.xpose.msra.mxu0 0.0
    %1854 = vmatprep.subr.mxu0 0.0
    %1855 = vmatpush1.xpose.msra.mxu0 0.0
    %1856 = vmatprep.subr.mxu0 0.0
    %1857 = vmatpush1.xpose.msra.mxu0 0.0
    %1858 = vmatprep.subr.mxu0 0.0
    %1859 = vmatpush1.xpose.msra.mxu0 0.0
    %1860 = vmatprep.subr.mxu0 0.0
    %1861 = vmatpush1.xpose.msra.mxu0 0.0
    %1862 = vmatprep.subr.mxu0 0.0
    %1863 = vmatpush1.xpose.msra.mxu0 0.0
    %1864 = vmatprep.subr.mxu0 0.0
    %1865 = vmatpush1.xpose.msra.mxu0 0.0
    %1866 = vmatprep.subr.mxu0 0.0
    %1867 = vmatpush1.xpose.msra.mxu0 0.0
    %1868 = vmatprep.mubr.f32.mxu0 0.0
    %1869 = vmatmul.mubr.f32.gmra.mrb[0].mxu0 %v1800
    %v1870 = vpop.f32.mrb[0].mxu0
    %v1871 = vadd.f32 0.0, %v1870
    %v1872 = vpop.f32.mrb[0].mxu0
    %1873 = vdwg.mxu0
    %v1874 = vmul.f32 %v1643, 0.25
    %v1875 = vmul.f32 %v1719, 0.25
    %v1876 = vmul.f32 %v1795, 0.25
    %v1877 = vmul.f32 %v1871, 0.25
    %v1878 = vadd.f32 %v1874, %v709
    %v1879 = vadd.f32 %v1875, %v713
    %v1880 = vadd.f32 %v1876, %v709
    %v1881 = vadd.f32 %v1877, %v713
    %v1882 = vsel %vm720, %v1878, -inf
    %1883 = vmax.xlane.f32.xlu0 %v1882
    %v1884 = vpop.xlane.xlu0 %1883
    %v1885 = vsel %vm720, %v1879, -inf
    %1886 = vmax.xlane.f32.xlu0 %v1885
    %v1887 = vpop.xlane.xlu0 %1886
    %v1888 = vsel %vm720, %v1880, -inf
    %1889 = vmax.xlane.f32.xlu0 %v1888
    %v1890 = vpop.xlane.xlu0 %1889
    %v1891 = vsel %vm720, %v1881, -inf
    %1892 = vmax.xlane.f32.xlu0 %v1891
    %v1893 = vpop.xlane.xlu0 %1892
    %v1894 = vsub.f32 %v1878, %v1884
    %v1895 = vsub.f32 %v1879, %v1887
    %v1896 = vsub.f32 %v1880, %v1890
    %v1897 = vsub.f32 %v1881, %v1893
    %v1898 = vmul.f32 %v1894, 1.442695
    %v1899 = vpow.pop %v1898
    %v1900 = vmul.f32 %v1895, 1.442695
    %v1901 = vpow.pop %v1900
    %v1902 = vmul.f32 %v1896, 1.442695
    %v1903 = vpow.pop %v1902
    %v1904 = vmul.f32 %v1897, 1.442695
    %v1905 = vpow.pop %v1904
    %v1906 = vsel %vm720, %v1899, 0.0
    %1907 = vadd.xlane.f32.xlu0 %v1906
    %v1908 = vpop.xlane.xlu0 %1907
    %v1909 = vsel %vm720, %v1901, 0.0
    %1910 = vadd.xlane.f32.xlu0 %v1909
    %v1911 = vpop.xlane.xlu0 %1910
    %v1912 = vsel %vm720, %v1903, 0.0
    %1913 = vadd.xlane.f32.xlu0 %v1912
    %v1914 = vpop.xlane.xlu0 %1913
    %v1915 = vsel %vm720, %v1905, 0.0
    %1916 = vadd.xlane.f32.xlu0 %v1915
    %v1917 = vpop.xlane.xlu0 %1916
    %v1918 = vrcp.pop %v1908
    %v1919 = vrcp.pop %v1911
    %v1920 = vrcp.pop %v1914
    %v1921 = vrcp.pop %v1917
    %v1922 = vmul.f32 %v1899, %v1918
    %v1923 = vmul.f32 %v1901, %v1919
    %v1924 = vmul.f32 %v1903, %v1920
    %v1925 = vmul.f32 %v1905, %v1921
    %1926 = vrot.lane.b32.xlu0 %v1556, 64
    %v1927 = vpop.permute.xlu0 %1926
    %v1930 = vsel %vm720, %v1922, 0
    %1932 = vmatprep.subr.mxu0 0.0
    %1933 = vmatpush1.msra.mxu0 %v1927
    %1934 = vmatprep.subr.mxu0 0.0
    %1935 = vmatpush1.msra.mxu0 0.0
    %1936 = vmatprep.subr.mxu0 0.0
    %1937 = vmatpush1.msra.mxu0 0.0
    %1938 = vmatprep.subr.mxu0 0.0
    %1939 = vmatpush1.msra.mxu0 0.0
    %1940 = vmatprep.subr.mxu0 0.0
    %1941 = vmatpush1.msra.mxu0 0.0
    %1942 = vmatprep.subr.mxu0 0.0
    %1943 = vmatpush1.msra.mxu0 0.0
    %1944 = vmatprep.subr.mxu0 0.0
    %1945 = vmatpush1.msra.mxu0 0.0
    %1946 = vmatprep.subr.mxu0 0.0
    %1947 = vmatpush1.msra.mxu0 0.0
    %1948 = vmatprep.subr.mxu0 0.0
    %1949 = vmatpush1.msra.mxu0 0.0
    %1950 = vmatprep.subr.mxu0 0.0
    %1951 = vmatpush1.msra.mxu0 0.0
    %1952 = vmatprep.subr.mxu0 0.0
    %1953 = vmatpush1.msra.mxu0 0.0
    %1954 = vmatprep.subr.mxu0 0.0
    %1955 = vmatpush1.msra.mxu0 0.0
    %1956 = vmatprep.subr.mxu0 0.0
    %1957 = vmatpush1.msra.mxu0 0.0
    %1958 = vmatprep.subr.mxu0 0.0
    %1959 = vmatpush1.msra.mxu0 0.0
    %1960 = vmatprep.subr.mxu0 0.0
    %1961 = vmatpush1.msra.mxu0 0.0
    %1962 = vmatprep.subr.mxu0 0.0
    %1963 = vmatpush1.msra.mxu0 0.0
    %1964 = vmatprep.subr.mxu0 0.0
    %1965 = vmatpush1.msra.mxu0 0.0
    %1966 = vmatprep.subr.mxu0 0.0
    %1967 = vmatpush1.msra.mxu0 0.0
    %1968 = vmatprep.subr.mxu0 0.0
    %1969 = vmatpush1.msra.mxu0 0.0
    %1970 = vmatprep.subr.mxu0 0.0
    %1971 = vmatpush1.msra.mxu0 0.0
    %1972 = vmatprep.subr.mxu0 0.0
    %1973 = vmatpush1.msra.mxu0 0.0
    %1974 = vmatprep.subr.mxu0 0.0
    %1975 = vmatpush1.msra.mxu0 0.0
    %1976 = vmatprep.subr.mxu0 0.0
    %1977 = vmatpush1.msra.mxu0 0.0
    %1978 = vmatprep.subr.mxu0 0.0
    %1979 = vmatpush1.msra.mxu0 0.0
    %1980 = vmatprep.subr.mxu0 0.0
    %1981 = vmatpush1.msra.mxu0 0.0
    %1982 = vmatprep.subr.mxu0 0.0
    %1983 = vmatpush1.msra.mxu0 0.0
    %1984 = vmatprep.subr.mxu0 0.0
    %1985 = vmatpush1.msra.mxu0 0.0
    %1986 = vmatprep.subr.mxu0 0.0
    %1987 = vmatpush1.msra.mxu0 0.0
    %1988 = vmatprep.subr.mxu0 0.0
    %1989 = vmatpush1.msra.mxu0 0.0
    %1990 = vmatprep.subr.mxu0 0.0
    %1991 = vmatpush1.msra.mxu0 0.0
    %1992 = vmatprep.subr.mxu0 0.0
    %1993 = vmatpush1.msra.mxu0 0.0
    %1994 = vmatprep.subr.mxu0 0.0
    %1995 = vmatpush1.msra.mxu0 0.0
    %1996 = vmatprep.mubr.f32.mxu0 0.0
    %1997 = vmatmul.mubr.f32.gmra.mrb[0].mxu0 %v1930
    %v1998 = vpop.f32.mrb[0].mxu0
    %v1999 = vadd.f32 0.0, %v1998
    %v2000 = vpop.f32.mrb[0].mxu0
    %2001 = vdwg.mxu0
    %2002 = vrot.lane.b32.xlu0 %v1561, 64
    %v2003 = vpop.permute.xlu0 %2002
    %v2006 = vsel %vm720, %v1923, 0
    %2008 = vmatprep.subr.mxu0 0.0
    %2009 = vmatpush1.msra.mxu0 %v2003
    %2010 = vmatprep.subr.mxu0 0.0
    %2011 = vmatpush1.msra.mxu0 0.0
    %2012 = vmatprep.subr.mxu0 0.0
    %2013 = vmatpush1.msra.mxu0 0.0
    %2014 = vmatprep.subr.mxu0 0.0
    %2015 = vmatpush1.msra.mxu0 0.0
    %2016 = vmatprep.subr.mxu0 0.0
    %2017 = vmatpush1.msra.mxu0 0.0
    %2018 = vmatprep.subr.mxu0 0.0
    %2019 = vmatpush1.msra.mxu0 0.0
    %2020 = vmatprep.subr.mxu0 0.0
    %2021 = vmatpush1.msra.mxu0 0.0
    %2022 = vmatprep.subr.mxu0 0.0
    %2023 = vmatpush1.msra.mxu0 0.0
    %2024 = vmatprep.subr.mxu0 0.0
    %2025 = vmatpush1.msra.mxu0 0.0
    %2026 = vmatprep.subr.mxu0 0.0
    %2027 = vmatpush1.msra.mxu0 0.0
    %2028 = vmatprep.subr.mxu0 0.0
    %2029 = vmatpush1.msra.mxu0 0.0
    %2030 = vmatprep.subr.mxu0 0.0
    %2031 = vmatpush1.msra.mxu0 0.0
    %2032 = vmatprep.subr.mxu0 0.0
    %2033 = vmatpush1.msra.mxu0 0.0
    %2034 = vmatprep.subr.mxu0 0.0
    %2035 = vmatpush1.msra.mxu0 0.0
    %2036 = vmatprep.subr.mxu0 0.0
    %2037 = vmatpush1.msra.mxu0 0.0
    %2038 = vmatprep.subr.mxu0 0.0
    %2039 = vmatpush1.msra.mxu0 0.0
    %2040 = vmatprep.subr.mxu0 0.0
    %2041 = vmatpush1.msra.mxu0 0.0
    %2042 = vmatprep.subr.mxu0 0.0
    %2043 = vmatpush1.msra.mxu0 0.0
    %2044 = vmatprep.subr.mxu0 0.0
    %2045 = vmatpush1.msra.mxu0 0.0
    %2046 = vmatprep.subr.mxu0 0.0
    %2047 = vmatpush1.msra.mxu0 0.0
    %2048 = vmatprep.subr.mxu0 0.0
    %2049 = vmatpush1.msra.mxu0 0.0
    %2050 = vmatprep.subr.mxu0 0.0
    %2051 = vmatpush1.msra.mxu0 0.0
    %2052 = vmatprep.subr.mxu0 0.0
    %2053 = vmatpush1.msra.mxu0 0.0
    %2054 = vmatprep.subr.mxu0 0.0
    %2055 = vmatpush1.msra.mxu0 0.0
    %2056 = vmatprep.subr.mxu0 0.0
    %2057 = vmatpush1.msra.mxu0 0.0
    %2058 = vmatprep.subr.mxu0 0.0
    %2059 = vmatpush1.msra.mxu0 0.0
    %2060 = vmatprep.subr.mxu0 0.0
    %2061 = vmatpush1.msra.mxu0 0.0
    %2062 = vmatprep.subr.mxu0 0.0
    %2063 = vmatpush1.msra.mxu0 0.0
    %2064 = vmatprep.subr.mxu0 0.0
    %2065 = vmatpush1.msra.mxu0 0.0
    %2066 = vmatprep.subr.mxu0 0.0
    %2067 = vmatpush1.msra.mxu0 0.0
    %2068 = vmatprep.subr.mxu0 0.0
    %2069 = vmatpush1.msra.mxu0 0.0
    %2070 = vmatprep.subr.mxu0 0.0
    %2071 = vmatpush1.msra.mxu0 0.0
    %2072 = vmatprep.mubr.f32.mxu0 0.0
    %2073 = vmatmul.mubr.f32.gmra.mrb[0].mxu0 %v2006
    %v2074 = vpop.f32.mrb[0].mxu0
    %v2075 = vadd.f32 0.0, %v2074
    %v2076 = vpop.f32.mrb[0].mxu0
    %2077 = vdwg.mxu0
    %2078 = vrot.lane.b32.xlu0 %v1567, 64
    %v2079 = vpop.permute.xlu0 %2078
    %v2082 = vsel %vm720, %v1924, 0
    %2084 = vmatprep.subr.mxu0 0.0
    %2085 = vmatpush1.msra.mxu0 %v2079
    %2086 = vmatprep.subr.mxu0 0.0
    %2087 = vmatpush1.msra.mxu0 0.0
    %2088 = vmatprep.subr.mxu0 0.0
    %2089 = vmatpush1.msra.mxu0 0.0
    %2090 = vmatprep.subr.mxu0 0.0
    %2091 = vmatpush1.msra.mxu0 0.0
    %2092 = vmatprep.subr.mxu0 0.0
    %2093 = vmatpush1.msra.mxu0 0.0
    %2094 = vmatprep.subr.mxu0 0.0
    %2095 = vmatpush1.msra.mxu0 0.0
    %2096 = vmatprep.subr.mxu0 0.0
    %2097 = vmatpush1.msra.mxu0 0.0
    %2098 = vmatprep.subr.mxu0 0.0
    %2099 = vmatpush1.msra.mxu0 0.0
    %2100 = vmatprep.subr.mxu0 0.0
    %2101 = vmatpush1.msra.mxu0 0.0
    %2102 = vmatprep.subr.mxu0 0.0
    %2103 = vmatpush1.msra.mxu0 0.0
    %2104 = vmatprep.subr.mxu0 0.0
    %2105 = vmatpush1.msra.mxu0 0.0
    %2106 = vmatprep.subr.mxu0 0.0
    %2107 = vmatpush1.msra.mxu0 0.0
    %2108 = vmatprep.subr.mxu0 0.0
    %2109 = vmatpush1.msra.mxu0 0.0
    %2110 = vmatprep.subr.mxu0 0.0
    %2111 = vmatpush1.msra.mxu0 0.0
    %2112 = vmatprep.subr.mxu0 0.0
    %2113 = vmatpush1.msra.mxu0 0.0
    %2114 = vmatprep.subr.mxu0 0.0
    %2115 = vmatpush1.msra.mxu0 0.0
    %2116 = vmatprep.subr.mxu0 0.0
    %2117 = vmatpush1.msra.mxu0 0.0
    %2118 = vmatprep.subr.mxu0 0.0
    %2119 = vmatpush1.msra.mxu0 0.0
    %2120 = vmatprep.subr.mxu0 0.0
    %2121 = vmatpush1.msra.mxu0 0.0
    %2122 = vmatprep.subr.mxu0 0.0
    %2123 = vmatpush1.msra.mxu0 0.0
    %2124 = vmatprep.subr.mxu0 0.0
    %2125 = vmatpush1.msra.mxu0 0.0
    %2126 = vmatprep.subr.mxu0 0.0
    %2127 = vmatpush1.msra.mxu0 0.0
    %2128 = vmatprep.subr.mxu0 0.0
    %2129 = vmatpush1.msra.mxu0 0.0
    %2130 = vmatprep.subr.mxu0 0.0
    %2131 = vmatpush1.msra.mxu0 0.0
    %2132 = vmatprep.subr.mxu0 0.0
    %2133 = vmatpush1.msra.mxu0 0.0
    %2134 = vmatprep.subr.mxu0 0.0
    %2135 = vmatpush1.msra.mxu0 0.0
    %2136 = vmatprep.subr.mxu0 0.0
    %2137 = vmatpush1.msra.mxu0 0.0
    %2138 = vmatprep.subr.mxu0 0.0
    %2139 = vmatpush1.msra.mxu0 0.0
    %2140 = vmatprep.subr.mxu0 0.0
    %2141 = vmatpush1.msra.mxu0 0.0
    %2142 = vmatprep.subr.mxu0 0.0
    %2143 = vmatpush1.msra.mxu0 0.0
    %2144 = vmatprep.subr.mxu0 0.0
    %2145 = vmatpush1.msra.mxu0 0.0
    %2146 = vmatprep.subr.mxu0 0.0
    %2147 = vmatpush1.msra.mxu0 0.0
    %2148 = vmatprep.mubr.f32.mxu0 0.0
    %2149 = vmatmul.mubr.f32.gmra.mrb[0].mxu0 %v2082
    %v2150 = vpop.f32.mrb[0].mxu0
    %v2151 = vadd.f32 0.0, %v2150
    %v2152 = vpop.f32.mrb[0].mxu0
    %2153 = vdwg.mxu0
    %2154 = vrot.lane.b32.xlu0 %v1569, 64
    %v2155 = vpop.permute.xlu0 %2154
    %v2158 = vsel %vm720, %v1925, 0
    %2160 = vmatprep.subr.mxu0 0.0
    %2161 = vmatpush1.msra.mxu0 %v2155
    %2162 = vmatprep.subr.mxu0 0.0
    %2163 = vmatpush1.msra.mxu0 0.0
    %2164 = vmatprep.subr.mxu0 0.0
    %2165 = vmatpush1.msra.mxu0 0.0
    %2166 = vmatprep.subr.mxu0 0.0
    %2167 = vmatpush1.msra.mxu0 0.0
    %2168 = vmatprep.subr.mxu0 0.0
    %2169 = vmatpush1.msra.mxu0 0.0
    %2170 = vmatprep.subr.mxu0 0.0
    %2171 = vmatpush1.msra.mxu0 0.0
    %2172 = vmatprep.subr.mxu0 0.0
    %2173 = vmatpush1.msra.mxu0 0.0
    %2174 = vmatprep.subr.mxu0 0.0
    %2175 = vmatpush1.msra.mxu0 0.0
    %2176 = vmatprep.subr.mxu0 0.0
    %2177 = vmatpush1.msra.mxu0 0.0
    %2178 = vmatprep.subr.mxu0 0.0
    %2179 = vmatpush1.msra.mxu0 0.0
    %2180 = vmatprep.subr.mxu0 0.0
    %2181 = vmatpush1.msra.mxu0 0.0
    %2182 = vmatprep.subr.mxu0 0.0
    %2183 = vmatpush1.msra.mxu0 0.0
    %2184 = vmatprep.subr.mxu0 0.0
    %2185 = vmatpush1.msra.mxu0 0.0
    %2186 = vmatprep.subr.mxu0 0.0
    %2187 = vmatpush1.msra.mxu0 0.0
    %2188 = vmatprep.subr.mxu0 0.0
    %2189 = vmatpush1.msra.mxu0 0.0
    %2190 = vmatprep.subr.mxu0 0.0
    %2191 = vmatpush1.msra.mxu0 0.0
    %2192 = vmatprep.subr.mxu0 0.0
    %2193 = vmatpush1.msra.mxu0 0.0
    %2194 = vmatprep.subr.mxu0 0.0
    %2195 = vmatpush1.msra.mxu0 0.0
    %2196 = vmatprep.subr.mxu0 0.0
    %2197 = vmatpush1.msra.mxu0 0.0
    %2198 = vmatprep.subr.mxu0 0.0
    %2199 = vmatpush1.msra.mxu0 0.0
    %2200 = vmatprep.subr.mxu0 0.0
    %2201 = vmatpush1.msra.mxu0 0.0
    %2202 = vmatprep.subr.mxu0 0.0
    %2203 = vmatpush1.msra.mxu0 0.0
    %2204 = vmatprep.subr.mxu0 0.0
    %2205 = vmatpush1.msra.mxu0 0.0
    %2206 = vmatprep.subr.mxu0 0.0
    %2207 = vmatpush1.msra.mxu0 0.0
    %2208 = vmatprep.subr.mxu0 0.0
    %2209 = vmatpush1.msra.mxu0 0.0
    %2210 = vmatprep.subr.mxu0 0.0
    %2211 = vmatpush1.msra.mxu0 0.0
    %2212 = vmatprep.subr.mxu0 0.0
    %2213 = vmatpush1.msra.mxu0 0.0
    %2214 = vmatprep.subr.mxu0 0.0
    %2215 = vmatpush1.msra.mxu0 0.0
    %2216 = vmatprep.subr.mxu0 0.0
    %2217 = vmatpush1.msra.mxu0 0.0
    %2218 = vmatprep.subr.mxu0 0.0
    %2219 = vmatpush1.msra.mxu0 0.0
    %2220 = vmatprep.subr.mxu0 0.0
    %2221 = vmatpush1.msra.mxu0 0.0
    %2222 = vmatprep.subr.mxu0 0.0
    %2223 = vmatpush1.msra.mxu0 0.0
    %2224 = vmatprep.mubr.f32.mxu0 0.0
    %2225 = vmatmul.mubr.f32.gmra.mrb[0].mxu0 %v2158
    %v2226 = vpop.f32.mrb[0].mxu0
    %v2227 = vadd.f32 0.0, %v2226
    %v2228 = vpop.f32.mrb[0].mxu0
    %2229 = vdwg.mxu0
    %2232 = vrot.lane.b32.xlu0 %v2151, 16
    %v2233 = vpop.permute.xlu0 %2232
    %2234 = vrot.lane.b32.xlu0 %v2227, 16
    %v2235 = vpop.permute.xlu0 %2234
    %v2238 = vsel %vm399, %v1999, %v2233
    %v2239 = vsel %vm399, %v2075, %v2235
    %s2240 = scalar_lea.vmem %s9, 32
    %v2241 = vld [vmem:[%s2240] sm:$0xff]
    %v2242 = vld [vmem:[%s2240 + $0x8] sm:$0xff]
    %v2243 = vld [vmem:[%s2240 + $0x10] sm:$0xff]
    %v2244 = vld [vmem:[%s2240 + $0x18] sm:$0xff]
    %s2245 = scalar_lea.vmem %s10, 1
    %v2246 = vld [vmem:[%s2245] sm:$0x1]
    %v2248 = vlaneseq
    %v2249 = vshrl.u32 %v2248, 7
    %v2250 = vsub.s32 0, %v2249
    %v2251 = vrot.slane %v2246, %v2250
    %v2254 = vsel %vm228, %v2238, 0
    %v2257 = vsel %vm228, %v2239, 0
    %2259 = vmatprep.subr.mxu0 0.0
    %2260 = vmatpush1.msra.mxu0 %v2241
    %2261 = vmatprep.subr.mxu0 0.0
    %2262 = vmatpush1.msra.mxu0 %v2242
    %2263 = vmatprep.subr.mxu0 0.0
    %2264 = vmatpush1.msra.mxu0 %v2243
    %2265 = vmatprep.subr.mxu0 0.0
    %2266 = vmatpush1.msra.mxu0 %v2244
    %2267 = vmatprep.subr.mxu0 0.0
    %2268 = vmatpush1.msra.mxu0 0.0
    %2269 = vmatprep.subr.mxu0 0.0
    %2270 = vmatpush1.msra.mxu0 0.0
    %2271 = vmatprep.subr.mxu0 0.0
    %2272 = vmatpush1.msra.mxu0 0.0
    %2273 = vmatprep.subr.mxu0 0.0
    %2274 = vmatpush1.msra.mxu0 0.0
    %2275 = vmatprep.subr.mxu0 0.0
    %2276 = vmatpush1.msra.mxu0 0.0
    %2277 = vmatprep.subr.mxu0 0.0
    %2278 = vmatpush1.msra.mxu0 0.0
    %2279 = vmatprep.subr.mxu0 0.0
    %2280 = vmatpush1.msra.mxu0 0.0
    %2281 = vmatprep.subr.mxu0 0.0
    %2282 = vmatpush1.msra.mxu0 0.0
    %2283 = vmatprep.subr.mxu0 0.0
    %2284 = vmatpush1.msra.mxu0 0.0
    %2285 = vmatprep.subr.mxu0 0.0
    %2286 = vmatpush1.msra.mxu0 0.0
    %2287 = vmatprep.subr.mxu0 0.0
    %2288 = vmatpush1.msra.mxu0 0.0
    %2289 = vmatprep.subr.mxu0 0.0
    %2290 = vmatpush1.msra.mxu0 0.0
    %2291 = vmatprep.subr.mxu0 0.0
    %2292 = vmatpush1.msra.mxu0 0.0
    %2293 = vmatprep.subr.mxu0 0.0
    %2294 = vmatpush1.msra.mxu0 0.0
    %2295 = vmatprep.subr.mxu0 0.0
    %2296 = vmatpush1.msra.mxu0 0.0
    %2297 = vmatprep.subr.mxu0 0.0
    %2298 = vmatpush1.msra.mxu0 0.0
    %2299 = vmatprep.subr.mxu0 0.0
    %2300 = vmatpush1.msra.mxu0 0.0
    %2301 = vmatprep.subr.mxu0 0.0
    %2302 = vmatpush1.msra.mxu0 0.0
    %2303 = vmatprep.subr.mxu0 0.0
    %2304 = vmatpush1.msra.mxu0 0.0
    %2305 = vmatprep.subr.mxu0 0.0
    %2306 = vmatpush1.msra.mxu0 0.0
    %2307 = vmatprep.subr.mxu0 0.0
    %2308 = vmatpush1.msra.mxu0 0.0
    %2309 = vmatprep.subr.mxu0 0.0
    %2310 = vmatpush1.msra.mxu0 0.0
    %2311 = vmatprep.subr.mxu0 0.0
    %2312 = vmatpush1.msra.mxu0 0.0
    %2313 = vmatprep.subr.mxu0 0.0
    %2314 = vmatpush1.msra.mxu0 0.0
    %2315 = vmatprep.subr.mxu0 0.0
    %2316 = vmatpush1.msra.mxu0 0.0
    %2317 = vmatprep.subr.mxu0 0.0
    %2318 = vmatpush1.msra.mxu0 0.0
    %2319 = vmatprep.subr.mxu0 0.0
    %2320 = vmatpush1.msra.mxu0 0.0
    %2321 = vmatprep.subr.mxu0 0.0
    %2322 = vmatpush1.msra.mxu0 0.0
    %2323 = vmatprep.mubr.f32.mxu0 0.0
    %2324 = vmatmul.mubr.f32.gmra.mrb[0].mxu0 %v2254
    %v2325 = vpop.f32.mrb[0].mxu0
    %v2326 = vadd.f32 %v2251, %v2325
    %v2327 = vpop.f32.mrb[0].mxu0
    %2328 = vmatprep.mubr.f32.mxu0 0.0
    %2329 = vmatmul.mubr.f32.gmra.mrb[0].mxu0 %v2257
    %v2330 = vpop.f32.mrb[0].mxu0
    %v2331 = vadd.f32 %v2251, %v2330
    %v2332 = vpop.f32.mrb[0].mxu0
    %2333 = vdwg.mxu0
    %v2334 = vadd.f32 %v1468, %v2326
    %v2335 = vadd.f32 %v1469, %v2331
    %s2336 = scalar_lea.vmem %s11, 1
    %v2337 = vld [vmem:[%s2336] sm:$0x1]
    %s2338 = scalar_lea.vmem %s12, 1
    %v2339 = vld [vmem:[%s2338] sm:$0x1]
    %v2340 = vsel %vm228, %v2334, 0.0
    %2341 = vadd.xlane.f32.xlu0 %v2340
    %v2342 = vpop.xlane.xlu0 %2341
    %v2343 = vsel %vm228, %v2335, 0.0
    %2344 = vadd.xlane.f32.xlu0 %v2343
    %v2345 = vpop.xlane.xlu0 %2344
    %v2346 = vmul.f32 %v2342, %v235
    %v2347 = vmul.f32 %v2345, %v235
    %v2348 = vsub.f32 %v2334, %v2346
    %v2349 = vsub.f32 %v2335, %v2347
    %v2350 = vmul.f32 %v2348, %v2348
    %v2351 = vmul.f32 %v2349, %v2349
    %v2352 = vsel %vm228, %v2350, 0.0
    %2353 = vadd.xlane.f32.xlu0 %v2352
    %v2354 = vpop.xlane.xlu0 %2353
    %v2355 = vsel %vm228, %v2351, 0.0
    %2356 = vadd.xlane.f32.xlu0 %v2355
    %v2357 = vpop.xlane.xlu0 %2356
    %v2358 = vmul.f32 %v2354, %v235
    %v2359 = vmul.f32 %v2357, %v235
    %v2360 = vadd.f32 %v2358, 1e-12
    %v2361 = vadd.f32 %v2359, 1e-12
    %v2362 = vrsqrt.pop %v2360
    %v2363 = vrsqrt.pop %v2361
    %v2364 = vmul.f32 %v2348, %v2362
    %v2365 = vmul.f32 %v2349, %v2363
    %v2367 = vlaneseq
    %v2368 = vshrl.u32 %v2367, 7
    %v2369 = vsub.s32 0, %v2368
    %v2370 = vrot.slane %v2337, %v2369
    %v2372 = vmul.f32 %v2364, %v2370
    %v2373 = vmul.f32 %v2365, %v2370
    %v2375 = vlaneseq
    %v2376 = vshrl.u32 %v2375, 7
    %v2377 = vsub.s32 0, %v2376
    %v2378 = vrot.slane %v2339, %v2377
    %v2380 = vadd.f32 %v2372, %v2378
    %v2381 = vadd.f32 %v2373, %v2378
    %s2382 = scalar_lea.vmem %s13, 32
    %v2383 = vld [vmem:[%s2382] sm:$0xff]
    %v2384 = vld [vmem:[%s2382 + $0x8] sm:$0xff]
    %v2385 = vld [vmem:[%s2382 + $0x10] sm:$0xff]
    %v2386 = vld [vmem:[%s2382 + $0x18] sm:$0xff]
    %s2387 = scalar_lea.vmem [#allocation2], 1
    %v2388 = vld [vmem:[%s2387] sm:$0x1]
    %v2390 = vlaneseq
    %v2391 = vshrl.u32 %v2390, 7
    %v2392 = vsub.s32 0, %v2391
    %v2393 = vrot.slane %v2388, %v2392
    %v2396 = vsel %vm228, %v2380, 0
    %v2399 = vsel %vm228, %v2381, 0
    %2401 = vmatprep.subr.mxu0 0.0
    %2402 = vmatpush1.msra.mxu0 %v2383
    %2403 = vmatprep.subr.mxu0 0.0
    %2404 = vmatpush1.msra.mxu0 %v2384
    %2405 = vmatprep.subr.mxu0 0.0
    %2406 = vmatpush1.msra.mxu0 %v2385
    %2407 = vmatprep.subr.mxu0 0.0
    %2408 = vmatpush1.msra.mxu0 %v2386
    %2409 = vmatprep.subr.mxu0 0.0
    %2410 = vmatpush1.msra.mxu0 0.0
    %2411 = vmatprep.subr.mxu0 0.0
    %2412 = vmatpush1.msra.mxu0 0.0
    %2413 = vmatprep.subr.mxu0 0.0
    %2414 = vmatpush1.msra.mxu0 0.0
    %2415 = vmatprep.subr.mxu0 0.0
    %2416 = vmatpush1.msra.mxu0 0.0
    %2417 = vmatprep.subr.mxu0 0.0
    %2418 = vmatpush1.msra.mxu0 0.0
    %2419 = vmatprep.subr.mxu0 0.0
    %2420 = vmatpush1.msra.mxu0 0.0
    %2421 = vmatprep.subr.mxu0 0.0
    %2422 = vmatpush1.msra.mxu0 0.0
    %2423 = vmatprep.subr.mxu0 0.0
    %2424 = vmatpush1.msra.mxu0 0.0
    %2425 = vmatprep.subr.mxu0 0.0
    %2426 = vmatpush1.msra.mxu0 0.0
    %2427 = vmatprep.subr.mxu0 0.0
    %2428 = vmatpush1.msra.mxu0 0.0
    %2429 = vmatprep.subr.mxu0 0.0
    %2430 = vmatpush1.msra.mxu0 0.0
    %2431 = vmatprep.subr.mxu0 0.0
    %2432 = vmatpush1.msra.mxu0 0.0
    %2433 = vmatprep.subr.mxu0 0.0
    %2434 = vmatpush1.msra.mxu0 0.0
    %2435 = vmatprep.subr.mxu0 0.0
    %2436 = vmatpush1.msra.mxu0 0.0
    %2437 = vmatprep.subr.mxu0 0.0
    %2438 = vmatpush1.msra.mxu0 0.0
    %2439 = vmatprep.subr.mxu0 0.0
    %2440 = vmatpush1.msra.mxu0 0.0
    %2441 = vmatprep.subr.mxu0 0.0
    %2442 = vmatpush1.msra.mxu0 0.0
    %2443 = vmatprep.subr.mxu0 0.0
    %2444 = vmatpush1.msra.mxu0 0.0
    %2445 = vmatprep.subr.mxu0 0.0
    %2446 = vmatpush1.msra.mxu0 0.0
    %2447 = vmatprep.subr.mxu0 0.0
    %2448 = vmatpush1.msra.mxu0 0.0
    %2449 = vmatprep.subr.mxu0 0.0
    %2450 = vmatpush1.msra.mxu0 0.0
    %2451 = vmatprep.subr.mxu0 0.0
    %2452 = vmatpush1.msra.mxu0 0.0
    %2453 = vmatprep.subr.mxu0 0.0
    %2454 = vmatpush1.msra.mxu0 0.0
    %2455 = vmatprep.subr.mxu0 0.0
    %2456 = vmatpush1.msra.mxu0 0.0
    %2457 = vmatprep.subr.mxu0 0.0
    %2458 = vmatpush1.msra.mxu0 0.0
    %2459 = vmatprep.subr.mxu0 0.0
    %2460 = vmatpush1.msra.mxu0 0.0
    %2461 = vmatprep.subr.mxu0 0.0
    %2462 = vmatpush1.msra.mxu0 0.0
    %2463 = vmatprep.subr.mxu0 0.0
    %2464 = vmatpush1.msra.mxu0 0.0
    %2465 = vmatprep.mubr.f32.mxu0 0.0
    %2466 = vmatmul.mubr.f32.gmra.mrb[0].mxu0 %v2396
    %v2467 = vpop.f32.mrb[0].mxu0
    %v2468 = vadd.f32 %v2393, %v2467
    %v2469 = vpop.f32.mrb[0].mxu0
    %2470 = vmatprep.mubr.f32.mxu0 0.0
    %2471 = vmatmul.mubr.f32.gmra.mrb[0].mxu0 %v2399
    %v2472 = vpop.f32.mrb[0].mxu0
    %v2473 = vadd.f32 %v2393, %v2472
    %v2474 = vpop.f32.mrb[0].mxu0
    %2475 = vdwg.mxu0
    %v2476 = vmul.f32 %v2468, 0.5
    %v2477 = vmul.f32 %v2473, 0.5
    %v2478 = vmul.f32 %v2468, 0.044715
    %v2479 = vmul.f32 %v2473, 0.044715
    %v2480 = vmul.f32 %v2478, %v2468
    %v2481 = vmul.f32 %v2479, %v2473
    %v2482 = vmul.f32 %v2480, %v2468
    %v2483 = vmul.f32 %v2481, %v2473
    %v2484 = vadd.f32 %v2468, %v2482
    %v2485 = vadd.f32 %v2473, %v2483
    %v2486 = vmul.f32 %v2484, 0.7978846
    %v2487 = vmul.f32 %v2485, 0.7978846
    %v2488 = vtanh.pop %v2486
    %v2489 = vtanh.pop %v2487
    %v2490 = vadd.f32 %v2488, 1.0
    %v2491 = vadd.f32 %v2489, 1.0
    %v2492 = vmul.f32 %v2476, %v2490
    %v2493 = vmul.f32 %v2477, %v2491
    %s2494 = scalar_lea.vmem %s15, 64
    %v2495 = vld [vmem:[%s2494] sm:$0xff]
    %v2496 = vld [vmem:[%s2494 + $0x8] sm:$0xff]
    %v2497 = vld [vmem:[%s2494 + $0x10] sm:$0xff]
    %v2498 = vld [vmem:[%s2494 + $0x18] sm:$0xff]
    %v2499 = vld [vmem:[%s2494 + $0x20] sm:$0xff]
    %v2500 = vld [vmem:[%s2494 + $0x28] sm:$0xff]
    %v2501 = vld [vmem:[%s2494 + $0x30] sm:$0xff]
    %v2502 = vld [vmem:[%s2494 + $0x38] sm:$0xff]
    %s2503 = scalar_lea.vmem [#allocation4], 1
    %v2504 = vld [vmem:[%s2503] sm:$0x1]
    %v2506 = vlaneseq
    %v2507 = vshrl.u32 %v2506, 7
    %v2508 = vsub.s32 0, %v2507
    %v2509 = vrot.slane %v2504, %v2508
    %v2512 = vsel %vm1342, %v2492, 0
    %v2515 = vsel %vm1342, %v2493, 0
    %2517 = vmatprep.subr.mxu0 0.0
    %2518 = vmatpush1.msra.mxu0 %v2495
    %2519 = vmatprep.subr.mxu0 0.0
    %2520 = vmatpush1.msra.mxu0 %v2496
    %2521 = vmatprep.subr.mxu0 0.0
    %2522 = vmatpush1.msra.mxu0 %v2497
    %2523 = vmatprep.subr.mxu0 0.0
    %2524 = vmatpush1.msra.mxu0 %v2498
    %2525 = vmatprep.subr.mxu0 0.0
    %2526 = vmatpush1.msra.mxu0 %v2499
    %2527 = vmatprep.subr.mxu0 0.0
    %2528 = vmatpush1.msra.mxu0 %v2500
    %2529 = vmatprep.subr.mxu0 0.0
    %2530 = vmatpush1.msra.mxu0 %v2501
    %2531 = vmatprep.subr.mxu0 0.0
    %2532 = vmatpush1.msra.mxu0 %v2502
    %2533 = vmatprep.subr.mxu0 0.0
    %2534 = vmatpush1.msra.mxu0 0.0
    %2535 = vmatprep.subr.mxu0 0.0
    %2536 = vmatpush1.msra.mxu0 0.0
    %2537 = vmatprep.subr.mxu0 0.0
    %2538 = vmatpush1.msra.mxu0 0.0
    %2539 = vmatprep.subr.mxu0 0.0
    %2540 = vmatpush1.msra.mxu0 0.0
    %2541 = vmatprep.subr.mxu0 0.0
    %2542 = vmatpush1.msra.mxu0 0.0
    %2543 = vmatprep.subr.mxu0 0.0
    %2544 = vmatpush1.msra.mxu0 0.0
    %2545 = vmatprep.subr.mxu0 0.0
    %2546 = vmatpush1.msra.mxu0 0.0
    %2547 = vmatprep.subr.mxu0 0.0
    %2548 = vmatpush1.msra.mxu0 0.0
    %2549 = vmatprep.subr.mxu0 0.0
    %2550 = vmatpush1.msra.mxu0 0.0
    %2551 = vmatprep.subr.mxu0 0.0
    %2552 = vmatpush1.msra.mxu0 0.0
    %2553 = vmatprep.subr.mxu0 0.0
    %2554 = vmatpush1.msra.mxu0 0.0
    %2555 = vmatprep.subr.mxu0 0.0
    %2556 = vmatpush1.msra.mxu0 0.0
    %2557 = vmatprep.subr.mxu0 0.0
    %2558 = vmatpush1.msra.mxu0 0.0
    %2559 = vmatprep.subr.mxu0 0.0
    %2560 = vmatpush1.msra.mxu0 0.0
    %2561 = vmatprep.subr.mxu0 0.0
    %2562 = vmatpush1.msra.mxu0 0.0
    %2563 = vmatprep.subr.mxu0 0.0
    %2564 = vmatpush1.msra.mxu0 0.0
    %2565 = vmatprep.subr.mxu0 0.0
    %2566 = vmatpush1.msra.mxu0 0.0
    %2567 = vmatprep.subr.mxu0 0.0
    %2568 = vmatpush1.msra.mxu0 0.0
    %2569 = vmatprep.subr.mxu0 0.0
    %2570 = vmatpush1.msra.mxu0 0.0
    %2571 = vmatprep.subr.mxu0 0.0
    %2572 = vmatpush1.msra.mxu0 0.0
    %2573 = vmatprep.subr.mxu0 0.0
    %2574 = vmatpush1.msra.mxu0 0.0
    %2575 = vmatprep.subr.mxu0 0.0
    %2576 = vmatpush1.msra.mxu0 0.0
    %2577 = vmatprep.subr.mxu0 0.0
    %2578 = vmatpush1.msra.mxu0 0.0
    %2579 = vmatprep.subr.mxu0 0.0
    %2580 = vmatpush1.msra.mxu0 0.0
    %2581 = vmatprep.mubr.f32.mxu0 0.0
    %2582 = vmatmul.mubr.f32.gmra.mrb[0].mxu0 %v2512
    %v2583 = vpop.f32.mrb[0].mxu0
    %v2584 = vadd.f32 %v2509, %v2583
    %v2585 = vpop.f32.mrb[0].mxu0
    %2586 = vmatprep.mubr.f32.mxu0 0.0
    %2587 = vmatmul.mubr.f32.gmra.mrb[0].mxu0 %v2515
    %v2588 = vpop.f32.mrb[0].mxu0
    %v2589 = vadd.f32 %v2509, %v2588
    %v2590 = vpop.f32.mrb[0].mxu0
    %2591 = vdwg.mxu0
    %v2592 = vadd.f32 %v2380, %v2584
    %v2593 = vadd.f32 %v2381, %v2589
    %s2594 = scalar_lea.vmem %s17, 1
    %v2595 = vld [vmem:[%s2594] sm:$0x1]
    %s2596 = scalar_lea.vmem %s18, 1
    %v2597 = vld [vmem:[%s2596] sm:$0x1]
    %v2598 = vsel %vm228, %v2592, 0.0
    %2599 = vadd.xlane.f32.xlu0 %v2598
    %v2600 = vpop.xlane.xlu0 %2599
    %v2601 = vsel %vm228, %v2593, 0.0
    %2602 = vadd.xlane.f32.xlu0 %v2601
    %v2603 = vpop.xlane.xlu0 %2602
    %v2604 = vmul.f32 %v2600, %v235
    %v2605 = vmul.f32 %v2603, %v235
    %v2606 = vsub.f32 %v2592, %v2604
    %v2607 = vsub.f32 %v2593, %v2605
    %v2608 = vmul.f32 %v2606, %v2606
    %v2609 = vmul.f32 %v2607, %v2607
    %v2610 = vsel %vm228, %v2608, 0.0
    %2611 = vadd.xlane.f32.xlu0 %v2610
    %v2612 = vpop.xlane.xlu0 %2611
    %v2613 = vsel %vm228, %v2609, 0.0
    %2614 = vadd.xlane.f32.xlu0 %v2613
    %v2615 = vpop.xlane.xlu0 %2614
    %v2616 = vmul.f32 %v2612, %v235
    %v2617 = vmul.f32 %v2615, %v235
    %v2618 = vadd.f32 %v2616, 1e-12
    %v2619 = vadd.f32 %v2617, 1e-12
    %v2620 = vrsqrt.pop %v2618
    %v2621 = vrsqrt.pop %v2619
    %v2622 = vmul.f32 %v2606, %v2620
    %v2623 = vmul.f32 %v2607, %v2621
    %v2625 = vlaneseq
    %v2626 = vshrl.u32 %v2625, 7
    %v2627 = vsub.s32 0, %v2626
    %v2628 = vrot.slane %v2595, %v2627
    %v2630 = vmul.f32 %v2622, %v2628
    %v2631 = vmul.f32 %v2623, %v2628
    %v2633 = vlaneseq
    %v2634 = vshrl.u32 %v2633, 7
    %v2635 = vsub.s32 0, %v2634
    %v2636 = vrot.slane %v2597, %v2635
    %v2638 = vadd.f32 %v2630, %v2636
    %v2639 = vadd.f32 %v2631, %v2636
    %v2640 = vld [vmem:[%s19] sm:$0xff]
    %v2641 = vld [vmem:[%s19 + $0x8] sm:$0xff]
    %v2642 = vld [vmem:[%s19 + $0x10] sm:$0xff]
    %v2643 = vld [vmem:[%s19 + $0x18] sm:$0xff]
    %v2644 = vld [vmem:[%s20] sm:$0x1]
    %v2646 = vlaneseq
    %v2647 = vshrl.u32 %v2646, 7
    %v2648 = vsub.s32 0, %v2647
    %v2649 = vrot.slane %v2644, %v2648
    %v2653 = vrot.slane %v2639, 7
    %vm2654 = vcmask 1041409
    %v2655 = vsel %vm2654, %v2653, %v2638
    %v2656 = vsel %vm228, %v2655, 0
    %2658 = vmatprep.subr.mxu0 0.0
    %2659 = vmatpush1.msra.mxu0 %v2640
    %2660 = vmatprep.subr.mxu0 0.0
    %2661 = vmatpush1.msra.mxu0 %v2641
    %2662 = vmatprep.subr.mxu0 0.0
    %2663 = vmatpush1.msra.mxu0 %v2642
    %2664 = vmatprep.subr.mxu0 0.0
    %2665 = vmatpush1.msra.mxu0 %v2643
    %2666 = vmatprep.subr.mxu0 0.0
    %2667 = vmatpush1.msra.mxu0 0.0
    %2668 = vmatprep.subr.mxu0 0.0
    %2669 = vmatpush1.msra.mxu0 0.0
    %2670 = vmatprep.subr.mxu0 0.0
    %2671 = vmatpush1.msra.mxu0 0.0
    %2672 = vmatprep.subr.mxu0 0.0
    %2673 = vmatpush1.msra.mxu0 0.0
    %2674 = vmatprep.subr.mxu0 0.0
    %2675 = vmatpush1.msra.mxu0 0.0
    %2676 = vmatprep.subr.mxu0 0.0
    %2677 = vmatpush1.msra.mxu0 0.0
    %2678 = vmatprep.subr.mxu0 0.0
    %2679 = vmatpush1.msra.mxu0 0.0
    %2680 = vmatprep.subr.mxu0 0.0
    %2681 = vmatpush1.msra.mxu0 0.0
    %2682 = vmatprep.subr.mxu0 0.0
    %2683 = vmatpush1.msra.mxu0 0.0
    %2684 = vmatprep.subr.mxu0 0.0
    %2685 = vmatpush1.msra.mxu0 0.0
    %2686 = vmatprep.subr.mxu0 0.0
    %2687 = vmatpush1.msra.mxu0 0.0
    %2688 = vmatprep.subr.mxu0 0.0
    %2689 = vmatpush1.msra.mxu0 0.0
    %2690 = vmatprep.subr.mxu0 0.0
    %2691 = vmatpush1.msra.mxu0 0.0
    %2692 = vmatprep.subr.mxu0 0.0
    %2693 = vmatpush1.msra.mxu0 0.0
    %2694 = vmatprep.subr.mxu0 0.0
    %2695 = vmatpush1.msra.mxu0 0.0
    %2696 = vmatprep.subr.mxu0 0.0
    %2697 = vmatpush1.msra.mxu0 0.0
    %2698 = vmatprep.subr.mxu0 0.0
    %2699 = vmatpush1.msra.mxu0 0.0
    %2700 = vmatprep.subr.mxu0 0.0
    %2701 = vmatpush1.msra.mxu0 0.0
    %2702 = vmatprep.subr.mxu0 0.0
    %2703 = vmatpush1.msra.mxu0 0.0
    %2704 = vmatprep.subr.mxu0 0.0
    %2705 = vmatpush1.msra.mxu0 0.0
    %2706 = vmatprep.subr.mxu0 0.0
    %2707 = vmatpush1.msra.mxu0 0.0
    %2708 = vmatprep.subr.mxu0 0.0
    %2709 = vmatpush1.msra.mxu0 0.0
    %2710 = vmatprep.subr.mxu0 0.0
    %2711 = vmatpush1.msra.mxu0 0.0
    %2712 = vmatprep.subr.mxu0 0.0
    %2713 = vmatpush1.msra.mxu0 0.0
    %2714 = vmatprep.subr.mxu0 0.0
    %2715 = vmatpush1.msra.mxu0 0.0
    %2716 = vmatprep.subr.mxu0 0.0
    %2717 = vmatpush1.msra.mxu0 0.0
    %2718 = vmatprep.subr.mxu0 0.0
    %2719 = vmatpush1.msra.mxu0 0.0
    %2720 = vmatprep.subr.mxu0 0.0
    %2721 = vmatpush1.msra.mxu0 0.0
    %2722 = vmatprep.mubr.f32.mxu0 0.0
    %2723 = vmatmul.mubr.f32.gmra.mrb[0].mxu0 %v2656
    %v2724 = vpop.f32.mrb[0].mxu0
    %v2725 = vadd.f32 %v2649, %v2724
    %v2726 = vpop.f32.mrb[0].mxu0
    %2727 = vdwg.mxu0
    %v2728 = vtanh.pop %v2725
    %v2729 = vld [vmem:[%s21] sm:$0xff]
    %v2730 = vld [vmem:[%s21 + $0x8] sm:$0xff]
    %v2731 = vld [vmem:[%s21 + $0x10] sm:$0xff]
    %v2732 = vld [vmem:[%s21 + $0x18] sm:$0xff]
    %v2733 = vld [vmem:[%s22] sm:$0x1]
    %v2735 = vlaneseq
    %v2736 = vshrl.u32 %v2735, 7
    %v2737 = vsub.s32 0, %v2736
    %v2738 = vrot.slane %v2733, %v2737
    %v2741 = vsel %vm228, %v2728, 0
    %2743 = vmatprep.subr.mxu0 0.0
    %2744 = vmatpush1.msra.mxu0 %v2729
    %2745 = vmatprep.subr.mxu0 0.0
    %2746 = vmatpush1.msra.mxu0 %v2730
    %2747 = vmatprep.subr.mxu0 0.0
    %2748 = vmatpush1.msra.mxu0 %v2731
    %2749 = vmatprep.subr.mxu0 0.0
    %2750 = vmatpush1.msra.mxu0 %v2732
    %2751 = vmatprep.subr.mxu0 0.0
    %2752 = vmatpush1.msra.mxu0 0.0
    %2753 = vmatprep.subr.mxu0 0.0
    %2754 = vmatpush1.msra.mxu0 0.0
    %2755 = vmatprep.subr.mxu0 0.0
    %2756 = vmatpush1.msra.mxu0 0.0
    %2757 = vmatprep.subr.mxu0 0.0
    %2758 = vmatpush1.msra.mxu0 0.0
    %2759 = vmatprep.subr.mxu0 0.0
    %2760 = vmatpush1.msra.mxu0 0.0
    %2761 = vmatprep.subr.mxu0 0.0
    %2762 = vmatpush1.msra.mxu0 0.0
    %2763 = vmatprep.subr.mxu0 0.0
    %2764 = vmatpush1.msra.mxu0 0.0
    %2765 = vmatprep.subr.mxu0 0.0
    %2766 = vmatpush1.msra.mxu0 0.0
    %2767 = vmatprep.subr.mxu0 0.0
    %2768 = vmatpush1.msra.mxu0 0.0
    %2769 = vmatprep.subr.mxu0 0.0
    %2770 = vmatpush1.msra.mxu0 0.0
    %2771 = vmatprep.subr.mxu0 0.0
    %2772 = vmatpush1.msra.mxu0 0.0
    %2773 = vmatprep.subr.mxu0 0.0
    %2774 = vmatpush1.msra.mxu0 0.0
    %2775 = vmatprep.subr.mxu0 0.0
    %2776 = vmatpush1.msra.mxu0 0.0
    %2777 = vmatprep.subr.mxu0 0.0
    %2778 = vmatpush1.msra.mxu0 0.0
    %2779 = vmatprep.subr.mxu0 0.0
    %2780 = vmatpush1.msra.mxu0 0.0
    %2781 = vmatprep.subr.mxu0 0.0
    %2782 = vmatpush1.msra.mxu0 0.0
    %2783 = vmatprep.subr.mxu0 0.0
    %2784 = vmatpush1.msra.mxu0 0.0
    %2785 = vmatprep.subr.mxu0 0.0
    %2786 = vmatpush1.msra.mxu0 0.0
    %2787 = vmatprep.subr.mxu0 0.0
    %2788 = vmatpush1.msra.mxu0 0.0
    %2789 = vmatprep.subr.mxu0 0.0
    %2790 = vmatpush1.msra.mxu0 0.0
    %2791 = vmatprep.subr.mxu0 0.0
    %2792 = vmatpush1.msra.mxu0 0.0
    %2793 = vmatprep.subr.mxu0 0.0
    %2794 = vmatpush1.msra.mxu0 0.0
    %2795 = vmatprep.subr.mxu0 0.0
    %2796 = vmatpush1.msra.mxu0 0.0
    %2797 = vmatprep.subr.mxu0 0.0
    %2798 = vmatpush1.msra.mxu0 0.0
    %2799 = vmatprep.subr.mxu0 0.0
    %2800 = vmatpush1.msra.mxu0 0.0
    %2801 = vmatprep.subr.mxu0 0.0
    %2802 = vmatpush1.msra.mxu0 0.0
    %2803 = vmatprep.subr.mxu0 0.0
    %2804 = vmatpush1.msra.mxu0 0.0
    %2805 = vmatprep.subr.mxu0 0.0
    %2806 = vmatpush1.msra.mxu0 0.0
    %2807 = vmatprep.mubr.f32.mxu0 0.0
    %2808 = vmatmul.mubr.f32.gmra.mrb[0].mxu0 %v2741
    %v2809 = vpop.f32.mrb[0].mxu0
    %v2810 = vadd.f32 %v2738, %v2809
    %v2811 = vpop.f32.mrb[0].mxu0
    %2812 = vdwg.mxu0
    %2813 = vst [vmem:[%s23] sm:$0x3] %v2810
    // Predicated region
    $region102: #{multi_output_bert.1} parent=1 // pred_check
      _
    $region103: #{multi_output_bert.1} parent=1 // pred_check_branch
      %2815 = sbr.rel (0) target = $region105
    $region104: #{multi_output_bert.1} parent=1 // pred_region
      _
    $region105: #{multi_output_bert.1} parent=1 // pred_fallthru
      _
    // Predicated region
    $region106: #{multi_output_bert.1} parent=1 // pred_check
      _
    $region107: #{multi_output_bert.1} parent=1 // pred_check_branch
      %2817 = sbr.rel (0) target = $region109
    $region108: #{multi_output_bert.1} parent=1 // pred_region
      _
    $region109: #{multi_output_bert.1} parent=1 // pred_fallthru
      _
    %2818 = vsyncpa [#allocation3], 1
    %2819 = vsyncpa [#allocation5], 1

</llo_original>
